<compile_context>
chip_gen: v6e
topology: v6e:2x2x1
jax: 0.10.0
libtpu: 0.0.40
codegen_flags: <defaults>
</compile_context>

<pallas_src>
import functools
import math

import jax
import jax.numpy as jnp
import numpy as np
from jax import lax
from jax.experimental import pallas as pl
from jax.experimental.pallas import tpu as pltpu


def _pair(v):
    return tuple(v) if isinstance(v, (tuple, list)) else (v, v)


def _maxpool_block_kernel(x_ref, o_ref, *scratch, kh, kw, sh, sw, dh, dw,
                          ho, wo, h_in, w_in, hp, wp, top, left, eph, epw,
                          pad_value, neg_fill, has_dyn_pad, has_exp_pad):
    """Max-pool a block of P planes.  x_ref: (P, h_in, w_in); o_ref: (P, ho, wo)."""
    p = x_ref.shape[0]
    dtype = x_ref.dtype

    if scratch:
        pad_ref = scratch[0]          # (P, hp, wp) padded working planes in VMEM.

        def fill(r0, r1, c0, c1, value):
            if r1 > r0 and c1 > c0:   # static guard: no empty stores are emitted
                pad_ref[:, r0:r1, c0:c1] = jnp.full((p, r1 - r0, c1 - c0), value, dtype)

        # Explicit max_pool padding ring (outermost).  torch pads with -inf; we use the
        # finite dtype-min so the MXU selection matmul stays NaN-free (see wrapper TODO).
        if has_exp_pad:
            fill(0, eph, 0, wp, neg_fill)
            fill(hp - eph, hp, 0, wp, neg_fill)
            fill(eph, hp - eph, 0, epw, neg_fill)
            fill(eph, hp - eph, wp - epw, wp, neg_fill)
        # DynamicPad2d ring (inner, constant `padding_value`).
        if has_dyn_pad:
            fill(eph, top, epw, wp - epw, pad_value)
            fill(top + h_in, hp - eph, epw, wp - epw, pad_value)
            fill(top, top + h_in, epw, left, pad_value)
            fill(top, top + h_in, left + w_in, wp - epw, pad_value)
        # Real data in the core.
        pad_ref[:, top:top + h_in, left:left + w_in] = x_ref[...]
        src = pad_ref
    else:
        src = x_ref

    hv = (ho - 1) * sh + 1            # row window-start positions needed
    wv = (wo - 1) * sw + 1            # col window-start positions needed

    # 1) H-window max at every needed start row (unit-stride ref slices, VPU),
    #    vectorised over all P planes at once.
    m = src[:, 0:hv, :]
    for i in range(1, kh):
        m = jnp.maximum(m, src[:, i * dh:i * dh + hv, :])

    # 2) H-stride subsample via an exact one-hot selection matmul (batched, MXU).
    if sh > 1:
        sel_h = (lax.broadcasted_iota(jnp.int32, (ho, hv), 1)
                 == sh * lax.broadcasted_iota(jnp.int32, (ho, hv), 0)).astype(dtype)
        sel_h = jnp.broadcast_to(sel_h[None], (p, ho, hv))
        m = jnp.einsum("pab,pbc->pac", sel_h, m,
                       preferred_element_type=jnp.float32,
                       precision=lax.Precision.HIGHEST).astype(dtype)

    # 3) W-window max at every needed start column.
    z = m[:, :, 0:wv]
    for j in range(1, kw):
        z = jnp.maximum(z, m[:, :, j * dw:j * dw + wv])

    # 4) W-stride subsample via an exact one-hot selection matmul (batched, MXU).
    if sw > 1:
        sel_w = (lax.broadcasted_iota(jnp.int32, (wv, wo), 0)
                 == sw * lax.broadcasted_iota(jnp.int32, (wv, wo), 1)).astype(dtype)
        sel_w = jnp.broadcast_to(sel_w[None], (p, wv, wo))
        z = jnp.einsum("pab,pbc->pac", z, sel_w,
                       preferred_element_type=jnp.float32,
                       precision=lax.Precision.HIGHEST)

    o_ref[...] = z.astype(o_ref.dtype)


def _pick_planes_per_block(nc, h, w, hp, wp, ho, wo, itemsize, need_pad):
    """Largest divisor of nc fitting a conservative VMEM budget, keeping >= 2 steps."""
    per_plane = itemsize * (2 * h * w + 2 * ho * wo)   # double-buffered in/out blocks
    if need_pad:
        per_plane += itemsize * hp * wp                # padded scratch plane
    per_plane += 4 * 3 * hp * wp                       # in-kernel temporaries (f32-sized)
    budget = 8 * 1024 * 1024                           # safe vs. v5e's 16 MiB scoped default
    cap = max(1, budget // max(per_plane, 1))
    cap = min(cap, 128)
    if nc >= 2:
        cap = min(cap, nc // 2)                        # >= 2 grid steps (v7x has 2 TCs)
    cap = max(int(cap), 1)
    for pcount in range(cap, 0, -1):
        if nc % pcount == 0:
            return pcount
    return 1


class BitMaxPool2d:
    """Pallas/JAX re-implementation of mindnlp's BitMaxPool2d forward pass."""

    def __init__(self, kernel_size, stride=None, dilation=1, ceil_mode=False,
                 padding=(0, 0), padding_value=0, use_dynamic_padding=True):
        self.kernel_size = _pair(kernel_size)
        self.stride = _pair(stride if stride is not None else kernel_size)
        self.dilation = _pair(dilation)
        self.padding = _pair(padding)
        self.padding_value = float(padding_value)
        self.use_dynamic_padding = use_dynamic_padding
        if ceil_mode:
            # TODO(synk): ceil_mode=True output-size rule not implemented (BiT uses False).
            raise NotImplementedError("ceil_mode=True not supported")

    @staticmethod
    def _same_pad_amount(x, k, s, d):
        return max((math.ceil(x / s) - 1) * s + (k - 1) * d + 1 - x, 0)

    def _padded_dims(self, h, w):
        kh, kw = self.kernel_size
        sh, sw = self.stride
        dh, dw = self.dilation
        ph = self._same_pad_amount(h, kh, sh, dh) if self.use_dynamic_padding else 0
        pw = self._same_pad_amount(w, kw, sw, dw) if self.use_dynamic_padding else 0
        eph, epw = self.padding
        hp = h + ph + 2 * eph
        wp = w + pw + 2 * epw
        top = eph + ph // 2
        left = epw + pw // 2
        return ph, pw, eph, epw, hp, wp, top, left

    def __call__(self, hidden_states):
        if not jnp.issubdtype(hidden_states.dtype, jnp.floating):
            raise TypeError("BitMaxPool2d Pallas kernel supports floating dtypes only")
        n, c, h, w = hidden_states.shape
        dtype = hidden_states.dtype
        kh, kw = self.kernel_size
        sh, sw = self.stride
        dh, dw = self.dilation
        ph, pw, eph, epw, hp, wp, top, left = self._padded_dims(h, w)
        ho = (hp - dh * (kh - 1) - 1) // sh + 1
        wo = (wp - dw * (kw - 1) - 1) // sw + 1
        nc = n * c
        need_pad = (ph > 0 or pw > 0 or eph > 0 or epw > 0)

        planes = hidden_states.reshape(nc, h, w)
        itemsize = jnp.dtype(dtype).itemsize
        p_blk = _pick_planes_per_block(nc, h, w, hp, wp, ho, wo, itemsize, need_pad)
        grid = (nc // p_blk,)

        # TODO(synk): torch pads with -inf for the explicit max_pool padding; we use the
        # finite dtype-min so the MXU selection matmul stays NaN-free.  Results only differ
        # for windows lying entirely inside the explicit padding, which torch itself
        # disallows (padding <= kernel_size // 2).
        neg_fill = float(jnp.finfo(dtype).min)

        kernel = functools.partial(
            _maxpool_block_kernel,
            kh=kh, kw=kw, sh=sh, sw=sw, dh=dh, dw=dw,
            ho=ho, wo=wo, h_in=h, w_in=w, hp=hp, wp=wp, top=top, left=left,
            eph=eph, epw=epw,
            pad_value=self.padding_value, neg_fill=neg_fill,
            has_dyn_pad=(ph > 0 or pw > 0), has_exp_pad=(eph > 0 or epw > 0))

        scratch_shapes = [pltpu.VMEM((p_blk, hp, wp), dtype)] if need_pad else []

        hv = (ho - 1) * sh + 1
        wv = (wo - 1) * sw + 1
        flops = nc * (kh * hv * wp + kw * ho * wv)
        if sh > 1:
            flops += nc * 2 * ho * hv * wp
        if sw > 1:
            flops += nc * 2 * ho * wv * wo
        cost = pl.CostEstimate(
            flops=int(flops), transcendentals=0,
            bytes_accessed=int(itemsize * (nc * h * w + nc * ho * wo)))

        out = pl.pallas_call(
            kernel,
            out_shape=jax.ShapeDtypeStruct((nc, ho, wo), dtype),
            grid=grid,
            in_specs=[pl.BlockSpec((p_blk, h, w), lambda i: (i, 0, 0))],
            out_specs=pl.BlockSpec((p_blk, ho, wo), lambda i: (i, 0, 0)),
            scratch_shapes=scratch_shapes,
            compiler_params=pltpu.CompilerParams(
                dimension_semantics=("parallel",),
                vmem_limit_bytes=32 * 1024 * 1024),
            cost_estimate=cost,
        )(planes)
        return out.reshape(n, c, ho, wo)


def _reference_maxpool(module, x):
    """Pure-JAX reference with the original torch semantics (pad then VALID max pool)."""
    kh, kw = module.kernel_size
    sh, sw = module.stride
    dh, dw = module.dilation
    ph, pw, eph, epw, _, _, _, _ = module._padded_dims(*x.shape[-2:])
    if ph > 0 or pw > 0:
        x = jnp.pad(x, ((0, 0), (0, 0), (ph // 2, ph - ph // 2), (pw // 2, pw - pw // 2)),
                    constant_values=jnp.array(module.padding_value, dtype=x.dtype))
    if eph > 0 or epw > 0:
        x = jnp.pad(x, ((0, 0), (0, 0), (eph, eph), (epw, epw)),
                    constant_values=jnp.array(-jnp.inf, dtype=x.dtype))
    return lax.reduce_window(
        x, jnp.array(-jnp.inf, dtype=x.dtype), lax.max,
        window_dimensions=(1, 1, kh, kw),
        window_strides=(1, 1, sh, sw),
        padding="VALID",
        window_dilation=(1, 1, dh, dw))


if __name__ == "__main__":
    key = jax.random.PRNGKey(0)
    x = jax.random.normal(key, (2, 4, 16, 16), dtype=jnp.float32)

    # 1) BiT stem config: kernel 3, stride 2, TF-"SAME" dynamic padding, f32.
    pool = BitMaxPool2d(kernel_size=3, stride=2, dilation=1, ceil_mode=False,
                        padding=(0, 0), padding_value=0, use_dynamic_padding=True)
    y = jax.block_until_ready(pool(x))
    y_ref = _reference_maxpool(pool, x)
    np.testing.assert_allclose(np.asarray(y), np.asarray(y_ref), rtol=1e-6, atol=1e-6)
    assert y.shape == (2, 4, 8, 8), y.shape

    # 2) Explicit max_pool padding path, no dynamic padding.
    pool2 = BitMaxPool2d(kernel_size=3, stride=2, dilation=1, ceil_mode=False,
                         padding=(1, 1), padding_value=0, use_dynamic_padding=False)
    y2 = jax.block_until_ready(pool2(x))
    y2_ref = _reference_maxpool(pool2, x)
    np.testing.assert_allclose(np.asarray(y2), np.asarray(y2_ref), rtol=1e-6, atol=1e-6)
    assert y2.shape == (2, 4, 8, 8), y2.shape

    # 3) bf16 input, native-dtype compute path.
    xb = x.astype(jnp.bfloat16)
    y3 = jax.block_until_ready(pool(xb))
    y3_ref = _reference_maxpool(pool, xb)
    np.testing.assert_allclose(np.asarray(y3).astype(np.float32),
                               np.asarray(y3_ref).astype(np.float32),
                               rtol=1e-2, atol=1e-2)

    print("KERNEL_OK")
</pallas_src>

<mosaic_0001>
module attributes {stable_mosaic.version = 11 : i64} {
  func.func @_maxpool_block_kernel(%arg0: i32, %arg1: memref<4x16x16xf32, #tpu.memory_space<vmem>>, %arg2: memref<4x8x8xf32, #tpu.memory_space<vmem>>, %arg3: memref<4x17x17xf32, #tpu.memory_space<vmem>>) attributes {dimension_semantics = [#tpu.dimension_semantics<parallel>], iteration_bounds = array<i64: 2>, scalar_prefetch = 0 : i64, scratch_operands = 1 : i64, tpu.core_type = #tpu.core_type<tc>, window_params = [{transform_indices = @transform_0, window_bounds = array<i64: 4, 16, 16>}, {transform_indices = @transform_1, window_bounds = array<i64: 4, 8, 8>}]} {
    %cst = arith.constant 0.000000e+00 : f32
    %0 = vector.broadcast %cst : f32 to vector<4x1x17xf32>
    %c0 = arith.constant 0 : index
    %c16 = arith.constant 16 : index
    %c0_0 = arith.constant 0 : index
    %1 = vector.load %arg3[%c0, %c16, %c0_0] : memref<4x17x17xf32, #tpu.memory_space<vmem>>, vector<4x1x17xf32>
    tpu.vector_store %arg3[%c0, %c16, %c0_0], %0 {strides = array<i32>} : memref<4x17x17xf32, #tpu.memory_space<vmem>>, vector<4x1x17xf32>,
    %cst_1 = arith.constant 0.000000e+00 : f32
    %2 = vector.broadcast %cst_1 : f32 to vector<4x16x1xf32>
    %c0_2 = arith.constant 0 : index
    %c0_3 = arith.constant 0 : index
    %c16_4 = arith.constant 16 : index
    %3 = vector.load %arg3[%c0_2, %c0_3, %c16_4] : memref<4x17x17xf32, #tpu.memory_space<vmem>>, vector<4x16x1xf32>
    tpu.vector_store %arg3[%c0_2, %c0_3, %c16_4], %2 {strides = array<i32>} : memref<4x17x17xf32, #tpu.memory_space<vmem>>, vector<4x16x1xf32>,
    %c0_5 = arith.constant 0 : index
    %c0_6 = arith.constant 0 : index
    %c0_7 = arith.constant 0 : index
    %4 = vector.load %arg1[%c0_5, %c0_6, %c0_7] : memref<4x16x16xf32, #tpu.memory_space<vmem>>, vector<4x16x16xf32>
    %c0_8 = arith.constant 0 : index
    %c0_9 = arith.constant 0 : index
    %c0_10 = arith.constant 0 : index
    %5 = vector.load %arg3[%c0_8, %c0_9, %c0_10] : memref<4x17x17xf32, #tpu.memory_space<vmem>>, vector<4x16x16xf32>
    tpu.vector_store %arg3[%c0_8, %c0_9, %c0_10], %4 {strides = array<i32>} : memref<4x17x17xf32, #tpu.memory_space<vmem>>, vector<4x16x16xf32>,
    %c0_11 = arith.constant 0 : index
    %c0_12 = arith.constant 0 : index
    %c0_13 = arith.constant 0 : index
    %6 = vector.load %arg3[%c0_11, %c0_12, %c0_13] : memref<4x17x17xf32, #tpu.memory_space<vmem>>, vector<4x15x17xf32>
    %c0_14 = arith.constant 0 : index
    %c1 = arith.constant 1 : index
    %c0_15 = arith.constant 0 : index
    %7 = vector.load %arg3[%c0_14, %c1, %c0_15] : memref<4x17x17xf32, #tpu.memory_space<vmem>>, vector<4x15x17xf32>
    %8 = arith.maximumf %6, %7 : vector<4x15x17xf32>
    %c0_16 = arith.constant 0 : index
    %c2 = arith.constant 2 : index
    %c0_17 = arith.constant 0 : index
    %9 = vector.load %arg3[%c0_16, %c2, %c0_17] : memref<4x17x17xf32, #tpu.memory_space<vmem>>, vector<4x15x17xf32>
    %10 = arith.maximumf %8, %9 : vector<4x15x17xf32>
    %11 = tpu.iota {dimensions = array<i32: 1>} : vector<8x15xi32>
    %12 = tpu.iota {dimensions = array<i32: 0>} : vector<8x15xi32>
    %c2_i32 = arith.constant 2 : i32
    %13 = vector.broadcast %c2_i32 : i32 to vector<8x15xi32>
    %14 = arith.muli %13, %12 : vector<8x15xi32>
    %15 = arith.cmpi eq, %11, %14 : vector<8x15xi32>
    %16 = arith.extui %15 : vector<8x15xi1> to vector<8x15xi32>
    %17 = arith.sitofp %16 : vector<8x15xi32> to vector<8x15xf32>
    %18 = vector.shape_cast %17 : vector<8x15xf32> to vector<1x8x15xf32>
    %19 = vector.shape_cast %18 : vector<1x8x15xf32> to vector<1x8x15xf32>
    %20 = vector.broadcast %19 : vector<1x8x15xf32> to vector<4x8x15xf32>
    "tpu.trace_start"() <{level = 10 : i32, message = "pab,pbc->pac"}> : () -> ()
    %cst_18 = arith.constant dense<0.000000e+00> : vector<4x8x17xf32>
    %21 = tpu.matmul %20, %10, %cst_18 {dimension_numbers = #tpu.dot_dimension_numbers<[2], [1], [1], [2], [0, 0, 0, 1, 1, 2], [0], [0]>, precision = #tpu.contract_precision<fp32>} : vector<4x8x15xf32>, vector<4x15x17xf32>, vector<4x8x17xf32> -> vector<4x8x17xf32>
    "tpu.trace_stop"() : () -> ()
    %22 = vector.extract_strided_slice %21 {offsets = [0, 0, 0], sizes = [4, 8, 15], strides = [1, 1, 1]} : vector<4x8x17xf32> to vector<4x8x15xf32>
    %23 = vector.extract_strided_slice %21 {offsets = [0, 0, 1], sizes = [4, 8, 15], strides = [1, 1, 1]} : vector<4x8x17xf32> to vector<4x8x15xf32>
    %24 = arith.maximumf %22, %23 : vector<4x8x15xf32>
    %25 = vector.extract_strided_slice %21 {offsets = [0, 0, 2], sizes = [4, 8, 15], strides = [1, 1, 1]} : vector<4x8x17xf32> to vector<4x8x15xf32>
    %26 = arith.maximumf %24, %25 : vector<4x8x15xf32>
    %27 = tpu.iota {dimensions = array<i32: 0>} : vector<15x8xi32>
    %28 = tpu.iota {dimensions = array<i32: 1>} : vector<15x8xi32>
    %c2_i32_19 = arith.constant 2 : i32
    %29 = vector.broadcast %c2_i32_19 : i32 to vector<15x8xi32>
    %30 = arith.muli %29, %28 : vector<15x8xi32>
    %31 = arith.cmpi eq, %27, %30 : vector<15x8xi32>
    %32 = arith.extui %31 : vector<15x8xi1> to vector<15x8xi32>
    %33 = arith.sitofp %32 : vector<15x8xi32> to vector<15x8xf32>
    %34 = vector.shape_cast %33 : vector<15x8xf32> to vector<1x15x8xf32>
    %35 = vector.shape_cast %34 : vector<1x15x8xf32> to vector<1x15x8xf32>
    %36 = vector.broadcast %35 : vector<1x15x8xf32> to vector<4x15x8xf32>
    "tpu.trace_start"() <{level = 10 : i32, message = "pab,pbc->pac"}> : () -> ()
    %cst_20 = arith.constant dense<0.000000e+00> : vector<4x8x8xf32>
    %37 = tpu.matmul %26, %36, %cst_20 {dimension_numbers = #tpu.dot_dimension_numbers<[2], [1], [1], [2], [0, 0, 0, 1, 1, 2], [0], [0]>, precision = #tpu.contract_precision<fp32>} : vector<4x8x15xf32>, vector<4x15x8xf32>, vector<4x8x8xf32> -> vector<4x8x8xf32>
    "tpu.trace_stop"() : () -> ()
    %c0_21 = arith.constant 0 : index
    %c0_22 = arith.constant 0 : index
    %c0_23 = arith.constant 0 : index
    %38 = vector.load %arg2[%c0_21, %c0_22, %c0_23] : memref<4x8x8xf32, #tpu.memory_space<vmem>>, vector<4x8x8xf32>
    tpu.vector_store %arg2[%c0_21, %c0_22, %c0_23], %37 {strides = array<i32>} : memref<4x8x8xf32, #tpu.memory_space<vmem>>, vector<4x8x8xf32>,
    return
  }
  func.func @transform_0(%arg0: i32) -> (i32, i32, i32) {
    %c0_i32 = arith.constant 0 : i32
    %c0_i32_0 = arith.constant 0 : i32
    %c0_i32_1 = arith.constant 0 : i32
    return %arg0, %c0_i32, %c0_i32_0 : i32, i32, i32
  }
  func.func @transform_1(%arg0: i32) -> (i32, i32, i32) {
    %c0_i32 = arith.constant 0 : i32
    %c0_i32_0 = arith.constant 0 : i32
    %c0_i32_1 = arith.constant 0 : i32
    return %arg0, %c0_i32, %c0_i32_0 : i32, i32, i32
  }
}

</mosaic_0001>

<llo_original>
// kernel: tpu_custom_call.1
$region0: #{tpu_custom_call.1}
  #allocation0 [shape = 'u32[]', space=smem, size = 0x4, offset = 0x4, fixed_abs, tag = 'smem constant byte address 0x4 - core index']
  #allocation1 [shape = 'u32[144,128]{1,0:T(1,128)}', space=vmem, size = 0x12000, scoped, tag = 'internal scratch']
  #allocation2 [shape = 'f32[4,17,17]{2,1,0:T(8,128)}', space=vmem, size = 0xc000, scoped, tag = 'scratch operand']
  %s0 = inlined_call_operand.hbm [shape: f32[8,16,16], index: 0, kind: input, shape index: {}]
  %s1 = inlined_call_operand.hbm [shape: f32[8,8,8], index: 1, kind: output, shape index: {}]
  %s2 = sld [smem:[#allocation0]]
  $region41: #{tpu_custom_call.1} parent=0
    _
  %s4 = ssub.s32 1, %s2
  %s5 = scalar_select 0, %s4, %s2
  $region1: #{tpu_custom_call.1} parent=0
    #allocation3 [shape = 'u8[65536]{0}', space=vmem, size = 0x10000, scoped, tag = 'input window, operand 0']
    #allocation4 [shape = 's32[2]{0}', space=sflag, size = 0x8, scoped, tag = 'scoped memory for tpu_custom_call.1']
    #allocation5 [shape = 's32[2]{0}', space=sflag, size = 0x8, scoped, tag = 'scoped memory for tpu_custom_call.1']
    #allocation6 [shape = 'u8[32768]{0}', space=vmem, size = 0x8000, scoped, tag = 'output window, operand 0']
    %6 = vsyncpa [#allocation4], 0
    %s7 = scalar_lea.sflag [#allocation4], 1
    %8 = vsyncpa %s7, 0
    %9 = vsyncpa [#allocation5], 0
    %s10 = scalar_lea.sflag [#allocation5], 1
    %11 = vsyncpa %s10, 0
    loop: start=0, step=1, limit=4
    $region2: #{tpu_custom_call.1} parent=1 // loop_pre_header
      _
    $region3: #{tpu_custom_call.1} parent=1 // loop_header
      %s13 = sphi 0, %s17
      %p14 = scmp.ge.s32.totalorder %s13, 4
      %s23 = sphi 0, %s25
      %s26 = sphi 0, %s23
      %s27 = sphi 0, %s26
      %s43 = sphi 0, %s27
      %s49 = sphi 0, %s51
      %s52 = sphi 0, %s49
      %s53 = sphi 0, %s52
      %s69 = sphi 0, %s53
    $region4: #{tpu_custom_call.1} parent=1 // loop_header_branch
      %16 = sbr.rel (%p14) target = $region8
    $region5: #{tpu_custom_call.1} parent=1 // loop_body
      %s18 = ssub.s32 %s13, 1
      %s19 = ssub.s32 %s13, 2
      %s20 = sadd.s32 %s13, 1
      %s21 = ssub.s32 %s13, %s20
      %p22 = scmp.eq.s32.totalorder %s21, 0
      %s24 = sadd.s32 %s23, 1
      %s25 = scalar_select %p22, %s23, %s24
      %p28 = pneg %p22
      %p29 = scmp.eq.s32.totalorder %s13, 1
      %p30 = por %p28, %p29
      %p31 = scmp.ne.s32.totalorder %s23, %s26
      %p32 = scmp.eq.s32.totalorder %s13, 0
      %p33 = por %p31, %p32
      %p34 = scmp.ne.s32.totalorder %s23, %s26
      %p35 = scmp.eq.s32.totalorder %s18, 1
      %p36 = por %p34, %p35
      %p37 = scmp.ne.s32.totalorder %s26, %s27
      %p38 = scmp.eq.s32.totalorder %s18, 0
      %p39 = por %p37, %p38
      %p40 = scmp.ne.s32.totalorder %s26, %s27
      %p41 = scmp.eq.s32.totalorder %s19, 1
      %p42 = por %p40, %p41
      %p44 = scmp.ne.s32.totalorder %s27, %s43
      %p45 = scmp.eq.s32.totalorder %s19, 0
      %p46 = por %p44, %p45
      %s47 = ssub.s32 %s13, %s20
      %p48 = scmp.eq.s32.totalorder %s47, 0
      %s50 = sadd.s32 %s49, 1
      %s51 = scalar_select %p48, %s49, %s50
      %p54 = pneg %p48
      %p55 = scmp.eq.s32.totalorder %s13, 1
      %p56 = por %p54, %p55
      %p57 = scmp.ne.s32.totalorder %s49, %s52
      %p58 = scmp.eq.s32.totalorder %s13, 0
      %p59 = por %p57, %p58
      %p60 = scmp.ne.s32.totalorder %s49, %s52
      %p61 = scmp.eq.s32.totalorder %s18, 1
      %p62 = por %p60, %p61
      %p63 = scmp.ne.s32.totalorder %s52, %s53
      %p64 = scmp.eq.s32.totalorder %s18, 0
      %p65 = por %p63, %p64
      %p66 = scmp.ne.s32.totalorder %s52, %s53
      %p67 = scmp.eq.s32.totalorder %s19, 1
      %p68 = por %p66, %p67
      %p70 = scmp.ne.s32.totalorder %s53, %s69
      %p71 = scmp.eq.s32.totalorder %s19, 0
      %p72 = por %p70, %p71
      %p73 = scmp.le.s32.totalorder 1, %s13
      %p74 = scmp.lt.s32.totalorder %s13, 3
      %p75 = pnand %p73, %p74
      %p76 = pneg %p75
      // Predicated region
      $region9: #{tpu_custom_call.1} parent=5 // pred_check
        _
      $region10: #{tpu_custom_call.1} parent=5 // pred_check_branch
        %78 = sbr.rel (%p75) target = $region12
      $region11: #{tpu_custom_call.1} parent=5 // pred_region
        %s79 = ssub.s32 %s13, 1
      $region12: #{tpu_custom_call.1} parent=5 // pred_fallthru
        _
      %p80 = scmp.lt.s32.totalorder %s13, 2
      // Predicated region
      $region13: #{tpu_custom_call.1} parent=5 // pred_check
        %p81 = pneg %p80
      $region14: #{tpu_custom_call.1} parent=5 // pred_check_branch
        %83 = sbr.rel (%p81) target = $region16
      $region15: #{tpu_custom_call.1} parent=5 // pred_region
        // Predicated region
        $region17: #{tpu_custom_call.1} parent=15 // pred_check
          %p84 = pneg %p33
        $region18: #{tpu_custom_call.1} parent=15 // pred_check_branch
          %86 = sbr.rel (%p84) target = $region20
        $region19: #{tpu_custom_call.1} parent=15 // pred_region
          %s87 = sand.u32 %s23, 1
          %s88 = scalar_lea.sflag [#allocation4], %s87
          %s89 = sand.u32 %s23, 1
          %s90 = smul.addr %s89, 64
          %s91 = scalar_lea.vmem [#allocation3], %s90
          %s92 = smul.u32 4, %s13
          %s94 = ssub.s32 1024, 1024
          %95 = vsyncadd %s88, %s94
          %s96 = smul.addr %s92, 2
          %s97 = smul.addr %s96, 128
          %s98 = scalar_lea.hbm %s0, %s97
          %s99 = sshll.u32 %s91, 4
          %s100 = int_to_ptr.vmem [resolvable:$true] %s99
          %105 = dma.hbm_to_vmem [thread:$0]  %s98, 1024, %s100, %s88, 128, 128, 8
        $region20: #{tpu_custom_call.1} parent=15 // pred_fallthru
          _
      $region16: #{tpu_custom_call.1} parent=5 // pred_fallthru
        _
      %p106 = scmp.le.s32.totalorder 1, %s13
      %p107 = scmp.lt.s32.totalorder %s13, 3
      %p108 = pnand %p106, %p107
      %p109 = pneg %p108
      // Predicated region
      $region21: #{tpu_custom_call.1} parent=5 // pred_check
        _
      $region22: #{tpu_custom_call.1} parent=5 // pred_check_branch
        %111 = sbr.rel (%p108) target = $region24
      $region23: #{tpu_custom_call.1} parent=5 // pred_region
        %s112 = ssub.s32 %s13, 1
        %s113 = sand.u32 %s26, 1
        %s114 = scalar_lea.sflag [#allocation4], %s113
        %s115 = sand.u32 %s26, 1
        %s116 = smul.addr %s115, 64
        %s117 = scalar_lea.vmem [#allocation3], %s116
        // Predicated region
        $region25: #{tpu_custom_call.1} parent=23 // pred_check
          %p118 = pneg %p39
        $region26: #{tpu_custom_call.1} parent=23 // pred_check_branch
          %120 = sbr.rel (%p118) target = $region28
        $region27: #{tpu_custom_call.1} parent=23 // pred_region
          %121 = dma.done %s114, 1024
        $region28: #{tpu_custom_call.1} parent=23 // pred_fallthru
          _
        %s122 = sand.u32 %s26, 1
        %s123 = scalar_lea.sflag [#allocation4], %s122
        %s124 = sand.u32 %s26, 1
        %s125 = smul.addr %s124, 64
        %s126 = scalar_lea.vmem [#allocation3], %s125
        %p127 = pneg %p39
        %p128 = pneg %p36
        %p129 = pneg %p65
        %p130 = pneg %p62
        %s131 = sand.u32 %s52, 1
        %s132 = scalar_lea.sflag [#allocation5], %s131
        %s133 = sand.u32 %s52, 1
        %s134 = smul.addr %s133, 32
        %s135 = scalar_lea.vmem [#allocation6], %s134
        %s136 = smul.u32 4, %s18
        %s137 = smul.u32 4, %s18
        %vm138 = vcmask 131072
        %139 = vst.msk [vmem:[#allocation2 + $0x10] sm:$0x1] %vm138, 0.0
        %140 = vst.msk [vmem:[#allocation2 + $0x28] sm:$0x1] %vm138, 0.0
        %141 = vst.msk [vmem:[#allocation2 + $0x40] sm:$0x1] %vm138, 0.0
        %142 = vst.msk [vmem:[#allocation2 + $0x58] sm:$0x1] %vm138, 0.0
        %vm143 = vcmask 138368
        %144 = vst.msk [vmem:[#allocation2] sm:$0xff] %vm143, 0.0
        %145 = vst.msk [vmem:[#allocation2 + $0x8] sm:$0xff] %vm143, 0.0
        %146 = vst.msk [vmem:[#allocation2 + $0x18] sm:$0xff] %vm143, 0.0
        %147 = vst.msk [vmem:[#allocation2 + $0x20] sm:$0xff] %vm143, 0.0
        %148 = vst.msk [vmem:[#allocation2 + $0x30] sm:$0xff] %vm143, 0.0
        %149 = vst.msk [vmem:[#allocation2 + $0x38] sm:$0xff] %vm143, 0.0
        %150 = vst.msk [vmem:[#allocation2 + $0x48] sm:$0xff] %vm143, 0.0
        %151 = vst.msk [vmem:[#allocation2 + $0x50] sm:$0xff] %vm143, 0.0
        %v152 = vld [vmem:[%s117] sm:$0xff]
        %v153 = vld [vmem:[%s117 + $0x8] sm:$0xff]
        %v154 = vld [vmem:[%s117 + $0x10] sm:$0xff]
        %v155 = vld [vmem:[%s117 + $0x18] sm:$0xff]
        %v156 = vld [vmem:[%s117 + $0x20] sm:$0xff]
        %v157 = vld [vmem:[%s117 + $0x28] sm:$0xff]
        %v158 = vld [vmem:[%s117 + $0x30] sm:$0xff]
        %v159 = vld [vmem:[%s117 + $0x38] sm:$0xff]
        %vm160 = vcmask 130048
        %161 = vst.msk [vmem:[#allocation2] sm:$0xff] %vm160, %v152
        %162 = vst.msk [vmem:[#allocation2 + $0x8] sm:$0xff] %vm160, %v153
        %163 = vst.msk [vmem:[#allocation2 + $0x18] sm:$0xff] %vm160, %v154
        %164 = vst.msk [vmem:[#allocation2 + $0x20] sm:$0xff] %vm160, %v155
        %165 = vst.msk [vmem:[#allocation2 + $0x30] sm:$0xff] %vm160, %v156
        %166 = vst.msk [vmem:[#allocation2 + $0x38] sm:$0xff] %vm160, %v157
        %167 = vst.msk [vmem:[#allocation2 + $0x48] sm:$0xff] %vm160, %v158
        %168 = vst.msk [vmem:[#allocation2 + $0x50] sm:$0xff] %vm160, %v159
        %v169 = vld [vmem:[#allocation2] sm:$0xff]
        %v170 = vld [vmem:[#allocation2 + $0x8] sm:$0x7f]
        %v171 = vld [vmem:[#allocation2 + $0x18] sm:$0xff]
        %v172 = vld [vmem:[#allocation2 + $0x20] sm:$0x7f]
        %v173 = vld [vmem:[#allocation2 + $0x30] sm:$0xff]
        %v174 = vld [vmem:[#allocation2 + $0x38] sm:$0x7f]
        %v175 = vld [vmem:[#allocation2 + $0x48] sm:$0xff]
        %v176 = vld [vmem:[#allocation2 + $0x50] sm:$0x7f]
        %v177 = vld [vmem:[#allocation2 + $0x1] sm:$0xff]
        %v178 = vld [vmem:[#allocation2 + $0x9] sm:$0x7f]
        %v179 = vld [vmem:[#allocation2 + $0x19] sm:$0xff]
        %v180 = vld [vmem:[#allocation2 + $0x21] sm:$0x7f]
        %v181 = vld [vmem:[#allocation2 + $0x31] sm:$0xff]
        %v182 = vld [vmem:[#allocation2 + $0x39] sm:$0x7f]
        %v183 = vld [vmem:[#allocation2 + $0x49] sm:$0xff]
        %v184 = vld [vmem:[#allocation2 + $0x51] sm:$0x7f]
        %v185 = vmax.f32 %v169, %v177
        %v186 = vmax.f32 %v170, %v178
        %v187 = vmax.f32 %v171, %v179
        %v188 = vmax.f32 %v172, %v180
        %v189 = vmax.f32 %v173, %v181
        %v190 = vmax.f32 %v174, %v182
        %v191 = vmax.f32 %v175, %v183
        %v192 = vmax.f32 %v176, %v184
        %v193 = vld [vmem:[#allocation2 + $0x2] sm:$0xff]
        %v194 = vld [vmem:[#allocation2 + $0xa] sm:$0x7f]
        %v195 = vld [vmem:[#allocation2 + $0x1a] sm:$0xff]
        %v196 = vld [vmem:[#allocation2 + $0x22] sm:$0x7f]
        %v197 = vld [vmem:[#allocation2 + $0x32] sm:$0xff]
        %v198 = vld [vmem:[#allocation2 + $0x3a] sm:$0x7f]
        %v199 = vld [vmem:[#allocation2 + $0x4a] sm:$0xff]
        %v200 = vld [vmem:[#allocation2 + $0x52] sm:$0x7f]
        %v201 = vmax.f32 %v185, %v193
        %v202 = vmax.f32 %v186, %v194
        %v203 = vmax.f32 %v187, %v195
        %v204 = vmax.f32 %v188, %v196
        %v205 = vmax.f32 %v189, %v197
        %v206 = vmax.f32 %v190, %v198
        %v207 = vmax.f32 %v191, %v199
        %v208 = vmax.f32 %v192, %v200
        %v209 = vlaneseq
        %v210 = vand.u32 %v209, 127
        %v211 = vlaneseq
        %v212 = vshrl.u32 %v211, 7
        %v213 = vmul.u32 %v212, 2
        %vm214 = vcmp.eq.s32.totalorder %v210, %v213
        %v215 = vsel %vm214, 1, 0
        %v216 = vcvt.s32.f32 %v215
        %vm217 = vcmask 121856
        %v219 = vsel %vm217, %v216, 0
        %vm221 = vcmask 1046528
        %v223 = vsel %vm221, %v202, 0
        %225 = vmatprep.subr.mxu0 0.0
        %226 = vmatpush1.msra.mxu0 0.0
        %227 = vmatprep.subr.mxu0 0.0
        %228 = vmatpush1.msra.mxu0 0.0
        %229 = vmatprep.subr.mxu0 0.0
        %230 = vmatpush1.msra.mxu0 0.0
        %231 = vmatprep.subr.mxu0 0.0
        %232 = vmatpush1.msra.mxu0 0.0
        %233 = vmatprep.subr.mxu0 0.0
        %234 = vmatpush1.msra.mxu0 0.0
        %235 = vmatprep.subr.mxu0 0.0
        %236 = vmatpush1.msra.mxu0 0.0
        %237 = vmatprep.subr.mxu0 0.0
        %238 = vmatpush1.msra.mxu0 0.0
        %239 = vmatprep.subr.mxu0 0.0
        %240 = vmatpush1.msra.mxu0 0.0
        %241 = vmatprep.subr.mxu0 0.0
        %242 = vmatpush1.msra.mxu0 0.0
        %243 = vmatprep.subr.mxu0 0.0
        %244 = vmatpush1.msra.mxu0 0.0
        %245 = vmatprep.subr.mxu0 0.0
        %246 = vmatpush1.msra.mxu0 0.0
        %247 = vmatprep.subr.mxu0 0.0
        %248 = vmatpush1.msra.mxu0 0.0
        %249 = vmatprep.subr.mxu0 0.0
        %250 = vmatpush1.msra.mxu0 0.0
        %251 = vmatprep.subr.mxu0 0.0
        %252 = vmatpush1.msra.mxu0 0.0
        %253 = vmatprep.subr.mxu0 0.0
        %v254 = vand.u32 %v223, 4294901760
        %255 = vmatpush1.msra.mxu0 %v254
        %256 = vmatprep.subr.mxu0 0.0
        %v257 = vand.u32 %v201, 4294901760
        %258 = vmatpush1.msra.mxu0 %v257
        %259 = vmatprep.subr.mxu0 0.0
        %260 = vmatpush2.msra.mxu0 0.0
        %261 = vmatprep.subr.mxu0 0.0
        %262 = vmatpush2.msra.mxu0 0.0
        %263 = vmatprep.subr.mxu0 0.0
        %264 = vmatpush2.msra.mxu0 0.0
        %265 = vmatprep.subr.mxu0 0.0
        %266 = vmatpush2.msra.mxu0 0.0
        %267 = vmatprep.subr.mxu0 0.0
        %268 = vmatpush2.msra.mxu0 0.0
        %269 = vmatprep.subr.mxu0 0.0
        %270 = vmatpush2.msra.mxu0 0.0
        %271 = vmatprep.subr.mxu0 0.0
        %272 = vmatpush2.msra.mxu0 0.0
        %273 = vmatprep.subr.mxu0 0.0
        %274 = vmatpush2.msra.mxu0 0.0
        %275 = vmatprep.subr.mxu0 0.0
        %276 = vmatpush2.msra.mxu0 0.0
        %277 = vmatprep.subr.mxu0 0.0
        %278 = vmatpush2.msra.mxu0 0.0
        %279 = vmatprep.subr.mxu0 0.0
        %280 = vmatpush2.msra.mxu0 0.0
        %281 = vmatprep.subr.mxu0 0.0
        %282 = vmatpush2.msra.mxu0 0.0
        %283 = vmatprep.subr.mxu0 0.0
        %284 = vmatpush2.msra.mxu0 0.0
        %285 = vmatprep.subr.mxu0 0.0
        %286 = vmatpush2.msra.mxu0 0.0
        %287 = vmatprep.subr.mxu0 0.0
        %288 = vmatpush2.msra.mxu0 0.0
        %289 = vmatprep.subr.mxu0 0.0
        %290 = vmatpush2.msra.mxu0 0.0
        %291 = vmatprep.mubr.f32.mxu0 0.0
        %v292 = vand.u32 %v219, 4294901760
        %v293 = vsub.f32 %v219, %v292
        %v294 = vand.u32 %v293, 4294901760
        %v295 = vsub.f32 %v293, %v294
        %v296 = vand.u32 %v295, 4294901760
        %297 = vmatmul.mubr.f32.gmra.mxu0 %v296
        %v298 = vpop.f32.mrf.mxu0
        %v299 = vadd.f32 0.0, %v298
        %v300 = vpop.f32.mrf.mxu0
        %301 = vdwg.mxu0
        %302 = vmatprep.subr.mxu0 0.0
        %303 = vmatpush1.msra.mxu0 0.0
        %304 = vmatprep.subr.mxu0 0.0
        %305 = vmatpush1.msra.mxu0 0.0
        %306 = vmatprep.subr.mxu0 0.0
        %307 = vmatpush1.msra.mxu0 0.0
        %308 = vmatprep.subr.mxu0 0.0
        %309 = vmatpush1.msra.mxu0 0.0
        %310 = vmatprep.subr.mxu0 0.0
        %311 = vmatpush1.msra.mxu0 0.0
        %312 = vmatprep.subr.mxu0 0.0
        %313 = vmatpush1.msra.mxu0 0.0
        %314 = vmatprep.subr.mxu0 0.0
        %315 = vmatpush1.msra.mxu0 0.0
        %316 = vmatprep.subr.mxu0 0.0
        %317 = vmatpush1.msra.mxu0 0.0
        %318 = vmatprep.subr.mxu0 0.0
        %319 = vmatpush1.msra.mxu0 0.0
        %320 = vmatprep.subr.mxu0 0.0
        %321 = vmatpush1.msra.mxu0 0.0
        %322 = vmatprep.subr.mxu0 0.0
        %323 = vmatpush1.msra.mxu0 0.0
        %324 = vmatprep.subr.mxu0 0.0
        %325 = vmatpush1.msra.mxu0 0.0
        %326 = vmatprep.subr.mxu0 0.0
        %327 = vmatpush1.msra.mxu0 0.0
        %328 = vmatprep.subr.mxu0 0.0
        %329 = vmatpush1.msra.mxu0 0.0
        %330 = vmatprep.subr.mxu0 0.0
        %v331 = vand.u32 %v223, 4294901760
        %v332 = vsub.f32 %v223, %v331
        %v333 = vand.u32 %v332, 4294901760
        %v334 = vsub.f32 %v332, %v333
        %v335 = vand.u32 %v334, 4294901760
        %336 = vmatpush1.msra.mxu0 %v335
        %337 = vmatprep.subr.mxu0 0.0
        %v338 = vand.u32 %v201, 4294901760
        %v339 = vsub.f32 %v201, %v338
        %v340 = vand.u32 %v339, 4294901760
        %v341 = vsub.f32 %v339, %v340
        %v342 = vand.u32 %v341, 4294901760
        %343 = vmatpush1.msra.mxu0 %v342
        %344 = vmatprep.subr.mxu0 0.0
        %345 = vmatpush2.msra.mxu0 0.0
        %346 = vmatprep.subr.mxu0 0.0
        %347 = vmatpush2.msra.mxu0 0.0
        %348 = vmatprep.subr.mxu0 0.0
        %349 = vmatpush2.msra.mxu0 0.0
        %350 = vmatprep.subr.mxu0 0.0
        %351 = vmatpush2.msra.mxu0 0.0
        %352 = vmatprep.subr.mxu0 0.0
        %353 = vmatpush2.msra.mxu0 0.0
        %354 = vmatprep.subr.mxu0 0.0
        %355 = vmatpush2.msra.mxu0 0.0
        %356 = vmatprep.subr.mxu0 0.0
        %357 = vmatpush2.msra.mxu0 0.0
        %358 = vmatprep.subr.mxu0 0.0
        %359 = vmatpush2.msra.mxu0 0.0
        %360 = vmatprep.subr.mxu0 0.0
        %361 = vmatpush2.msra.mxu0 0.0
        %362 = vmatprep.subr.mxu0 0.0
        %363 = vmatpush2.msra.mxu0 0.0
        %364 = vmatprep.subr.mxu0 0.0
        %365 = vmatpush2.msra.mxu0 0.0
        %366 = vmatprep.subr.mxu0 0.0
        %367 = vmatpush2.msra.mxu0 0.0
        %368 = vmatprep.subr.mxu0 0.0
        %369 = vmatpush2.msra.mxu0 0.0
        %370 = vmatprep.subr.mxu0 0.0
        %371 = vmatpush2.msra.mxu0 0.0
        %372 = vmatprep.subr.mxu0 0.0
        %373 = vmatpush2.msra.mxu0 0.0
        %374 = vmatprep.subr.mxu0 0.0
        %375 = vmatpush2.msra.mxu0 0.0
        %376 = vmatprep.mubr.f32.mxu0 0.0
        %v377 = vand.u32 %v219, 4294901760
        %378 = vmatmul.mubr.f32.gmra.mxu0 %v377
        %v379 = vpop.f32.mrf.mxu0
        %v380 = vadd.f32 %v299, %v379
        %v381 = vpop.f32.mrf.mxu0
        %382 = vdwg.mxu0
        %383 = vmatprep.subr.mxu0 0.0
        %384 = vmatpush1.msra.mxu0 0.0
        %385 = vmatprep.subr.mxu0 0.0
        %386 = vmatpush1.msra.mxu0 0.0
        %387 = vmatprep.subr.mxu0 0.0
        %388 = vmatpush1.msra.mxu0 0.0
        %389 = vmatprep.subr.mxu0 0.0
        %390 = vmatpush1.msra.mxu0 0.0
        %391 = vmatprep.subr.mxu0 0.0
        %392 = vmatpush1.msra.mxu0 0.0
        %393 = vmatprep.subr.mxu0 0.0
        %394 = vmatpush1.msra.mxu0 0.0
        %395 = vmatprep.subr.mxu0 0.0
        %396 = vmatpush1.msra.mxu0 0.0
        %397 = vmatprep.subr.mxu0 0.0
        %398 = vmatpush1.msra.mxu0 0.0
        %399 = vmatprep.subr.mxu0 0.0
        %400 = vmatpush1.msra.mxu0 0.0
        %401 = vmatprep.subr.mxu0 0.0
        %402 = vmatpush1.msra.mxu0 0.0
        %403 = vmatprep.subr.mxu0 0.0
        %404 = vmatpush1.msra.mxu0 0.0
        %405 = vmatprep.subr.mxu0 0.0
        %406 = vmatpush1.msra.mxu0 0.0
        %407 = vmatprep.subr.mxu0 0.0
        %408 = vmatpush1.msra.mxu0 0.0
        %409 = vmatprep.subr.mxu0 0.0
        %410 = vmatpush1.msra.mxu0 0.0
        %411 = vmatprep.subr.mxu0 0.0
        %v412 = vand.u32 %v223, 4294901760
        %v413 = vsub.f32 %v223, %v412
        %414 = vmatpush1.msra.mxu0 %v413
        %415 = vmatprep.subr.mxu0 0.0
        %v416 = vand.u32 %v201, 4294901760
        %v417 = vsub.f32 %v201, %v416
        %418 = vmatpush1.msra.mxu0 %v417
        %419 = vmatprep.subr.mxu0 0.0
        %420 = vmatpush2.msra.mxu0 0.0
        %421 = vmatprep.subr.mxu0 0.0
        %422 = vmatpush2.msra.mxu0 0.0
        %423 = vmatprep.subr.mxu0 0.0
        %424 = vmatpush2.msra.mxu0 0.0
        %425 = vmatprep.subr.mxu0 0.0
        %426 = vmatpush2.msra.mxu0 0.0
        %427 = vmatprep.subr.mxu0 0.0
        %428 = vmatpush2.msra.mxu0 0.0
        %429 = vmatprep.subr.mxu0 0.0
        %430 = vmatpush2.msra.mxu0 0.0
        %431 = vmatprep.subr.mxu0 0.0
        %432 = vmatpush2.msra.mxu0 0.0
        %433 = vmatprep.subr.mxu0 0.0
        %434 = vmatpush2.msra.mxu0 0.0
        %435 = vmatprep.subr.mxu0 0.0
        %436 = vmatpush2.msra.mxu0 0.0
        %437 = vmatprep.subr.mxu0 0.0
        %438 = vmatpush2.msra.mxu0 0.0
        %439 = vmatprep.subr.mxu0 0.0
        %440 = vmatpush2.msra.mxu0 0.0
        %441 = vmatprep.subr.mxu0 0.0
        %442 = vmatpush2.msra.mxu0 0.0
        %443 = vmatprep.subr.mxu0 0.0
        %444 = vmatpush2.msra.mxu0 0.0
        %445 = vmatprep.subr.mxu0 0.0
        %446 = vmatpush2.msra.mxu0 0.0
        %447 = vmatprep.subr.mxu0 0.0
        %448 = vmatpush2.msra.mxu0 0.0
        %449 = vmatprep.subr.mxu0 0.0
        %450 = vmatpush2.msra.mxu0 0.0
        %451 = vmatprep.mubr.f32.mxu0 0.0
        %v452 = vand.u32 %v219, 4294901760
        %v453 = vsub.f32 %v219, %v452
        %454 = vmatmul.mubr.f32.gmra.mxu0 %v453
        %v455 = vpop.f32.mrf.mxu0
        %v456 = vadd.f32 %v380, %v455
        %v457 = vpop.f32.mrf.mxu0
        %458 = vdwg.mxu0
        %459 = vmatprep.subr.mxu0 0.0
        %460 = vmatpush1.msra.mxu0 0.0
        %461 = vmatprep.subr.mxu0 0.0
        %462 = vmatpush1.msra.mxu0 0.0
        %463 = vmatprep.subr.mxu0 0.0
        %464 = vmatpush1.msra.mxu0 0.0
        %465 = vmatprep.subr.mxu0 0.0
        %466 = vmatpush1.msra.mxu0 0.0
        %467 = vmatprep.subr.mxu0 0.0
        %468 = vmatpush1.msra.mxu0 0.0
        %469 = vmatprep.subr.mxu0 0.0
        %470 = vmatpush1.msra.mxu0 0.0
        %471 = vmatprep.subr.mxu0 0.0
        %472 = vmatpush1.msra.mxu0 0.0
        %473 = vmatprep.subr.mxu0 0.0
        %474 = vmatpush1.msra.mxu0 0.0
        %475 = vmatprep.subr.mxu0 0.0
        %476 = vmatpush1.msra.mxu0 0.0
        %477 = vmatprep.subr.mxu0 0.0
        %478 = vmatpush1.msra.mxu0 0.0
        %479 = vmatprep.subr.mxu0 0.0
        %480 = vmatpush1.msra.mxu0 0.0
        %481 = vmatprep.subr.mxu0 0.0
        %482 = vmatpush1.msra.mxu0 0.0
        %483 = vmatprep.subr.mxu0 0.0
        %484 = vmatpush1.msra.mxu0 0.0
        %485 = vmatprep.subr.mxu0 0.0
        %486 = vmatpush1.msra.mxu0 0.0
        %487 = vmatprep.subr.mxu0 0.0
        %v488 = vand.u32 %v223, 4294901760
        %489 = vmatpush1.msra.mxu0 %v488
        %490 = vmatprep.subr.mxu0 0.0
        %v491 = vand.u32 %v201, 4294901760
        %492 = vmatpush1.msra.mxu0 %v491
        %493 = vmatprep.subr.mxu0 0.0
        %494 = vmatpush2.msra.mxu0 0.0
        %495 = vmatprep.subr.mxu0 0.0
        %496 = vmatpush2.msra.mxu0 0.0
        %497 = vmatprep.subr.mxu0 0.0
        %498 = vmatpush2.msra.mxu0 0.0
        %499 = vmatprep.subr.mxu0 0.0
        %500 = vmatpush2.msra.mxu0 0.0
        %501 = vmatprep.subr.mxu0 0.0
        %502 = vmatpush2.msra.mxu0 0.0
        %503 = vmatprep.subr.mxu0 0.0
        %504 = vmatpush2.msra.mxu0 0.0
        %505 = vmatprep.subr.mxu0 0.0
        %506 = vmatpush2.msra.mxu0 0.0
        %507 = vmatprep.subr.mxu0 0.0
        %508 = vmatpush2.msra.mxu0 0.0
        %509 = vmatprep.subr.mxu0 0.0
        %510 = vmatpush2.msra.mxu0 0.0
        %511 = vmatprep.subr.mxu0 0.0
        %512 = vmatpush2.msra.mxu0 0.0
        %513 = vmatprep.subr.mxu0 0.0
        %514 = vmatpush2.msra.mxu0 0.0
        %515 = vmatprep.subr.mxu0 0.0
        %516 = vmatpush2.msra.mxu0 0.0
        %517 = vmatprep.subr.mxu0 0.0
        %518 = vmatpush2.msra.mxu0 0.0
        %519 = vmatprep.subr.mxu0 0.0
        %520 = vmatpush2.msra.mxu0 0.0
        %521 = vmatprep.subr.mxu0 0.0
        %522 = vmatpush2.msra.mxu0 0.0
        %523 = vmatprep.subr.mxu0 0.0
        %524 = vmatpush2.msra.mxu0 0.0
        %525 = vmatprep.mubr.f32.mxu0 0.0
        %v526 = vand.u32 %v219, 4294901760
        %v527 = vsub.f32 %v219, %v526
        %v528 = vand.u32 %v527, 4294901760
        %529 = vmatmul.mubr.f32.gmra.mxu0 %v528
        %v530 = vpop.f32.mrf.mxu0
        %v531 = vadd.f32 %v456, %v530
        %v532 = vpop.f32.mrf.mxu0
        %533 = vdwg.mxu0
        %534 = vmatprep.subr.mxu0 0.0
        %535 = vmatpush1.msra.mxu0 0.0
        %536 = vmatprep.subr.mxu0 0.0
        %537 = vmatpush1.msra.mxu0 0.0
        %538 = vmatprep.subr.mxu0 0.0
        %539 = vmatpush1.msra.mxu0 0.0
        %540 = vmatprep.subr.mxu0 0.0
        %541 = vmatpush1.msra.mxu0 0.0
        %542 = vmatprep.subr.mxu0 0.0
        %543 = vmatpush1.msra.mxu0 0.0
        %544 = vmatprep.subr.mxu0 0.0
        %545 = vmatpush1.msra.mxu0 0.0
        %546 = vmatprep.subr.mxu0 0.0
        %547 = vmatpush1.msra.mxu0 0.0
        %548 = vmatprep.subr.mxu0 0.0
        %549 = vmatpush1.msra.mxu0 0.0
        %550 = vmatprep.subr.mxu0 0.0
        %551 = vmatpush1.msra.mxu0 0.0
        %552 = vmatprep.subr.mxu0 0.0
        %553 = vmatpush1.msra.mxu0 0.0
        %554 = vmatprep.subr.mxu0 0.0
        %555 = vmatpush1.msra.mxu0 0.0
        %556 = vmatprep.subr.mxu0 0.0
        %557 = vmatpush1.msra.mxu0 0.0
        %558 = vmatprep.subr.mxu0 0.0
        %559 = vmatpush1.msra.mxu0 0.0
        %560 = vmatprep.subr.mxu0 0.0
        %561 = vmatpush1.msra.mxu0 0.0
        %562 = vmatprep.subr.mxu0 0.0
        %v563 = vand.u32 %v223, 4294901760
        %v564 = vsub.f32 %v223, %v563
        %v565 = vand.u32 %v564, 4294901760
        %566 = vmatpush1.msra.mxu0 %v565
        %567 = vmatprep.subr.mxu0 0.0
        %v568 = vand.u32 %v201, 4294901760
        %v569 = vsub.f32 %v201, %v568
        %v570 = vand.u32 %v569, 4294901760
        %571 = vmatpush1.msra.mxu0 %v570
        %572 = vmatprep.subr.mxu0 0.0
        %573 = vmatpush2.msra.mxu0 0.0
        %574 = vmatprep.subr.mxu0 0.0
        %575 = vmatpush2.msra.mxu0 0.0
        %576 = vmatprep.subr.mxu0 0.0
        %577 = vmatpush2.msra.mxu0 0.0
        %578 = vmatprep.subr.mxu0 0.0
        %579 = vmatpush2.msra.mxu0 0.0
        %580 = vmatprep.subr.mxu0 0.0
        %581 = vmatpush2.msra.mxu0 0.0
        %582 = vmatprep.subr.mxu0 0.0
        %583 = vmatpush2.msra.mxu0 0.0
        %584 = vmatprep.subr.mxu0 0.0
        %585 = vmatpush2.msra.mxu0 0.0
        %586 = vmatprep.subr.mxu0 0.0
        %587 = vmatpush2.msra.mxu0 0.0
        %588 = vmatprep.subr.mxu0 0.0
        %589 = vmatpush2.msra.mxu0 0.0
        %590 = vmatprep.subr.mxu0 0.0
        %591 = vmatpush2.msra.mxu0 0.0
        %592 = vmatprep.subr.mxu0 0.0
        %593 = vmatpush2.msra.mxu0 0.0
        %594 = vmatprep.subr.mxu0 0.0
        %595 = vmatpush2.msra.mxu0 0.0
        %596 = vmatprep.subr.mxu0 0.0
        %597 = vmatpush2.msra.mxu0 0.0
        %598 = vmatprep.subr.mxu0 0.0
        %599 = vmatpush2.msra.mxu0 0.0
        %600 = vmatprep.subr.mxu0 0.0
        %601 = vmatpush2.msra.mxu0 0.0
        %602 = vmatprep.subr.mxu0 0.0
        %603 = vmatpush2.msra.mxu0 0.0
        %604 = vmatprep.mubr.f32.mxu0 0.0
        %v605 = vand.u32 %v219, 4294901760
        %606 = vmatmul.mubr.f32.gmra.mxu0 %v605
        %v607 = vpop.f32.mrf.mxu0
        %v608 = vadd.f32 %v531, %v607
        %v609 = vpop.f32.mrf.mxu0
        %610 = vdwg.mxu0
        %611 = vmatprep.subr.mxu0 0.0
        %612 = vmatpush1.msra.mxu0 0.0
        %613 = vmatprep.subr.mxu0 0.0
        %614 = vmatpush1.msra.mxu0 0.0
        %615 = vmatprep.subr.mxu0 0.0
        %616 = vmatpush1.msra.mxu0 0.0
        %617 = vmatprep.subr.mxu0 0.0
        %618 = vmatpush1.msra.mxu0 0.0
        %619 = vmatprep.subr.mxu0 0.0
        %620 = vmatpush1.msra.mxu0 0.0
        %621 = vmatprep.subr.mxu0 0.0
        %622 = vmatpush1.msra.mxu0 0.0
        %623 = vmatprep.subr.mxu0 0.0
        %624 = vmatpush1.msra.mxu0 0.0
        %625 = vmatprep.subr.mxu0 0.0
        %626 = vmatpush1.msra.mxu0 0.0
        %627 = vmatprep.subr.mxu0 0.0
        %628 = vmatpush1.msra.mxu0 0.0
        %629 = vmatprep.subr.mxu0 0.0
        %630 = vmatpush1.msra.mxu0 0.0
        %631 = vmatprep.subr.mxu0 0.0
        %632 = vmatpush1.msra.mxu0 0.0
        %633 = vmatprep.subr.mxu0 0.0
        %634 = vmatpush1.msra.mxu0 0.0
        %635 = vmatprep.subr.mxu0 0.0
        %636 = vmatpush1.msra.mxu0 0.0
        %637 = vmatprep.subr.mxu0 0.0
        %638 = vmatpush1.msra.mxu0 0.0
        %639 = vmatprep.subr.mxu0 0.0
        %v640 = vand.u32 %v223, 4294901760
        %641 = vmatpush1.msra.mxu0 %v640
        %642 = vmatprep.subr.mxu0 0.0
        %v643 = vand.u32 %v201, 4294901760
        %644 = vmatpush1.msra.mxu0 %v643
        %645 = vmatprep.subr.mxu0 0.0
        %646 = vmatpush2.msra.mxu0 0.0
        %647 = vmatprep.subr.mxu0 0.0
        %648 = vmatpush2.msra.mxu0 0.0
        %649 = vmatprep.subr.mxu0 0.0
        %650 = vmatpush2.msra.mxu0 0.0
        %651 = vmatprep.subr.mxu0 0.0
        %652 = vmatpush2.msra.mxu0 0.0
        %653 = vmatprep.subr.mxu0 0.0
        %654 = vmatpush2.msra.mxu0 0.0
        %655 = vmatprep.subr.mxu0 0.0
        %656 = vmatpush2.msra.mxu0 0.0
        %657 = vmatprep.subr.mxu0 0.0
        %658 = vmatpush2.msra.mxu0 0.0
        %659 = vmatprep.subr.mxu0 0.0
        %660 = vmatpush2.msra.mxu0 0.0
        %661 = vmatprep.subr.mxu0 0.0
        %662 = vmatpush2.msra.mxu0 0.0
        %663 = vmatprep.subr.mxu0 0.0
        %664 = vmatpush2.msra.mxu0 0.0
        %665 = vmatprep.subr.mxu0 0.0
        %666 = vmatpush2.msra.mxu0 0.0
        %667 = vmatprep.subr.mxu0 0.0
        %668 = vmatpush2.msra.mxu0 0.0
        %669 = vmatprep.subr.mxu0 0.0
        %670 = vmatpush2.msra.mxu0 0.0
        %671 = vmatprep.subr.mxu0 0.0
        %672 = vmatpush2.msra.mxu0 0.0
        %673 = vmatprep.subr.mxu0 0.0
        %674 = vmatpush2.msra.mxu0 0.0
        %675 = vmatprep.subr.mxu0 0.0
        %676 = vmatpush2.msra.mxu0 0.0
        %677 = vmatprep.mubr.f32.mxu0 0.0
        %v678 = vand.u32 %v219, 4294901760
        %679 = vmatmul.mubr.f32.gmra.mxu0 %v678
        %v680 = vpop.f32.mrf.mxu0
        %v681 = vadd.f32 %v608, %v680
        %v682 = vpop.f32.mrf.mxu0
        %683 = vdwg.mxu0
        %v685 = vsel %vm221, %v204, 0
        %687 = vmatprep.subr.mxu0 0.0
        %688 = vmatpush1.msra.mxu0 0.0
        %689 = vmatprep.subr.mxu0 0.0
        %690 = vmatpush1.msra.mxu0 0.0
        %691 = vmatprep.subr.mxu0 0.0
        %692 = vmatpush1.msra.mxu0 0.0
        %693 = vmatprep.subr.mxu0 0.0
        %694 = vmatpush1.msra.mxu0 0.0
        %695 = vmatprep.subr.mxu0 0.0
        %696 = vmatpush1.msra.mxu0 0.0
        %697 = vmatprep.subr.mxu0 0.0
        %698 = vmatpush1.msra.mxu0 0.0
        %699 = vmatprep.subr.mxu0 0.0
        %700 = vmatpush1.msra.mxu0 0.0
        %701 = vmatprep.subr.mxu0 0.0
        %702 = vmatpush1.msra.mxu0 0.0
        %703 = vmatprep.subr.mxu0 0.0
        %704 = vmatpush1.msra.mxu0 0.0
        %705 = vmatprep.subr.mxu0 0.0
        %706 = vmatpush1.msra.mxu0 0.0
        %707 = vmatprep.subr.mxu0 0.0
        %708 = vmatpush1.msra.mxu0 0.0
        %709 = vmatprep.subr.mxu0 0.0
        %710 = vmatpush1.msra.mxu0 0.0
        %711 = vmatprep.subr.mxu0 0.0
        %712 = vmatpush1.msra.mxu0 0.0
        %713 = vmatprep.subr.mxu0 0.0
        %714 = vmatpush1.msra.mxu0 0.0
        %715 = vmatprep.subr.mxu0 0.0
        %v716 = vand.u32 %v685, 4294901760
        %717 = vmatpush1.msra.mxu0 %v716
        %718 = vmatprep.subr.mxu0 0.0
        %v719 = vand.u32 %v203, 4294901760
        %720 = vmatpush1.msra.mxu0 %v719
        %721 = vmatprep.subr.mxu0 0.0
        %722 = vmatpush2.msra.mxu0 0.0
        %723 = vmatprep.subr.mxu0 0.0
        %724 = vmatpush2.msra.mxu0 0.0
        %725 = vmatprep.subr.mxu0 0.0
        %726 = vmatpush2.msra.mxu0 0.0
        %727 = vmatprep.subr.mxu0 0.0
        %728 = vmatpush2.msra.mxu0 0.0
        %729 = vmatprep.subr.mxu0 0.0
        %730 = vmatpush2.msra.mxu0 0.0
        %731 = vmatprep.subr.mxu0 0.0
        %732 = vmatpush2.msra.mxu0 0.0
        %733 = vmatprep.subr.mxu0 0.0
        %734 = vmatpush2.msra.mxu0 0.0
        %735 = vmatprep.subr.mxu0 0.0
        %736 = vmatpush2.msra.mxu0 0.0
        %737 = vmatprep.subr.mxu0 0.0
        %738 = vmatpush2.msra.mxu0 0.0
        %739 = vmatprep.subr.mxu0 0.0
        %740 = vmatpush2.msra.mxu0 0.0
        %741 = vmatprep.subr.mxu0 0.0
        %742 = vmatpush2.msra.mxu0 0.0
        %743 = vmatprep.subr.mxu0 0.0
        %744 = vmatpush2.msra.mxu0 0.0
        %745 = vmatprep.subr.mxu0 0.0
        %746 = vmatpush2.msra.mxu0 0.0
        %747 = vmatprep.subr.mxu0 0.0
        %748 = vmatpush2.msra.mxu0 0.0
        %749 = vmatprep.subr.mxu0 0.0
        %750 = vmatpush2.msra.mxu0 0.0
        %751 = vmatprep.subr.mxu0 0.0
        %752 = vmatpush2.msra.mxu0 0.0
        %753 = vmatprep.mubr.f32.mxu0 0.0
        %v754 = vand.u32 %v219, 4294901760
        %v755 = vsub.f32 %v219, %v754
        %v756 = vand.u32 %v755, 4294901760
        %v757 = vsub.f32 %v755, %v756
        %v758 = vand.u32 %v757, 4294901760
        %759 = vmatmul.mubr.f32.gmra.mxu0 %v758
        %v760 = vpop.f32.mrf.mxu0
        %v761 = vadd.f32 0.0, %v760
        %v762 = vpop.f32.mrf.mxu0
        %763 = vdwg.mxu0
        %764 = vmatprep.subr.mxu0 0.0
        %765 = vmatpush1.msra.mxu0 0.0
        %766 = vmatprep.subr.mxu0 0.0
        %767 = vmatpush1.msra.mxu0 0.0
        %768 = vmatprep.subr.mxu0 0.0
        %769 = vmatpush1.msra.mxu0 0.0
        %770 = vmatprep.subr.mxu0 0.0
        %771 = vmatpush1.msra.mxu0 0.0
        %772 = vmatprep.subr.mxu0 0.0
        %773 = vmatpush1.msra.mxu0 0.0
        %774 = vmatprep.subr.mxu0 0.0
        %775 = vmatpush1.msra.mxu0 0.0
        %776 = vmatprep.subr.mxu0 0.0
        %777 = vmatpush1.msra.mxu0 0.0
        %778 = vmatprep.subr.mxu0 0.0
        %779 = vmatpush1.msra.mxu0 0.0
        %780 = vmatprep.subr.mxu0 0.0
        %781 = vmatpush1.msra.mxu0 0.0
        %782 = vmatprep.subr.mxu0 0.0
        %783 = vmatpush1.msra.mxu0 0.0
        %784 = vmatprep.subr.mxu0 0.0
        %785 = vmatpush1.msra.mxu0 0.0
        %786 = vmatprep.subr.mxu0 0.0
        %787 = vmatpush1.msra.mxu0 0.0
        %788 = vmatprep.subr.mxu0 0.0
        %789 = vmatpush1.msra.mxu0 0.0
        %790 = vmatprep.subr.mxu0 0.0
        %791 = vmatpush1.msra.mxu0 0.0
        %792 = vmatprep.subr.mxu0 0.0
        %v793 = vand.u32 %v685, 4294901760
        %v794 = vsub.f32 %v685, %v793
        %v795 = vand.u32 %v794, 4294901760
        %v796 = vsub.f32 %v794, %v795
        %v797 = vand.u32 %v796, 4294901760
        %798 = vmatpush1.msra.mxu0 %v797
        %799 = vmatprep.subr.mxu0 0.0
        %v800 = vand.u32 %v203, 4294901760
        %v801 = vsub.f32 %v203, %v800
        %v802 = vand.u32 %v801, 4294901760
        %v803 = vsub.f32 %v801, %v802
        %v804 = vand.u32 %v803, 4294901760
        %805 = vmatpush1.msra.mxu0 %v804
        %806 = vmatprep.subr.mxu0 0.0
        %807 = vmatpush2.msra.mxu0 0.0
        %808 = vmatprep.subr.mxu0 0.0
        %809 = vmatpush2.msra.mxu0 0.0
        %810 = vmatprep.subr.mxu0 0.0
        %811 = vmatpush2.msra.mxu0 0.0
        %812 = vmatprep.subr.mxu0 0.0
        %813 = vmatpush2.msra.mxu0 0.0
        %814 = vmatprep.subr.mxu0 0.0
        %815 = vmatpush2.msra.mxu0 0.0
        %816 = vmatprep.subr.mxu0 0.0
        %817 = vmatpush2.msra.mxu0 0.0
        %818 = vmatprep.subr.mxu0 0.0
        %819 = vmatpush2.msra.mxu0 0.0
        %820 = vmatprep.subr.mxu0 0.0
        %821 = vmatpush2.msra.mxu0 0.0
        %822 = vmatprep.subr.mxu0 0.0
        %823 = vmatpush2.msra.mxu0 0.0
        %824 = vmatprep.subr.mxu0 0.0
        %825 = vmatpush2.msra.mxu0 0.0
        %826 = vmatprep.subr.mxu0 0.0
        %827 = vmatpush2.msra.mxu0 0.0
        %828 = vmatprep.subr.mxu0 0.0
        %829 = vmatpush2.msra.mxu0 0.0
        %830 = vmatprep.subr.mxu0 0.0
        %831 = vmatpush2.msra.mxu0 0.0
        %832 = vmatprep.subr.mxu0 0.0
        %833 = vmatpush2.msra.mxu0 0.0
        %834 = vmatprep.subr.mxu0 0.0
        %835 = vmatpush2.msra.mxu0 0.0
        %836 = vmatprep.subr.mxu0 0.0
        %837 = vmatpush2.msra.mxu0 0.0
        %838 = vmatprep.mubr.f32.mxu0 0.0
        %v839 = vand.u32 %v219, 4294901760
        %840 = vmatmul.mubr.f32.gmra.mxu0 %v839
        %v841 = vpop.f32.mrf.mxu0
        %v842 = vadd.f32 %v761, %v841
        %v843 = vpop.f32.mrf.mxu0
        %844 = vdwg.mxu0
        %845 = vmatprep.subr.mxu0 0.0
        %846 = vmatpush1.msra.mxu0 0.0
        %847 = vmatprep.subr.mxu0 0.0
        %848 = vmatpush1.msra.mxu0 0.0
        %849 = vmatprep.subr.mxu0 0.0
        %850 = vmatpush1.msra.mxu0 0.0
        %851 = vmatprep.subr.mxu0 0.0
        %852 = vmatpush1.msra.mxu0 0.0
        %853 = vmatprep.subr.mxu0 0.0
        %854 = vmatpush1.msra.mxu0 0.0
        %855 = vmatprep.subr.mxu0 0.0
        %856 = vmatpush1.msra.mxu0 0.0
        %857 = vmatprep.subr.mxu0 0.0
        %858 = vmatpush1.msra.mxu0 0.0
        %859 = vmatprep.subr.mxu0 0.0
        %860 = vmatpush1.msra.mxu0 0.0
        %861 = vmatprep.subr.mxu0 0.0
        %862 = vmatpush1.msra.mxu0 0.0
        %863 = vmatprep.subr.mxu0 0.0
        %864 = vmatpush1.msra.mxu0 0.0
        %865 = vmatprep.subr.mxu0 0.0
        %866 = vmatpush1.msra.mxu0 0.0
        %867 = vmatprep.subr.mxu0 0.0
        %868 = vmatpush1.msra.mxu0 0.0
        %869 = vmatprep.subr.mxu0 0.0
        %870 = vmatpush1.msra.mxu0 0.0
        %871 = vmatprep.subr.mxu0 0.0
        %872 = vmatpush1.msra.mxu0 0.0
        %873 = vmatprep.subr.mxu0 0.0
        %v874 = vand.u32 %v685, 4294901760
        %v875 = vsub.f32 %v685, %v874
        %876 = vmatpush1.msra.mxu0 %v875
        %877 = vmatprep.subr.mxu0 0.0
        %v878 = vand.u32 %v203, 4294901760
        %v879 = vsub.f32 %v203, %v878
        %880 = vmatpush1.msra.mxu0 %v879
        %881 = vmatprep.subr.mxu0 0.0
        %882 = vmatpush2.msra.mxu0 0.0
        %883 = vmatprep.subr.mxu0 0.0
        %884 = vmatpush2.msra.mxu0 0.0
        %885 = vmatprep.subr.mxu0 0.0
        %886 = vmatpush2.msra.mxu0 0.0
        %887 = vmatprep.subr.mxu0 0.0
        %888 = vmatpush2.msra.mxu0 0.0
        %889 = vmatprep.subr.mxu0 0.0
        %890 = vmatpush2.msra.mxu0 0.0
        %891 = vmatprep.subr.mxu0 0.0
        %892 = vmatpush2.msra.mxu0 0.0
        %893 = vmatprep.subr.mxu0 0.0
        %894 = vmatpush2.msra.mxu0 0.0
        %895 = vmatprep.subr.mxu0 0.0
        %896 = vmatpush2.msra.mxu0 0.0
        %897 = vmatprep.subr.mxu0 0.0
        %898 = vmatpush2.msra.mxu0 0.0
        %899 = vmatprep.subr.mxu0 0.0
        %900 = vmatpush2.msra.mxu0 0.0
        %901 = vmatprep.subr.mxu0 0.0
        %902 = vmatpush2.msra.mxu0 0.0
        %903 = vmatprep.subr.mxu0 0.0
        %904 = vmatpush2.msra.mxu0 0.0
        %905 = vmatprep.subr.mxu0 0.0
        %906 = vmatpush2.msra.mxu0 0.0
        %907 = vmatprep.subr.mxu0 0.0
        %908 = vmatpush2.msra.mxu0 0.0
        %909 = vmatprep.subr.mxu0 0.0
        %910 = vmatpush2.msra.mxu0 0.0
        %911 = vmatprep.subr.mxu0 0.0
        %912 = vmatpush2.msra.mxu0 0.0
        %913 = vmatprep.mubr.f32.mxu0 0.0
        %v914 = vand.u32 %v219, 4294901760
        %v915 = vsub.f32 %v219, %v914
        %916 = vmatmul.mubr.f32.gmra.mxu0 %v915
        %v917 = vpop.f32.mrf.mxu0
        %v918 = vadd.f32 %v842, %v917
        %v919 = vpop.f32.mrf.mxu0
        %920 = vdwg.mxu0
        %921 = vmatprep.subr.mxu0 0.0
        %922 = vmatpush1.msra.mxu0 0.0
        %923 = vmatprep.subr.mxu0 0.0
        %924 = vmatpush1.msra.mxu0 0.0
        %925 = vmatprep.subr.mxu0 0.0
        %926 = vmatpush1.msra.mxu0 0.0
        %927 = vmatprep.subr.mxu0 0.0
        %928 = vmatpush1.msra.mxu0 0.0
        %929 = vmatprep.subr.mxu0 0.0
        %930 = vmatpush1.msra.mxu0 0.0
        %931 = vmatprep.subr.mxu0 0.0
        %932 = vmatpush1.msra.mxu0 0.0
        %933 = vmatprep.subr.mxu0 0.0
        %934 = vmatpush1.msra.mxu0 0.0
        %935 = vmatprep.subr.mxu0 0.0
        %936 = vmatpush1.msra.mxu0 0.0
        %937 = vmatprep.subr.mxu0 0.0
        %938 = vmatpush1.msra.mxu0 0.0
        %939 = vmatprep.subr.mxu0 0.0
        %940 = vmatpush1.msra.mxu0 0.0
        %941 = vmatprep.subr.mxu0 0.0
        %942 = vmatpush1.msra.mxu0 0.0
        %943 = vmatprep.subr.mxu0 0.0
        %944 = vmatpush1.msra.mxu0 0.0
        %945 = vmatprep.subr.mxu0 0.0
        %946 = vmatpush1.msra.mxu0 0.0
        %947 = vmatprep.subr.mxu0 0.0
        %948 = vmatpush1.msra.mxu0 0.0
        %949 = vmatprep.subr.mxu0 0.0
        %v950 = vand.u32 %v685, 4294901760
        %951 = vmatpush1.msra.mxu0 %v950
        %952 = vmatprep.subr.mxu0 0.0
        %v953 = vand.u32 %v203, 4294901760
        %954 = vmatpush1.msra.mxu0 %v953
        %955 = vmatprep.subr.mxu0 0.0
        %956 = vmatpush2.msra.mxu0 0.0
        %957 = vmatprep.subr.mxu0 0.0
        %958 = vmatpush2.msra.mxu0 0.0
        %959 = vmatprep.subr.mxu0 0.0
        %960 = vmatpush2.msra.mxu0 0.0
        %961 = vmatprep.subr.mxu0 0.0
        %962 = vmatpush2.msra.mxu0 0.0
        %963 = vmatprep.subr.mxu0 0.0
        %964 = vmatpush2.msra.mxu0 0.0
        %965 = vmatprep.subr.mxu0 0.0
        %966 = vmatpush2.msra.mxu0 0.0
        %967 = vmatprep.subr.mxu0 0.0
        %968 = vmatpush2.msra.mxu0 0.0
        %969 = vmatprep.subr.mxu0 0.0
        %970 = vmatpush2.msra.mxu0 0.0
        %971 = vmatprep.subr.mxu0 0.0
        %972 = vmatpush2.msra.mxu0 0.0
        %973 = vmatprep.subr.mxu0 0.0
        %974 = vmatpush2.msra.mxu0 0.0
        %975 = vmatprep.subr.mxu0 0.0
        %976 = vmatpush2.msra.mxu0 0.0
        %977 = vmatprep.subr.mxu0 0.0
        %978 = vmatpush2.msra.mxu0 0.0
        %979 = vmatprep.subr.mxu0 0.0
        %980 = vmatpush2.msra.mxu0 0.0
        %981 = vmatprep.subr.mxu0 0.0
        %982 = vmatpush2.msra.mxu0 0.0
        %983 = vmatprep.subr.mxu0 0.0
        %984 = vmatpush2.msra.mxu0 0.0
        %985 = vmatprep.subr.mxu0 0.0
        %986 = vmatpush2.msra.mxu0 0.0
        %987 = vmatprep.mubr.f32.mxu0 0.0
        %v988 = vand.u32 %v219, 4294901760
        %v989 = vsub.f32 %v219, %v988
        %v990 = vand.u32 %v989, 4294901760
        %991 = vmatmul.mubr.f32.gmra.mxu0 %v990
        %v992 = vpop.f32.mrf.mxu0
        %v993 = vadd.f32 %v918, %v992
        %v994 = vpop.f32.mrf.mxu0
        %995 = vdwg.mxu0
        %996 = vmatprep.subr.mxu0 0.0
        %997 = vmatpush1.msra.mxu0 0.0
        %998 = vmatprep.subr.mxu0 0.0
        %999 = vmatpush1.msra.mxu0 0.0
        %1000 = vmatprep.subr.mxu0 0.0
        %1001 = vmatpush1.msra.mxu0 0.0
        %1002 = vmatprep.subr.mxu0 0.0
        %1003 = vmatpush1.msra.mxu0 0.0
        %1004 = vmatprep.subr.mxu0 0.0
        %1005 = vmatpush1.msra.mxu0 0.0
        %1006 = vmatprep.subr.mxu0 0.0
        %1007 = vmatpush1.msra.mxu0 0.0
        %1008 = vmatprep.subr.mxu0 0.0
        %1009 = vmatpush1.msra.mxu0 0.0
        %1010 = vmatprep.subr.mxu0 0.0
        %1011 = vmatpush1.msra.mxu0 0.0
        %1012 = vmatprep.subr.mxu0 0.0
        %1013 = vmatpush1.msra.mxu0 0.0
        %1014 = vmatprep.subr.mxu0 0.0
        %1015 = vmatpush1.msra.mxu0 0.0
        %1016 = vmatprep.subr.mxu0 0.0
        %1017 = vmatpush1.msra.mxu0 0.0
        %1018 = vmatprep.subr.mxu0 0.0
        %1019 = vmatpush1.msra.mxu0 0.0
        %1020 = vmatprep.subr.mxu0 0.0
        %1021 = vmatpush1.msra.mxu0 0.0
        %1022 = vmatprep.subr.mxu0 0.0
        %1023 = vmatpush1.msra.mxu0 0.0
        %1024 = vmatprep.subr.mxu0 0.0
        %v1025 = vand.u32 %v685, 4294901760
        %v1026 = vsub.f32 %v685, %v1025
        %v1027 = vand.u32 %v1026, 4294901760
        %1028 = vmatpush1.msra.mxu0 %v1027
        %1029 = vmatprep.subr.mxu0 0.0
        %v1030 = vand.u32 %v203, 4294901760
        %v1031 = vsub.f32 %v203, %v1030
        %v1032 = vand.u32 %v1031, 4294901760
        %1033 = vmatpush1.msra.mxu0 %v1032
        %1034 = vmatprep.subr.mxu0 0.0
        %1035 = vmatpush2.msra.mxu0 0.0
        %1036 = vmatprep.subr.mxu0 0.0
        %1037 = vmatpush2.msra.mxu0 0.0
        %1038 = vmatprep.subr.mxu0 0.0
        %1039 = vmatpush2.msra.mxu0 0.0
        %1040 = vmatprep.subr.mxu0 0.0
        %1041 = vmatpush2.msra.mxu0 0.0
        %1042 = vmatprep.subr.mxu0 0.0
        %1043 = vmatpush2.msra.mxu0 0.0
        %1044 = vmatprep.subr.mxu0 0.0
        %1045 = vmatpush2.msra.mxu0 0.0
        %1046 = vmatprep.subr.mxu0 0.0
        %1047 = vmatpush2.msra.mxu0 0.0
        %1048 = vmatprep.subr.mxu0 0.0
        %1049 = vmatpush2.msra.mxu0 0.0
        %1050 = vmatprep.subr.mxu0 0.0
        %1051 = vmatpush2.msra.mxu0 0.0
        %1052 = vmatprep.subr.mxu0 0.0
        %1053 = vmatpush2.msra.mxu0 0.0
        %1054 = vmatprep.subr.mxu0 0.0
        %1055 = vmatpush2.msra.mxu0 0.0
        %1056 = vmatprep.subr.mxu0 0.0
        %1057 = vmatpush2.msra.mxu0 0.0
        %1058 = vmatprep.subr.mxu0 0.0
        %1059 = vmatpush2.msra.mxu0 0.0
        %1060 = vmatprep.subr.mxu0 0.0
        %1061 = vmatpush2.msra.mxu0 0.0
        %1062 = vmatprep.subr.mxu0 0.0
        %1063 = vmatpush2.msra.mxu0 0.0
        %1064 = vmatprep.subr.mxu0 0.0
        %1065 = vmatpush2.msra.mxu0 0.0
        %1066 = vmatprep.mubr.f32.mxu0 0.0
        %v1067 = vand.u32 %v219, 4294901760
        %1068 = vmatmul.mubr.f32.gmra.mxu0 %v1067
        %v1069 = vpop.f32.mrf.mxu0
        %v1070 = vadd.f32 %v993, %v1069
        %v1071 = vpop.f32.mrf.mxu0
        %1072 = vdwg.mxu0
        %1073 = vmatprep.subr.mxu0 0.0
        %1074 = vmatpush1.msra.mxu0 0.0
        %1075 = vmatprep.subr.mxu0 0.0
        %1076 = vmatpush1.msra.mxu0 0.0
        %1077 = vmatprep.subr.mxu0 0.0
        %1078 = vmatpush1.msra.mxu0 0.0
        %1079 = vmatprep.subr.mxu0 0.0
        %1080 = vmatpush1.msra.mxu0 0.0
        %1081 = vmatprep.subr.mxu0 0.0
        %1082 = vmatpush1.msra.mxu0 0.0
        %1083 = vmatprep.subr.mxu0 0.0
        %1084 = vmatpush1.msra.mxu0 0.0
        %1085 = vmatprep.subr.mxu0 0.0
        %1086 = vmatpush1.msra.mxu0 0.0
        %1087 = vmatprep.subr.mxu0 0.0
        %1088 = vmatpush1.msra.mxu0 0.0
        %1089 = vmatprep.subr.mxu0 0.0
        %1090 = vmatpush1.msra.mxu0 0.0
        %1091 = vmatprep.subr.mxu0 0.0
        %1092 = vmatpush1.msra.mxu0 0.0
        %1093 = vmatprep.subr.mxu0 0.0
        %1094 = vmatpush1.msra.mxu0 0.0
        %1095 = vmatprep.subr.mxu0 0.0
        %1096 = vmatpush1.msra.mxu0 0.0
        %1097 = vmatprep.subr.mxu0 0.0
        %1098 = vmatpush1.msra.mxu0 0.0
        %1099 = vmatprep.subr.mxu0 0.0
        %1100 = vmatpush1.msra.mxu0 0.0
        %1101 = vmatprep.subr.mxu0 0.0
        %v1102 = vand.u32 %v685, 4294901760
        %1103 = vmatpush1.msra.mxu0 %v1102
        %1104 = vmatprep.subr.mxu0 0.0
        %v1105 = vand.u32 %v203, 4294901760
        %1106 = vmatpush1.msra.mxu0 %v1105
        %1107 = vmatprep.subr.mxu0 0.0
        %1108 = vmatpush2.msra.mxu0 0.0
        %1109 = vmatprep.subr.mxu0 0.0
        %1110 = vmatpush2.msra.mxu0 0.0
        %1111 = vmatprep.subr.mxu0 0.0
        %1112 = vmatpush2.msra.mxu0 0.0
        %1113 = vmatprep.subr.mxu0 0.0
        %1114 = vmatpush2.msra.mxu0 0.0
        %1115 = vmatprep.subr.mxu0 0.0
        %1116 = vmatpush2.msra.mxu0 0.0
        %1117 = vmatprep.subr.mxu0 0.0
        %1118 = vmatpush2.msra.mxu0 0.0
        %1119 = vmatprep.subr.mxu0 0.0
        %1120 = vmatpush2.msra.mxu0 0.0
        %1121 = vmatprep.subr.mxu0 0.0
        %1122 = vmatpush2.msra.mxu0 0.0
        %1123 = vmatprep.subr.mxu0 0.0
        %1124 = vmatpush2.msra.mxu0 0.0
        %1125 = vmatprep.subr.mxu0 0.0
        %1126 = vmatpush2.msra.mxu0 0.0
        %1127 = vmatprep.subr.mxu0 0.0
        %1128 = vmatpush2.msra.mxu0 0.0
        %1129 = vmatprep.subr.mxu0 0.0
        %1130 = vmatpush2.msra.mxu0 0.0
        %1131 = vmatprep.subr.mxu0 0.0
        %1132 = vmatpush2.msra.mxu0 0.0
        %1133 = vmatprep.subr.mxu0 0.0
        %1134 = vmatpush2.msra.mxu0 0.0
        %1135 = vmatprep.subr.mxu0 0.0
        %1136 = vmatpush2.msra.mxu0 0.0
        %1137 = vmatprep.subr.mxu0 0.0
        %1138 = vmatpush2.msra.mxu0 0.0
        %1139 = vmatprep.mubr.f32.mxu0 0.0
        %v1140 = vand.u32 %v219, 4294901760
        %1141 = vmatmul.mubr.f32.gmra.mxu0 %v1140
        %v1142 = vpop.f32.mrf.mxu0
        %v1143 = vadd.f32 %v1070, %v1142
        %v1144 = vpop.f32.mrf.mxu0
        %1145 = vdwg.mxu0
        %v1147 = vsel %vm221, %v206, 0
        %1149 = vmatprep.subr.mxu0 0.0
        %1150 = vmatpush1.msra.mxu0 0.0
        %1151 = vmatprep.subr.mxu0 0.0
        %1152 = vmatpush1.msra.mxu0 0.0
        %1153 = vmatprep.subr.mxu0 0.0
        %1154 = vmatpush1.msra.mxu0 0.0
        %1155 = vmatprep.subr.mxu0 0.0
        %1156 = vmatpush1.msra.mxu0 0.0
        %1157 = vmatprep.subr.mxu0 0.0
        %1158 = vmatpush1.msra.mxu0 0.0
        %1159 = vmatprep.subr.mxu0 0.0
        %1160 = vmatpush1.msra.mxu0 0.0
        %1161 = vmatprep.subr.mxu0 0.0
        %1162 = vmatpush1.msra.mxu0 0.0
        %1163 = vmatprep.subr.mxu0 0.0
        %1164 = vmatpush1.msra.mxu0 0.0
        %1165 = vmatprep.subr.mxu0 0.0
        %1166 = vmatpush1.msra.mxu0 0.0
        %1167 = vmatprep.subr.mxu0 0.0
        %1168 = vmatpush1.msra.mxu0 0.0
        %1169 = vmatprep.subr.mxu0 0.0
        %1170 = vmatpush1.msra.mxu0 0.0
        %1171 = vmatprep.subr.mxu0 0.0
        %1172 = vmatpush1.msra.mxu0 0.0
        %1173 = vmatprep.subr.mxu0 0.0
        %1174 = vmatpush1.msra.mxu0 0.0
        %1175 = vmatprep.subr.mxu0 0.0
        %1176 = vmatpush1.msra.mxu0 0.0
        %1177 = vmatprep.subr.mxu0 0.0
        %v1178 = vand.u32 %v1147, 4294901760
        %1179 = vmatpush1.msra.mxu0 %v1178
        %1180 = vmatprep.subr.mxu0 0.0
        %v1181 = vand.u32 %v205, 4294901760
        %1182 = vmatpush1.msra.mxu0 %v1181
        %1183 = vmatprep.subr.mxu0 0.0
        %1184 = vmatpush2.msra.mxu0 0.0
        %1185 = vmatprep.subr.mxu0 0.0
        %1186 = vmatpush2.msra.mxu0 0.0
        %1187 = vmatprep.subr.mxu0 0.0
        %1188 = vmatpush2.msra.mxu0 0.0
        %1189 = vmatprep.subr.mxu0 0.0
        %1190 = vmatpush2.msra.mxu0 0.0
        %1191 = vmatprep.subr.mxu0 0.0
        %1192 = vmatpush2.msra.mxu0 0.0
        %1193 = vmatprep.subr.mxu0 0.0
        %1194 = vmatpush2.msra.mxu0 0.0
        %1195 = vmatprep.subr.mxu0 0.0
        %1196 = vmatpush2.msra.mxu0 0.0
        %1197 = vmatprep.subr.mxu0 0.0
        %1198 = vmatpush2.msra.mxu0 0.0
        %1199 = vmatprep.subr.mxu0 0.0
        %1200 = vmatpush2.msra.mxu0 0.0
        %1201 = vmatprep.subr.mxu0 0.0
        %1202 = vmatpush2.msra.mxu0 0.0
        %1203 = vmatprep.subr.mxu0 0.0
        %1204 = vmatpush2.msra.mxu0 0.0
        %1205 = vmatprep.subr.mxu0 0.0
        %1206 = vmatpush2.msra.mxu0 0.0
        %1207 = vmatprep.subr.mxu0 0.0
        %1208 = vmatpush2.msra.mxu0 0.0
        %1209 = vmatprep.subr.mxu0 0.0
        %1210 = vmatpush2.msra.mxu0 0.0
        %1211 = vmatprep.subr.mxu0 0.0
        %1212 = vmatpush2.msra.mxu0 0.0
        %1213 = vmatprep.subr.mxu0 0.0
        %1214 = vmatpush2.msra.mxu0 0.0
        %1215 = vmatprep.mubr.f32.mxu0 0.0
        %v1216 = vand.u32 %v219, 4294901760
        %v1217 = vsub.f32 %v219, %v1216
        %v1218 = vand.u32 %v1217, 4294901760
        %v1219 = vsub.f32 %v1217, %v1218
        %v1220 = vand.u32 %v1219, 4294901760
        %1221 = vmatmul.mubr.f32.gmra.mxu0 %v1220
        %v1222 = vpop.f32.mrf.mxu0
        %v1223 = vadd.f32 0.0, %v1222
        %v1224 = vpop.f32.mrf.mxu0
        %1225 = vdwg.mxu0
        %1226 = vmatprep.subr.mxu0 0.0
        %1227 = vmatpush1.msra.mxu0 0.0
        %1228 = vmatprep.subr.mxu0 0.0
        %1229 = vmatpush1.msra.mxu0 0.0
        %1230 = vmatprep.subr.mxu0 0.0
        %1231 = vmatpush1.msra.mxu0 0.0
        %1232 = vmatprep.subr.mxu0 0.0
        %1233 = vmatpush1.msra.mxu0 0.0
        %1234 = vmatprep.subr.mxu0 0.0
        %1235 = vmatpush1.msra.mxu0 0.0
        %1236 = vmatprep.subr.mxu0 0.0
        %1237 = vmatpush1.msra.mxu0 0.0
        %1238 = vmatprep.subr.mxu0 0.0
        %1239 = vmatpush1.msra.mxu0 0.0
        %1240 = vmatprep.subr.mxu0 0.0
        %1241 = vmatpush1.msra.mxu0 0.0
        %1242 = vmatprep.subr.mxu0 0.0
        %1243 = vmatpush1.msra.mxu0 0.0
        %1244 = vmatprep.subr.mxu0 0.0
        %1245 = vmatpush1.msra.mxu0 0.0
        %1246 = vmatprep.subr.mxu0 0.0
        %1247 = vmatpush1.msra.mxu0 0.0
        %1248 = vmatprep.subr.mxu0 0.0
        %1249 = vmatpush1.msra.mxu0 0.0
        %1250 = vmatprep.subr.mxu0 0.0
        %1251 = vmatpush1.msra.mxu0 0.0
        %1252 = vmatprep.subr.mxu0 0.0
        %1253 = vmatpush1.msra.mxu0 0.0
        %1254 = vmatprep.subr.mxu0 0.0
        %v1255 = vand.u32 %v1147, 4294901760
        %v1256 = vsub.f32 %v1147, %v1255
        %v1257 = vand.u32 %v1256, 4294901760
        %v1258 = vsub.f32 %v1256, %v1257
        %v1259 = vand.u32 %v1258, 4294901760
        %1260 = vmatpush1.msra.mxu0 %v1259
        %1261 = vmatprep.subr.mxu0 0.0
        %v1262 = vand.u32 %v205, 4294901760
        %v1263 = vsub.f32 %v205, %v1262
        %v1264 = vand.u32 %v1263, 4294901760
        %v1265 = vsub.f32 %v1263, %v1264
        %v1266 = vand.u32 %v1265, 4294901760
        %1267 = vmatpush1.msra.mxu0 %v1266
        %1268 = vmatprep.subr.mxu0 0.0
        %1269 = vmatpush2.msra.mxu0 0.0
        %1270 = vmatprep.subr.mxu0 0.0
        %1271 = vmatpush2.msra.mxu0 0.0
        %1272 = vmatprep.subr.mxu0 0.0
        %1273 = vmatpush2.msra.mxu0 0.0
        %1274 = vmatprep.subr.mxu0 0.0
        %1275 = vmatpush2.msra.mxu0 0.0
        %1276 = vmatprep.subr.mxu0 0.0
        %1277 = vmatpush2.msra.mxu0 0.0
        %1278 = vmatprep.subr.mxu0 0.0
        %1279 = vmatpush2.msra.mxu0 0.0
        %1280 = vmatprep.subr.mxu0 0.0
        %1281 = vmatpush2.msra.mxu0 0.0
        %1282 = vmatprep.subr.mxu0 0.0
        %1283 = vmatpush2.msra.mxu0 0.0
        %1284 = vmatprep.subr.mxu0 0.0
        %1285 = vmatpush2.msra.mxu0 0.0
        %1286 = vmatprep.subr.mxu0 0.0
        %1287 = vmatpush2.msra.mxu0 0.0
        %1288 = vmatprep.subr.mxu0 0.0
        %1289 = vmatpush2.msra.mxu0 0.0
        %1290 = vmatprep.subr.mxu0 0.0
        %1291 = vmatpush2.msra.mxu0 0.0
        %1292 = vmatprep.subr.mxu0 0.0
        %1293 = vmatpush2.msra.mxu0 0.0
        %1294 = vmatprep.subr.mxu0 0.0
        %1295 = vmatpush2.msra.mxu0 0.0
        %1296 = vmatprep.subr.mxu0 0.0
        %1297 = vmatpush2.msra.mxu0 0.0
        %1298 = vmatprep.subr.mxu0 0.0
        %1299 = vmatpush2.msra.mxu0 0.0
        %1300 = vmatprep.mubr.f32.mxu0 0.0
        %v1301 = vand.u32 %v219, 4294901760
        %1302 = vmatmul.mubr.f32.gmra.mxu0 %v1301
        %v1303 = vpop.f32.mrf.mxu0
        %v1304 = vadd.f32 %v1223, %v1303
        %v1305 = vpop.f32.mrf.mxu0
        %1306 = vdwg.mxu0
        %1307 = vmatprep.subr.mxu0 0.0
        %1308 = vmatpush1.msra.mxu0 0.0
        %1309 = vmatprep.subr.mxu0 0.0
        %1310 = vmatpush1.msra.mxu0 0.0
        %1311 = vmatprep.subr.mxu0 0.0
        %1312 = vmatpush1.msra.mxu0 0.0
        %1313 = vmatprep.subr.mxu0 0.0
        %1314 = vmatpush1.msra.mxu0 0.0
        %1315 = vmatprep.subr.mxu0 0.0
        %1316 = vmatpush1.msra.mxu0 0.0
        %1317 = vmatprep.subr.mxu0 0.0
        %1318 = vmatpush1.msra.mxu0 0.0
        %1319 = vmatprep.subr.mxu0 0.0
        %1320 = vmatpush1.msra.mxu0 0.0
        %1321 = vmatprep.subr.mxu0 0.0
        %1322 = vmatpush1.msra.mxu0 0.0
        %1323 = vmatprep.subr.mxu0 0.0
        %1324 = vmatpush1.msra.mxu0 0.0
        %1325 = vmatprep.subr.mxu0 0.0
        %1326 = vmatpush1.msra.mxu0 0.0
        %1327 = vmatprep.subr.mxu0 0.0
        %1328 = vmatpush1.msra.mxu0 0.0
        %1329 = vmatprep.subr.mxu0 0.0
        %1330 = vmatpush1.msra.mxu0 0.0
        %1331 = vmatprep.subr.mxu0 0.0
        %1332 = vmatpush1.msra.mxu0 0.0
        %1333 = vmatprep.subr.mxu0 0.0
        %1334 = vmatpush1.msra.mxu0 0.0
        %1335 = vmatprep.subr.mxu0 0.0
        %v1336 = vand.u32 %v1147, 4294901760
        %v1337 = vsub.f32 %v1147, %v1336
        %1338 = vmatpush1.msra.mxu0 %v1337
        %1339 = vmatprep.subr.mxu0 0.0
        %v1340 = vand.u32 %v205, 4294901760
        %v1341 = vsub.f32 %v205, %v1340
        %1342 = vmatpush1.msra.mxu0 %v1341
        %1343 = vmatprep.subr.mxu0 0.0
        %1344 = vmatpush2.msra.mxu0 0.0
        %1345 = vmatprep.subr.mxu0 0.0
        %1346 = vmatpush2.msra.mxu0 0.0
        %1347 = vmatprep.subr.mxu0 0.0
        %1348 = vmatpush2.msra.mxu0 0.0
        %1349 = vmatprep.subr.mxu0 0.0
        %1350 = vmatpush2.msra.mxu0 0.0
        %1351 = vmatprep.subr.mxu0 0.0
        %1352 = vmatpush2.msra.mxu0 0.0
        %1353 = vmatprep.subr.mxu0 0.0
        %1354 = vmatpush2.msra.mxu0 0.0
        %1355 = vmatprep.subr.mxu0 0.0
        %1356 = vmatpush2.msra.mxu0 0.0
        %1357 = vmatprep.subr.mxu0 0.0
        %1358 = vmatpush2.msra.mxu0 0.0
        %1359 = vmatprep.subr.mxu0 0.0
        %1360 = vmatpush2.msra.mxu0 0.0
        %1361 = vmatprep.subr.mxu0 0.0
        %1362 = vmatpush2.msra.mxu0 0.0
        %1363 = vmatprep.subr.mxu0 0.0
        %1364 = vmatpush2.msra.mxu0 0.0
        %1365 = vmatprep.subr.mxu0 0.0
        %1366 = vmatpush2.msra.mxu0 0.0
        %1367 = vmatprep.subr.mxu0 0.0
        %1368 = vmatpush2.msra.mxu0 0.0
        %1369 = vmatprep.subr.mxu0 0.0
        %1370 = vmatpush2.msra.mxu0 0.0
        %1371 = vmatprep.subr.mxu0 0.0
        %1372 = vmatpush2.msra.mxu0 0.0
        %1373 = vmatprep.subr.mxu0 0.0
        %1374 = vmatpush2.msra.mxu0 0.0
        %1375 = vmatprep.mubr.f32.mxu0 0.0
        %v1376 = vand.u32 %v219, 4294901760
        %v1377 = vsub.f32 %v219, %v1376
        %1378 = vmatmul.mubr.f32.gmra.mxu0 %v1377
        %v1379 = vpop.f32.mrf.mxu0
        %v1380 = vadd.f32 %v1304, %v1379
        %v1381 = vpop.f32.mrf.mxu0
        %1382 = vdwg.mxu0
        %1383 = vmatprep.subr.mxu0 0.0
        %1384 = vmatpush1.msra.mxu0 0.0
        %1385 = vmatprep.subr.mxu0 0.0
        %1386 = vmatpush1.msra.mxu0 0.0
        %1387 = vmatprep.subr.mxu0 0.0
        %1388 = vmatpush1.msra.mxu0 0.0
        %1389 = vmatprep.subr.mxu0 0.0
        %1390 = vmatpush1.msra.mxu0 0.0
        %1391 = vmatprep.subr.mxu0 0.0
        %1392 = vmatpush1.msra.mxu0 0.0
        %1393 = vmatprep.subr.mxu0 0.0
        %1394 = vmatpush1.msra.mxu0 0.0
        %1395 = vmatprep.subr.mxu0 0.0
        %1396 = vmatpush1.msra.mxu0 0.0
        %1397 = vmatprep.subr.mxu0 0.0
        %1398 = vmatpush1.msra.mxu0 0.0
        %1399 = vmatprep.subr.mxu0 0.0
        %1400 = vmatpush1.msra.mxu0 0.0
        %1401 = vmatprep.subr.mxu0 0.0
        %1402 = vmatpush1.msra.mxu0 0.0
        %1403 = vmatprep.subr.mxu0 0.0
        %1404 = vmatpush1.msra.mxu0 0.0
        %1405 = vmatprep.subr.mxu0 0.0
        %1406 = vmatpush1.msra.mxu0 0.0
        %1407 = vmatprep.subr.mxu0 0.0
        %1408 = vmatpush1.msra.mxu0 0.0
        %1409 = vmatprep.subr.mxu0 0.0
        %1410 = vmatpush1.msra.mxu0 0.0
        %1411 = vmatprep.subr.mxu0 0.0
        %v1412 = vand.u32 %v1147, 4294901760
        %1413 = vmatpush1.msra.mxu0 %v1412
        %1414 = vmatprep.subr.mxu0 0.0
        %v1415 = vand.u32 %v205, 4294901760
        %1416 = vmatpush1.msra.mxu0 %v1415
        %1417 = vmatprep.subr.mxu0 0.0
        %1418 = vmatpush2.msra.mxu0 0.0
        %1419 = vmatprep.subr.mxu0 0.0
        %1420 = vmatpush2.msra.mxu0 0.0
        %1421 = vmatprep.subr.mxu0 0.0
        %1422 = vmatpush2.msra.mxu0 0.0
        %1423 = vmatprep.subr.mxu0 0.0
        %1424 = vmatpush2.msra.mxu0 0.0
        %1425 = vmatprep.subr.mxu0 0.0
        %1426 = vmatpush2.msra.mxu0 0.0
        %1427 = vmatprep.subr.mxu0 0.0
        %1428 = vmatpush2.msra.mxu0 0.0
        %1429 = vmatprep.subr.mxu0 0.0
        %1430 = vmatpush2.msra.mxu0 0.0
        %1431 = vmatprep.subr.mxu0 0.0
        %1432 = vmatpush2.msra.mxu0 0.0
        %1433 = vmatprep.subr.mxu0 0.0
        %1434 = vmatpush2.msra.mxu0 0.0
        %1435 = vmatprep.subr.mxu0 0.0
        %1436 = vmatpush2.msra.mxu0 0.0
        %1437 = vmatprep.subr.mxu0 0.0
        %1438 = vmatpush2.msra.mxu0 0.0
        %1439 = vmatprep.subr.mxu0 0.0
        %1440 = vmatpush2.msra.mxu0 0.0
        %1441 = vmatprep.subr.mxu0 0.0
        %1442 = vmatpush2.msra.mxu0 0.0
        %1443 = vmatprep.subr.mxu0 0.0
        %1444 = vmatpush2.msra.mxu0 0.0
        %1445 = vmatprep.subr.mxu0 0.0
        %1446 = vmatpush2.msra.mxu0 0.0
        %1447 = vmatprep.subr.mxu0 0.0
        %1448 = vmatpush2.msra.mxu0 0.0
        %1449 = vmatprep.mubr.f32.mxu0 0.0
        %v1450 = vand.u32 %v219, 4294901760
        %v1451 = vsub.f32 %v219, %v1450
        %v1452 = vand.u32 %v1451, 4294901760
        %1453 = vmatmul.mubr.f32.gmra.mxu0 %v1452
        %v1454 = vpop.f32.mrf.mxu0
        %v1455 = vadd.f32 %v1380, %v1454
        %v1456 = vpop.f32.mrf.mxu0
        %1457 = vdwg.mxu0
        %1458 = vmatprep.subr.mxu0 0.0
        %1459 = vmatpush1.msra.mxu0 0.0
        %1460 = vmatprep.subr.mxu0 0.0
        %1461 = vmatpush1.msra.mxu0 0.0
        %1462 = vmatprep.subr.mxu0 0.0
        %1463 = vmatpush1.msra.mxu0 0.0
        %1464 = vmatprep.subr.mxu0 0.0
        %1465 = vmatpush1.msra.mxu0 0.0
        %1466 = vmatprep.subr.mxu0 0.0
        %1467 = vmatpush1.msra.mxu0 0.0
        %1468 = vmatprep.subr.mxu0 0.0
        %1469 = vmatpush1.msra.mxu0 0.0
        %1470 = vmatprep.subr.mxu0 0.0
        %1471 = vmatpush1.msra.mxu0 0.0
        %1472 = vmatprep.subr.mxu0 0.0
        %1473 = vmatpush1.msra.mxu0 0.0
        %1474 = vmatprep.subr.mxu0 0.0
        %1475 = vmatpush1.msra.mxu0 0.0
        %1476 = vmatprep.subr.mxu0 0.0
        %1477 = vmatpush1.msra.mxu0 0.0
        %1478 = vmatprep.subr.mxu0 0.0
        %1479 = vmatpush1.msra.mxu0 0.0
        %1480 = vmatprep.subr.mxu0 0.0
        %1481 = vmatpush1.msra.mxu0 0.0
        %1482 = vmatprep.subr.mxu0 0.0
        %1483 = vmatpush1.msra.mxu0 0.0
        %1484 = vmatprep.subr.mxu0 0.0
        %1485 = vmatpush1.msra.mxu0 0.0
        %1486 = vmatprep.subr.mxu0 0.0
        %v1487 = vand.u32 %v1147, 4294901760
        %v1488 = vsub.f32 %v1147, %v1487
        %v1489 = vand.u32 %v1488, 4294901760
        %1490 = vmatpush1.msra.mxu0 %v1489
        %1491 = vmatprep.subr.mxu0 0.0
        %v1492 = vand.u32 %v205, 4294901760
        %v1493 = vsub.f32 %v205, %v1492
        %v1494 = vand.u32 %v1493, 4294901760
        %1495 = vmatpush1.msra.mxu0 %v1494
        %1496 = vmatprep.subr.mxu0 0.0
        %1497 = vmatpush2.msra.mxu0 0.0
        %1498 = vmatprep.subr.mxu0 0.0
        %1499 = vmatpush2.msra.mxu0 0.0
        %1500 = vmatprep.subr.mxu0 0.0
        %1501 = vmatpush2.msra.mxu0 0.0
        %1502 = vmatprep.subr.mxu0 0.0
        %1503 = vmatpush2.msra.mxu0 0.0
        %1504 = vmatprep.subr.mxu0 0.0
        %1505 = vmatpush2.msra.mxu0 0.0
        %1506 = vmatprep.subr.mxu0 0.0
        %1507 = vmatpush2.msra.mxu0 0.0
        %1508 = vmatprep.subr.mxu0 0.0
        %1509 = vmatpush2.msra.mxu0 0.0
        %1510 = vmatprep.subr.mxu0 0.0
        %1511 = vmatpush2.msra.mxu0 0.0
        %1512 = vmatprep.subr.mxu0 0.0
        %1513 = vmatpush2.msra.mxu0 0.0
        %1514 = vmatprep.subr.mxu0 0.0
        %1515 = vmatpush2.msra.mxu0 0.0
        %1516 = vmatprep.subr.mxu0 0.0
        %1517 = vmatpush2.msra.mxu0 0.0
        %1518 = vmatprep.subr.mxu0 0.0
        %1519 = vmatpush2.msra.mxu0 0.0
        %1520 = vmatprep.subr.mxu0 0.0
        %1521 = vmatpush2.msra.mxu0 0.0
        %1522 = vmatprep.subr.mxu0 0.0
        %1523 = vmatpush2.msra.mxu0 0.0
        %1524 = vmatprep.subr.mxu0 0.0
        %1525 = vmatpush2.msra.mxu0 0.0
        %1526 = vmatprep.subr.mxu0 0.0
        %1527 = vmatpush2.msra.mxu0 0.0
        %1528 = vmatprep.mubr.f32.mxu0 0.0
        %v1529 = vand.u32 %v219, 4294901760
        %1530 = vmatmul.mubr.f32.gmra.mxu0 %v1529
        %v1531 = vpop.f32.mrf.mxu0
        %v1532 = vadd.f32 %v1455, %v1531
        %v1533 = vpop.f32.mrf.mxu0
        %1534 = vdwg.mxu0
        %1535 = vmatprep.subr.mxu0 0.0
        %1536 = vmatpush1.msra.mxu0 0.0
        %1537 = vmatprep.subr.mxu0 0.0
        %1538 = vmatpush1.msra.mxu0 0.0
        %1539 = vmatprep.subr.mxu0 0.0
        %1540 = vmatpush1.msra.mxu0 0.0
        %1541 = vmatprep.subr.mxu0 0.0
        %1542 = vmatpush1.msra.mxu0 0.0
        %1543 = vmatprep.subr.mxu0 0.0
        %1544 = vmatpush1.msra.mxu0 0.0
        %1545 = vmatprep.subr.mxu0 0.0
        %1546 = vmatpush1.msra.mxu0 0.0
        %1547 = vmatprep.subr.mxu0 0.0
        %1548 = vmatpush1.msra.mxu0 0.0
        %1549 = vmatprep.subr.mxu0 0.0
        %1550 = vmatpush1.msra.mxu0 0.0
        %1551 = vmatprep.subr.mxu0 0.0
        %1552 = vmatpush1.msra.mxu0 0.0
        %1553 = vmatprep.subr.mxu0 0.0
        %1554 = vmatpush1.msra.mxu0 0.0
        %1555 = vmatprep.subr.mxu0 0.0
        %1556 = vmatpush1.msra.mxu0 0.0
        %1557 = vmatprep.subr.mxu0 0.0
        %1558 = vmatpush1.msra.mxu0 0.0
        %1559 = vmatprep.subr.mxu0 0.0
        %1560 = vmatpush1.msra.mxu0 0.0
        %1561 = vmatprep.subr.mxu0 0.0
        %1562 = vmatpush1.msra.mxu0 0.0
        %1563 = vmatprep.subr.mxu0 0.0
        %v1564 = vand.u32 %v1147, 4294901760
        %1565 = vmatpush1.msra.mxu0 %v1564
        %1566 = vmatprep.subr.mxu0 0.0
        %v1567 = vand.u32 %v205, 4294901760
        %1568 = vmatpush1.msra.mxu0 %v1567
        %1569 = vmatprep.subr.mxu0 0.0
        %1570 = vmatpush2.msra.mxu0 0.0
        %1571 = vmatprep.subr.mxu0 0.0
        %1572 = vmatpush2.msra.mxu0 0.0
        %1573 = vmatprep.subr.mxu0 0.0
        %1574 = vmatpush2.msra.mxu0 0.0
        %1575 = vmatprep.subr.mxu0 0.0
        %1576 = vmatpush2.msra.mxu0 0.0
        %1577 = vmatprep.subr.mxu0 0.0
        %1578 = vmatpush2.msra.mxu0 0.0
        %1579 = vmatprep.subr.mxu0 0.0
        %1580 = vmatpush2.msra.mxu0 0.0
        %1581 = vmatprep.subr.mxu0 0.0
        %1582 = vmatpush2.msra.mxu0 0.0
        %1583 = vmatprep.subr.mxu0 0.0
        %1584 = vmatpush2.msra.mxu0 0.0
        %1585 = vmatprep.subr.mxu0 0.0
        %1586 = vmatpush2.msra.mxu0 0.0
        %1587 = vmatprep.subr.mxu0 0.0
        %1588 = vmatpush2.msra.mxu0 0.0
        %1589 = vmatprep.subr.mxu0 0.0
        %1590 = vmatpush2.msra.mxu0 0.0
        %1591 = vmatprep.subr.mxu0 0.0
        %1592 = vmatpush2.msra.mxu0 0.0
        %1593 = vmatprep.subr.mxu0 0.0
        %1594 = vmatpush2.msra.mxu0 0.0
        %1595 = vmatprep.subr.mxu0 0.0
        %1596 = vmatpush2.msra.mxu0 0.0
        %1597 = vmatprep.subr.mxu0 0.0
        %1598 = vmatpush2.msra.mxu0 0.0
        %1599 = vmatprep.subr.mxu0 0.0
        %1600 = vmatpush2.msra.mxu0 0.0
        %1601 = vmatprep.mubr.f32.mxu0 0.0
        %v1602 = vand.u32 %v219, 4294901760
        %1603 = vmatmul.mubr.f32.gmra.mxu0 %v1602
        %v1604 = vpop.f32.mrf.mxu0
        %v1605 = vadd.f32 %v1532, %v1604
        %v1606 = vpop.f32.mrf.mxu0
        %1607 = vdwg.mxu0
        %v1609 = vsel %vm221, %v208, 0
        %1611 = vmatprep.subr.mxu0 0.0
        %1612 = vmatpush1.msra.mxu0 0.0
        %1613 = vmatprep.subr.mxu0 0.0
        %1614 = vmatpush1.msra.mxu0 0.0
        %1615 = vmatprep.subr.mxu0 0.0
        %1616 = vmatpush1.msra.mxu0 0.0
        %1617 = vmatprep.subr.mxu0 0.0
        %1618 = vmatpush1.msra.mxu0 0.0
        %1619 = vmatprep.subr.mxu0 0.0
        %1620 = vmatpush1.msra.mxu0 0.0
        %1621 = vmatprep.subr.mxu0 0.0
        %1622 = vmatpush1.msra.mxu0 0.0
        %1623 = vmatprep.subr.mxu0 0.0
        %1624 = vmatpush1.msra.mxu0 0.0
        %1625 = vmatprep.subr.mxu0 0.0
        %1626 = vmatpush1.msra.mxu0 0.0
        %1627 = vmatprep.subr.mxu0 0.0
        %1628 = vmatpush1.msra.mxu0 0.0
        %1629 = vmatprep.subr.mxu0 0.0
        %1630 = vmatpush1.msra.mxu0 0.0
        %1631 = vmatprep.subr.mxu0 0.0
        %1632 = vmatpush1.msra.mxu0 0.0
        %1633 = vmatprep.subr.mxu0 0.0
        %1634 = vmatpush1.msra.mxu0 0.0
        %1635 = vmatprep.subr.mxu0 0.0
        %1636 = vmatpush1.msra.mxu0 0.0
        %1637 = vmatprep.subr.mxu0 0.0
        %1638 = vmatpush1.msra.mxu0 0.0
        %1639 = vmatprep.subr.mxu0 0.0
        %v1640 = vand.u32 %v1609, 4294901760
        %1641 = vmatpush1.msra.mxu0 %v1640
        %1642 = vmatprep.subr.mxu0 0.0
        %v1643 = vand.u32 %v207, 4294901760
        %1644 = vmatpush1.msra.mxu0 %v1643
        %1645 = vmatprep.subr.mxu0 0.0
        %1646 = vmatpush2.msra.mxu0 0.0
        %1647 = vmatprep.subr.mxu0 0.0
        %1648 = vmatpush2.msra.mxu0 0.0
        %1649 = vmatprep.subr.mxu0 0.0
        %1650 = vmatpush2.msra.mxu0 0.0
        %1651 = vmatprep.subr.mxu0 0.0
        %1652 = vmatpush2.msra.mxu0 0.0
        %1653 = vmatprep.subr.mxu0 0.0
        %1654 = vmatpush2.msra.mxu0 0.0
        %1655 = vmatprep.subr.mxu0 0.0
        %1656 = vmatpush2.msra.mxu0 0.0
        %1657 = vmatprep.subr.mxu0 0.0
        %1658 = vmatpush2.msra.mxu0 0.0
        %1659 = vmatprep.subr.mxu0 0.0
        %1660 = vmatpush2.msra.mxu0 0.0
        %1661 = vmatprep.subr.mxu0 0.0
        %1662 = vmatpush2.msra.mxu0 0.0
        %1663 = vmatprep.subr.mxu0 0.0
        %1664 = vmatpush2.msra.mxu0 0.0
        %1665 = vmatprep.subr.mxu0 0.0
        %1666 = vmatpush2.msra.mxu0 0.0
        %1667 = vmatprep.subr.mxu0 0.0
        %1668 = vmatpush2.msra.mxu0 0.0
        %1669 = vmatprep.subr.mxu0 0.0
        %1670 = vmatpush2.msra.mxu0 0.0
        %1671 = vmatprep.subr.mxu0 0.0
        %1672 = vmatpush2.msra.mxu0 0.0
        %1673 = vmatprep.subr.mxu0 0.0
        %1674 = vmatpush2.msra.mxu0 0.0
        %1675 = vmatprep.subr.mxu0 0.0
        %1676 = vmatpush2.msra.mxu0 0.0
        %1677 = vmatprep.mubr.f32.mxu0 0.0
        %v1678 = vand.u32 %v219, 4294901760
        %v1679 = vsub.f32 %v219, %v1678
        %v1680 = vand.u32 %v1679, 4294901760
        %v1681 = vsub.f32 %v1679, %v1680
        %v1682 = vand.u32 %v1681, 4294901760
        %1683 = vmatmul.mubr.f32.gmra.mxu0 %v1682
        %v1684 = vpop.f32.mrf.mxu0
        %v1685 = vadd.f32 0.0, %v1684
        %v1686 = vpop.f32.mrf.mxu0
        %1687 = vdwg.mxu0
        %1688 = vmatprep.subr.mxu0 0.0
        %1689 = vmatpush1.msra.mxu0 0.0
        %1690 = vmatprep.subr.mxu0 0.0
        %1691 = vmatpush1.msra.mxu0 0.0
        %1692 = vmatprep.subr.mxu0 0.0
        %1693 = vmatpush1.msra.mxu0 0.0
        %1694 = vmatprep.subr.mxu0 0.0
        %1695 = vmatpush1.msra.mxu0 0.0
        %1696 = vmatprep.subr.mxu0 0.0
        %1697 = vmatpush1.msra.mxu0 0.0
        %1698 = vmatprep.subr.mxu0 0.0
        %1699 = vmatpush1.msra.mxu0 0.0
        %1700 = vmatprep.subr.mxu0 0.0
        %1701 = vmatpush1.msra.mxu0 0.0
        %1702 = vmatprep.subr.mxu0 0.0
        %1703 = vmatpush1.msra.mxu0 0.0
        %1704 = vmatprep.subr.mxu0 0.0
        %1705 = vmatpush1.msra.mxu0 0.0
        %1706 = vmatprep.subr.mxu0 0.0
        %1707 = vmatpush1.msra.mxu0 0.0
        %1708 = vmatprep.subr.mxu0 0.0
        %1709 = vmatpush1.msra.mxu0 0.0
        %1710 = vmatprep.subr.mxu0 0.0
        %1711 = vmatpush1.msra.mxu0 0.0
        %1712 = vmatprep.subr.mxu0 0.0
        %1713 = vmatpush1.msra.mxu0 0.0
        %1714 = vmatprep.subr.mxu0 0.0
        %1715 = vmatpush1.msra.mxu0 0.0
        %1716 = vmatprep.subr.mxu0 0.0
        %v1717 = vand.u32 %v1609, 4294901760
        %v1718 = vsub.f32 %v1609, %v1717
        %v1719 = vand.u32 %v1718, 4294901760
        %v1720 = vsub.f32 %v1718, %v1719
        %v1721 = vand.u32 %v1720, 4294901760
        %1722 = vmatpush1.msra.mxu0 %v1721
        %1723 = vmatprep.subr.mxu0 0.0
        %v1724 = vand.u32 %v207, 4294901760
        %v1725 = vsub.f32 %v207, %v1724
        %v1726 = vand.u32 %v1725, 4294901760
        %v1727 = vsub.f32 %v1725, %v1726
        %v1728 = vand.u32 %v1727, 4294901760
        %1729 = vmatpush1.msra.mxu0 %v1728
        %1730 = vmatprep.subr.mxu0 0.0
        %1731 = vmatpush2.msra.mxu0 0.0
        %1732 = vmatprep.subr.mxu0 0.0
        %1733 = vmatpush2.msra.mxu0 0.0
        %1734 = vmatprep.subr.mxu0 0.0
        %1735 = vmatpush2.msra.mxu0 0.0
        %1736 = vmatprep.subr.mxu0 0.0
        %1737 = vmatpush2.msra.mxu0 0.0
        %1738 = vmatprep.subr.mxu0 0.0
        %1739 = vmatpush2.msra.mxu0 0.0
        %1740 = vmatprep.subr.mxu0 0.0
        %1741 = vmatpush2.msra.mxu0 0.0
        %1742 = vmatprep.subr.mxu0 0.0
        %1743 = vmatpush2.msra.mxu0 0.0
        %1744 = vmatprep.subr.mxu0 0.0
        %1745 = vmatpush2.msra.mxu0 0.0
        %1746 = vmatprep.subr.mxu0 0.0
        %1747 = vmatpush2.msra.mxu0 0.0
        %1748 = vmatprep.subr.mxu0 0.0
        %1749 = vmatpush2.msra.mxu0 0.0
        %1750 = vmatprep.subr.mxu0 0.0
        %1751 = vmatpush2.msra.mxu0 0.0
        %1752 = vmatprep.subr.mxu0 0.0
        %1753 = vmatpush2.msra.mxu0 0.0
        %1754 = vmatprep.subr.mxu0 0.0
        %1755 = vmatpush2.msra.mxu0 0.0
        %1756 = vmatprep.subr.mxu0 0.0
        %1757 = vmatpush2.msra.mxu0 0.0
        %1758 = vmatprep.subr.mxu0 0.0
        %1759 = vmatpush2.msra.mxu0 0.0
        %1760 = vmatprep.subr.mxu0 0.0
        %1761 = vmatpush2.msra.mxu0 0.0
        %1762 = vmatprep.mubr.f32.mxu0 0.0
        %v1763 = vand.u32 %v219, 4294901760
        %1764 = vmatmul.mubr.f32.gmra.mxu0 %v1763
        %v1765 = vpop.f32.mrf.mxu0
        %v1766 = vadd.f32 %v1685, %v1765
        %v1767 = vpop.f32.mrf.mxu0
        %1768 = vdwg.mxu0
        %1769 = vmatprep.subr.mxu0 0.0
        %1770 = vmatpush1.msra.mxu0 0.0
        %1771 = vmatprep.subr.mxu0 0.0
        %1772 = vmatpush1.msra.mxu0 0.0
        %1773 = vmatprep.subr.mxu0 0.0
        %1774 = vmatpush1.msra.mxu0 0.0
        %1775 = vmatprep.subr.mxu0 0.0
        %1776 = vmatpush1.msra.mxu0 0.0
        %1777 = vmatprep.subr.mxu0 0.0
        %1778 = vmatpush1.msra.mxu0 0.0
        %1779 = vmatprep.subr.mxu0 0.0
        %1780 = vmatpush1.msra.mxu0 0.0
        %1781 = vmatprep.subr.mxu0 0.0
        %1782 = vmatpush1.msra.mxu0 0.0
        %1783 = vmatprep.subr.mxu0 0.0
        %1784 = vmatpush1.msra.mxu0 0.0
        %1785 = vmatprep.subr.mxu0 0.0
        %1786 = vmatpush1.msra.mxu0 0.0
        %1787 = vmatprep.subr.mxu0 0.0
        %1788 = vmatpush1.msra.mxu0 0.0
        %1789 = vmatprep.subr.mxu0 0.0
        %1790 = vmatpush1.msra.mxu0 0.0
        %1791 = vmatprep.subr.mxu0 0.0
        %1792 = vmatpush1.msra.mxu0 0.0
        %1793 = vmatprep.subr.mxu0 0.0
        %1794 = vmatpush1.msra.mxu0 0.0
        %1795 = vmatprep.subr.mxu0 0.0
        %1796 = vmatpush1.msra.mxu0 0.0
        %1797 = vmatprep.subr.mxu0 0.0
        %v1798 = vand.u32 %v1609, 4294901760
        %v1799 = vsub.f32 %v1609, %v1798
        %1800 = vmatpush1.msra.mxu0 %v1799
        %1801 = vmatprep.subr.mxu0 0.0
        %v1802 = vand.u32 %v207, 4294901760
        %v1803 = vsub.f32 %v207, %v1802
        %1804 = vmatpush1.msra.mxu0 %v1803
        %1805 = vmatprep.subr.mxu0 0.0
        %1806 = vmatpush2.msra.mxu0 0.0
        %1807 = vmatprep.subr.mxu0 0.0
        %1808 = vmatpush2.msra.mxu0 0.0
        %1809 = vmatprep.subr.mxu0 0.0
        %1810 = vmatpush2.msra.mxu0 0.0
        %1811 = vmatprep.subr.mxu0 0.0
        %1812 = vmatpush2.msra.mxu0 0.0
        %1813 = vmatprep.subr.mxu0 0.0
        %1814 = vmatpush2.msra.mxu0 0.0
        %1815 = vmatprep.subr.mxu0 0.0
        %1816 = vmatpush2.msra.mxu0 0.0
        %1817 = vmatprep.subr.mxu0 0.0
        %1818 = vmatpush2.msra.mxu0 0.0
        %1819 = vmatprep.subr.mxu0 0.0
        %1820 = vmatpush2.msra.mxu0 0.0
        %1821 = vmatprep.subr.mxu0 0.0
        %1822 = vmatpush2.msra.mxu0 0.0
        %1823 = vmatprep.subr.mxu0 0.0
        %1824 = vmatpush2.msra.mxu0 0.0
        %1825 = vmatprep.subr.mxu0 0.0
        %1826 = vmatpush2.msra.mxu0 0.0
        %1827 = vmatprep.subr.mxu0 0.0
        %1828 = vmatpush2.msra.mxu0 0.0
        %1829 = vmatprep.subr.mxu0 0.0
        %1830 = vmatpush2.msra.mxu0 0.0
        %1831 = vmatprep.subr.mxu0 0.0
        %1832 = vmatpush2.msra.mxu0 0.0
        %1833 = vmatprep.subr.mxu0 0.0
        %1834 = vmatpush2.msra.mxu0 0.0
        %1835 = vmatprep.subr.mxu0 0.0
        %1836 = vmatpush2.msra.mxu0 0.0
        %1837 = vmatprep.mubr.f32.mxu0 0.0
        %v1838 = vand.u32 %v219, 4294901760
        %v1839 = vsub.f32 %v219, %v1838
        %1840 = vmatmul.mubr.f32.gmra.mxu0 %v1839
        %v1841 = vpop.f32.mrf.mxu0
        %v1842 = vadd.f32 %v1766, %v1841
        %v1843 = vpop.f32.mrf.mxu0
        %1844 = vdwg.mxu0
        %1845 = vmatprep.subr.mxu0 0.0
        %1846 = vmatpush1.msra.mxu0 0.0
        %1847 = vmatprep.subr.mxu0 0.0
        %1848 = vmatpush1.msra.mxu0 0.0
        %1849 = vmatprep.subr.mxu0 0.0
        %1850 = vmatpush1.msra.mxu0 0.0
        %1851 = vmatprep.subr.mxu0 0.0
        %1852 = vmatpush1.msra.mxu0 0.0
        %1853 = vmatprep.subr.mxu0 0.0
        %1854 = vmatpush1.msra.mxu0 0.0
        %1855 = vmatprep.subr.mxu0 0.0
        %1856 = vmatpush1.msra.mxu0 0.0
        %1857 = vmatprep.subr.mxu0 0.0
        %1858 = vmatpush1.msra.mxu0 0.0
        %1859 = vmatprep.subr.mxu0 0.0
        %1860 = vmatpush1.msra.mxu0 0.0
        %1861 = vmatprep.subr.mxu0 0.0
        %1862 = vmatpush1.msra.mxu0 0.0
        %1863 = vmatprep.subr.mxu0 0.0
        %1864 = vmatpush1.msra.mxu0 0.0
        %1865 = vmatprep.subr.mxu0 0.0
        %1866 = vmatpush1.msra.mxu0 0.0
        %1867 = vmatprep.subr.mxu0 0.0
        %1868 = vmatpush1.msra.mxu0 0.0
        %1869 = vmatprep.subr.mxu0 0.0
        %1870 = vmatpush1.msra.mxu0 0.0
        %1871 = vmatprep.subr.mxu0 0.0
        %1872 = vmatpush1.msra.mxu0 0.0
        %1873 = vmatprep.subr.mxu0 0.0
        %v1874 = vand.u32 %v1609, 4294901760
        %1875 = vmatpush1.msra.mxu0 %v1874
        %1876 = vmatprep.subr.mxu0 0.0
        %v1877 = vand.u32 %v207, 4294901760
        %1878 = vmatpush1.msra.mxu0 %v1877
        %1879 = vmatprep.subr.mxu0 0.0
        %1880 = vmatpush2.msra.mxu0 0.0
        %1881 = vmatprep.subr.mxu0 0.0
        %1882 = vmatpush2.msra.mxu0 0.0
        %1883 = vmatprep.subr.mxu0 0.0
        %1884 = vmatpush2.msra.mxu0 0.0
        %1885 = vmatprep.subr.mxu0 0.0
        %1886 = vmatpush2.msra.mxu0 0.0
        %1887 = vmatprep.subr.mxu0 0.0
        %1888 = vmatpush2.msra.mxu0 0.0
        %1889 = vmatprep.subr.mxu0 0.0
        %1890 = vmatpush2.msra.mxu0 0.0
        %1891 = vmatprep.subr.mxu0 0.0
        %1892 = vmatpush2.msra.mxu0 0.0
        %1893 = vmatprep.subr.mxu0 0.0
        %1894 = vmatpush2.msra.mxu0 0.0
        %1895 = vmatprep.subr.mxu0 0.0
        %1896 = vmatpush2.msra.mxu0 0.0
        %1897 = vmatprep.subr.mxu0 0.0
        %1898 = vmatpush2.msra.mxu0 0.0
        %1899 = vmatprep.subr.mxu0 0.0
        %1900 = vmatpush2.msra.mxu0 0.0
        %1901 = vmatprep.subr.mxu0 0.0
        %1902 = vmatpush2.msra.mxu0 0.0
        %1903 = vmatprep.subr.mxu0 0.0
        %1904 = vmatpush2.msra.mxu0 0.0
        %1905 = vmatprep.subr.mxu0 0.0
        %1906 = vmatpush2.msra.mxu0 0.0
        %1907 = vmatprep.subr.mxu0 0.0
        %1908 = vmatpush2.msra.mxu0 0.0
        %1909 = vmatprep.subr.mxu0 0.0
        %1910 = vmatpush2.msra.mxu0 0.0
        %1911 = vmatprep.mubr.f32.mxu0 0.0
        %v1912 = vand.u32 %v219, 4294901760
        %v1913 = vsub.f32 %v219, %v1912
        %v1914 = vand.u32 %v1913, 4294901760
        %1915 = vmatmul.mubr.f32.gmra.mxu0 %v1914
        %v1916 = vpop.f32.mrf.mxu0
        %v1917 = vadd.f32 %v1842, %v1916
        %v1918 = vpop.f32.mrf.mxu0
        %1919 = vdwg.mxu0
        %1920 = vmatprep.subr.mxu0 0.0
        %1921 = vmatpush1.msra.mxu0 0.0
        %1922 = vmatprep.subr.mxu0 0.0
        %1923 = vmatpush1.msra.mxu0 0.0
        %1924 = vmatprep.subr.mxu0 0.0
        %1925 = vmatpush1.msra.mxu0 0.0
        %1926 = vmatprep.subr.mxu0 0.0
        %1927 = vmatpush1.msra.mxu0 0.0
        %1928 = vmatprep.subr.mxu0 0.0
        %1929 = vmatpush1.msra.mxu0 0.0
        %1930 = vmatprep.subr.mxu0 0.0
        %1931 = vmatpush1.msra.mxu0 0.0
        %1932 = vmatprep.subr.mxu0 0.0
        %1933 = vmatpush1.msra.mxu0 0.0
        %1934 = vmatprep.subr.mxu0 0.0
        %1935 = vmatpush1.msra.mxu0 0.0
        %1936 = vmatprep.subr.mxu0 0.0
        %1937 = vmatpush1.msra.mxu0 0.0
        %1938 = vmatprep.subr.mxu0 0.0
        %1939 = vmatpush1.msra.mxu0 0.0
        %1940 = vmatprep.subr.mxu0 0.0
        %1941 = vmatpush1.msra.mxu0 0.0
        %1942 = vmatprep.subr.mxu0 0.0
        %1943 = vmatpush1.msra.mxu0 0.0
        %1944 = vmatprep.subr.mxu0 0.0
        %1945 = vmatpush1.msra.mxu0 0.0
        %1946 = vmatprep.subr.mxu0 0.0
        %1947 = vmatpush1.msra.mxu0 0.0
        %1948 = vmatprep.subr.mxu0 0.0
        %v1949 = vand.u32 %v1609, 4294901760
        %v1950 = vsub.f32 %v1609, %v1949
        %v1951 = vand.u32 %v1950, 4294901760
        %1952 = vmatpush1.msra.mxu0 %v1951
        %1953 = vmatprep.subr.mxu0 0.0
        %v1954 = vand.u32 %v207, 4294901760
        %v1955 = vsub.f32 %v207, %v1954
        %v1956 = vand.u32 %v1955, 4294901760
        %1957 = vmatpush1.msra.mxu0 %v1956
        %1958 = vmatprep.subr.mxu0 0.0
        %1959 = vmatpush2.msra.mxu0 0.0
        %1960 = vmatprep.subr.mxu0 0.0
        %1961 = vmatpush2.msra.mxu0 0.0
        %1962 = vmatprep.subr.mxu0 0.0
        %1963 = vmatpush2.msra.mxu0 0.0
        %1964 = vmatprep.subr.mxu0 0.0
        %1965 = vmatpush2.msra.mxu0 0.0
        %1966 = vmatprep.subr.mxu0 0.0
        %1967 = vmatpush2.msra.mxu0 0.0
        %1968 = vmatprep.subr.mxu0 0.0
        %1969 = vmatpush2.msra.mxu0 0.0
        %1970 = vmatprep.subr.mxu0 0.0
        %1971 = vmatpush2.msra.mxu0 0.0
        %1972 = vmatprep.subr.mxu0 0.0
        %1973 = vmatpush2.msra.mxu0 0.0
        %1974 = vmatprep.subr.mxu0 0.0
        %1975 = vmatpush2.msra.mxu0 0.0
        %1976 = vmatprep.subr.mxu0 0.0
        %1977 = vmatpush2.msra.mxu0 0.0
        %1978 = vmatprep.subr.mxu0 0.0
        %1979 = vmatpush2.msra.mxu0 0.0
        %1980 = vmatprep.subr.mxu0 0.0
        %1981 = vmatpush2.msra.mxu0 0.0
        %1982 = vmatprep.subr.mxu0 0.0
        %1983 = vmatpush2.msra.mxu0 0.0
        %1984 = vmatprep.subr.mxu0 0.0
        %1985 = vmatpush2.msra.mxu0 0.0
        %1986 = vmatprep.subr.mxu0 0.0
        %1987 = vmatpush2.msra.mxu0 0.0
        %1988 = vmatprep.subr.mxu0 0.0
        %1989 = vmatpush2.msra.mxu0 0.0
        %1990 = vmatprep.mubr.f32.mxu0 0.0
        %v1991 = vand.u32 %v219, 4294901760
        %1992 = vmatmul.mubr.f32.gmra.mxu0 %v1991
        %v1993 = vpop.f32.mrf.mxu0
        %v1994 = vadd.f32 %v1917, %v1993
        %v1995 = vpop.f32.mrf.mxu0
        %1996 = vdwg.mxu0
        %1997 = vmatprep.subr.mxu0 0.0
        %1998 = vmatpush1.msra.mxu0 0.0
        %1999 = vmatprep.subr.mxu0 0.0
        %2000 = vmatpush1.msra.mxu0 0.0
        %2001 = vmatprep.subr.mxu0 0.0
        %2002 = vmatpush1.msra.mxu0 0.0
        %2003 = vmatprep.subr.mxu0 0.0
        %2004 = vmatpush1.msra.mxu0 0.0
        %2005 = vmatprep.subr.mxu0 0.0
        %2006 = vmatpush1.msra.mxu0 0.0
        %2007 = vmatprep.subr.mxu0 0.0
        %2008 = vmatpush1.msra.mxu0 0.0
        %2009 = vmatprep.subr.mxu0 0.0
        %2010 = vmatpush1.msra.mxu0 0.0
        %2011 = vmatprep.subr.mxu0 0.0
        %2012 = vmatpush1.msra.mxu0 0.0
        %2013 = vmatprep.subr.mxu0 0.0
        %2014 = vmatpush1.msra.mxu0 0.0
        %2015 = vmatprep.subr.mxu0 0.0
        %2016 = vmatpush1.msra.mxu0 0.0
        %2017 = vmatprep.subr.mxu0 0.0
        %2018 = vmatpush1.msra.mxu0 0.0
        %2019 = vmatprep.subr.mxu0 0.0
        %2020 = vmatpush1.msra.mxu0 0.0
        %2021 = vmatprep.subr.mxu0 0.0
        %2022 = vmatpush1.msra.mxu0 0.0
        %2023 = vmatprep.subr.mxu0 0.0
        %2024 = vmatpush1.msra.mxu0 0.0
        %2025 = vmatprep.subr.mxu0 0.0
        %v2026 = vand.u32 %v1609, 4294901760
        %2027 = vmatpush1.msra.mxu0 %v2026
        %2028 = vmatprep.subr.mxu0 0.0
        %v2029 = vand.u32 %v207, 4294901760
        %2030 = vmatpush1.msra.mxu0 %v2029
        %2031 = vmatprep.subr.mxu0 0.0
        %2032 = vmatpush2.msra.mxu0 0.0
        %2033 = vmatprep.subr.mxu0 0.0
        %2034 = vmatpush2.msra.mxu0 0.0
        %2035 = vmatprep.subr.mxu0 0.0
        %2036 = vmatpush2.msra.mxu0 0.0
        %2037 = vmatprep.subr.mxu0 0.0
        %2038 = vmatpush2.msra.mxu0 0.0
        %2039 = vmatprep.subr.mxu0 0.0
        %2040 = vmatpush2.msra.mxu0 0.0
        %2041 = vmatprep.subr.mxu0 0.0
        %2042 = vmatpush2.msra.mxu0 0.0
        %2043 = vmatprep.subr.mxu0 0.0
        %2044 = vmatpush2.msra.mxu0 0.0
        %2045 = vmatprep.subr.mxu0 0.0
        %2046 = vmatpush2.msra.mxu0 0.0
        %2047 = vmatprep.subr.mxu0 0.0
        %2048 = vmatpush2.msra.mxu0 0.0
        %2049 = vmatprep.subr.mxu0 0.0
        %2050 = vmatpush2.msra.mxu0 0.0
        %2051 = vmatprep.subr.mxu0 0.0
        %2052 = vmatpush2.msra.mxu0 0.0
        %2053 = vmatprep.subr.mxu0 0.0
        %2054 = vmatpush2.msra.mxu0 0.0
        %2055 = vmatprep.subr.mxu0 0.0
        %2056 = vmatpush2.msra.mxu0 0.0
        %2057 = vmatprep.subr.mxu0 0.0
        %2058 = vmatpush2.msra.mxu0 0.0
        %2059 = vmatprep.subr.mxu0 0.0
        %2060 = vmatpush2.msra.mxu0 0.0
        %2061 = vmatprep.subr.mxu0 0.0
        %2062 = vmatpush2.msra.mxu0 0.0
        %2063 = vmatprep.mubr.f32.mxu0 0.0
        %v2064 = vand.u32 %v219, 4294901760
        %2065 = vmatmul.mubr.f32.gmra.mxu0 %v2064
        %v2066 = vpop.f32.mrf.mxu0
        %v2067 = vadd.f32 %v1994, %v2066
        %v2068 = vpop.f32.mrf.mxu0
        %2069 = vdwg.mxu0
        %2074 = vrot.lane.b32.xlu0 %v681, 127
        %v2075 = vpop.permute.xlu0 %2074
        %2076 = vrot.lane.b32.xlu0 %v1143, 127
        %v2077 = vpop.permute.xlu0 %2076
        %2078 = vrot.lane.b32.xlu0 %v1605, 127
        %v2079 = vpop.permute.xlu0 %2078
        %2080 = vrot.lane.b32.xlu0 %v2067, 127
        %v2081 = vpop.permute.xlu0 %2080
        %v2086 = vmax.f32 %v681, %v2075
        %v2087 = vmax.f32 %v1143, %v2077
        %v2088 = vmax.f32 %v1605, %v2079
        %v2089 = vmax.f32 %v2067, %v2081
        %2090 = vrot.lane.b32.xlu0 %v681, 126
        %v2091 = vpop.permute.xlu0 %2090
        %2092 = vrot.lane.b32.xlu0 %v1143, 126
        %v2093 = vpop.permute.xlu0 %2092
        %2094 = vrot.lane.b32.xlu0 %v1605, 126
        %v2095 = vpop.permute.xlu0 %2094
        %2096 = vrot.lane.b32.xlu0 %v2067, 126
        %v2097 = vpop.permute.xlu0 %2096
        %v2102 = vmax.f32 %v2086, %v2091
        %v2103 = vmax.f32 %v2087, %v2093
        %v2104 = vmax.f32 %v2088, %v2095
        %v2105 = vmax.f32 %v2089, %v2097
        %v2106 = vadd.s32 %v212, 8
        %v2107 = vmul.u32 %v210, 2
        %vm2108 = vcmp.eq.s32.totalorder %v212, %v2107
        %vm2109 = vcmp.eq.s32.totalorder %v2106, %v2107
        %v2110 = vsel %vm2108, 1, 0
        %v2111 = vsel %vm2109, 1, 0
        %v2112 = vcvt.s32.f32 %v2110
        %v2113 = vcvt.s32.f32 %v2111
        %v2115 = vsel %vm217, %v2102, 0
        %v2118 = vsel %vm221, %v2113, 0
        %2120 = vmatprep.subr.mxu0 0.0
        %2121 = vmatpush1.msra.mxu0 0.0
        %2122 = vmatprep.subr.mxu0 0.0
        %2123 = vmatpush1.msra.mxu0 0.0
        %2124 = vmatprep.subr.mxu0 0.0
        %2125 = vmatpush1.msra.mxu0 0.0
        %2126 = vmatprep.subr.mxu0 0.0
        %2127 = vmatpush1.msra.mxu0 0.0
        %2128 = vmatprep.subr.mxu0 0.0
        %2129 = vmatpush1.msra.mxu0 0.0
        %2130 = vmatprep.subr.mxu0 0.0
        %2131 = vmatpush1.msra.mxu0 0.0
        %2132 = vmatprep.subr.mxu0 0.0
        %2133 = vmatpush1.msra.mxu0 0.0
        %2134 = vmatprep.subr.mxu0 0.0
        %2135 = vmatpush1.msra.mxu0 0.0
        %2136 = vmatprep.subr.mxu0 0.0
        %2137 = vmatpush1.msra.mxu0 0.0
        %2138 = vmatprep.subr.mxu0 0.0
        %2139 = vmatpush1.msra.mxu0 0.0
        %2140 = vmatprep.subr.mxu0 0.0
        %2141 = vmatpush1.msra.mxu0 0.0
        %2142 = vmatprep.subr.mxu0 0.0
        %2143 = vmatpush1.msra.mxu0 0.0
        %2144 = vmatprep.subr.mxu0 0.0
        %2145 = vmatpush1.msra.mxu0 0.0
        %2146 = vmatprep.subr.mxu0 0.0
        %2147 = vmatpush1.msra.mxu0 0.0
        %2148 = vmatprep.subr.mxu0 0.0
        %v2149 = vand.u32 %v2118, 4294901760
        %2150 = vmatpush1.msra.mxu0 %v2149
        %2151 = vmatprep.subr.mxu0 0.0
        %v2152 = vand.u32 %v2112, 4294901760
        %2153 = vmatpush1.msra.mxu0 %v2152
        %2154 = vmatprep.subr.mxu0 0.0
        %2155 = vmatpush2.msra.mxu0 0.0
        %2156 = vmatprep.subr.mxu0 0.0
        %2157 = vmatpush2.msra.mxu0 0.0
        %2158 = vmatprep.subr.mxu0 0.0
        %2159 = vmatpush2.msra.mxu0 0.0
        %2160 = vmatprep.subr.mxu0 0.0
        %2161 = vmatpush2.msra.mxu0 0.0
        %2162 = vmatprep.subr.mxu0 0.0
        %2163 = vmatpush2.msra.mxu0 0.0
        %2164 = vmatprep.subr.mxu0 0.0
        %2165 = vmatpush2.msra.mxu0 0.0
        %2166 = vmatprep.subr.mxu0 0.0
        %2167 = vmatpush2.msra.mxu0 0.0
        %2168 = vmatprep.subr.mxu0 0.0
        %2169 = vmatpush2.msra.mxu0 0.0
        %2170 = vmatprep.subr.mxu0 0.0
        %2171 = vmatpush2.msra.mxu0 0.0
        %2172 = vmatprep.subr.mxu0 0.0
        %2173 = vmatpush2.msra.mxu0 0.0
        %2174 = vmatprep.subr.mxu0 0.0
        %2175 = vmatpush2.msra.mxu0 0.0
        %2176 = vmatprep.subr.mxu0 0.0
        %2177 = vmatpush2.msra.mxu0 0.0
        %2178 = vmatprep.subr.mxu0 0.0
        %2179 = vmatpush2.msra.mxu0 0.0
        %2180 = vmatprep.subr.mxu0 0.0
        %2181 = vmatpush2.msra.mxu0 0.0
        %2182 = vmatprep.subr.mxu0 0.0
        %2183 = vmatpush2.msra.mxu0 0.0
        %2184 = vmatprep.subr.mxu0 0.0
        %2185 = vmatpush2.msra.mxu0 0.0
        %2186 = vmatprep.mubr.f32.mxu0 0.0
        %v2187 = vand.u32 %v2115, 4294901760
        %v2188 = vsub.f32 %v2115, %v2187
        %v2189 = vand.u32 %v2188, 4294901760
        %v2190 = vsub.f32 %v2188, %v2189
        %v2191 = vand.u32 %v2190, 4294901760
        %2192 = vmatmul.mubr.f32.gmra.mxu0 %v2191
        %v2193 = vpop.f32.mrf.mxu0
        %v2194 = vadd.f32 0.0, %v2193
        %v2195 = vpop.f32.mrf.mxu0
        %2196 = vdwg.mxu0
        %2197 = vmatprep.subr.mxu0 0.0
        %2198 = vmatpush1.msra.mxu0 0.0
        %2199 = vmatprep.subr.mxu0 0.0
        %2200 = vmatpush1.msra.mxu0 0.0
        %2201 = vmatprep.subr.mxu0 0.0
        %2202 = vmatpush1.msra.mxu0 0.0
        %2203 = vmatprep.subr.mxu0 0.0
        %2204 = vmatpush1.msra.mxu0 0.0
        %2205 = vmatprep.subr.mxu0 0.0
        %2206 = vmatpush1.msra.mxu0 0.0
        %2207 = vmatprep.subr.mxu0 0.0
        %2208 = vmatpush1.msra.mxu0 0.0
        %2209 = vmatprep.subr.mxu0 0.0
        %2210 = vmatpush1.msra.mxu0 0.0
        %2211 = vmatprep.subr.mxu0 0.0
        %2212 = vmatpush1.msra.mxu0 0.0
        %2213 = vmatprep.subr.mxu0 0.0
        %2214 = vmatpush1.msra.mxu0 0.0
        %2215 = vmatprep.subr.mxu0 0.0
        %2216 = vmatpush1.msra.mxu0 0.0
        %2217 = vmatprep.subr.mxu0 0.0
        %2218 = vmatpush1.msra.mxu0 0.0
        %2219 = vmatprep.subr.mxu0 0.0
        %2220 = vmatpush1.msra.mxu0 0.0
        %2221 = vmatprep.subr.mxu0 0.0
        %2222 = vmatpush1.msra.mxu0 0.0
        %2223 = vmatprep.subr.mxu0 0.0
        %2224 = vmatpush1.msra.mxu0 0.0
        %2225 = vmatprep.subr.mxu0 0.0
        %v2226 = vand.u32 %v2118, 4294901760
        %v2227 = vsub.f32 %v2118, %v2226
        %v2228 = vand.u32 %v2227, 4294901760
        %v2229 = vsub.f32 %v2227, %v2228
        %v2230 = vand.u32 %v2229, 4294901760
        %2231 = vmatpush1.msra.mxu0 %v2230
        %2232 = vmatprep.subr.mxu0 0.0
        %v2233 = vand.u32 %v2112, 4294901760
        %v2234 = vsub.f32 %v2112, %v2233
        %v2235 = vand.u32 %v2234, 4294901760
        %v2236 = vsub.f32 %v2234, %v2235
        %v2237 = vand.u32 %v2236, 4294901760
        %2238 = vmatpush1.msra.mxu0 %v2237
        %2239 = vmatprep.subr.mxu0 0.0
        %2240 = vmatpush2.msra.mxu0 0.0
        %2241 = vmatprep.subr.mxu0 0.0
        %2242 = vmatpush2.msra.mxu0 0.0
        %2243 = vmatprep.subr.mxu0 0.0
        %2244 = vmatpush2.msra.mxu0 0.0
        %2245 = vmatprep.subr.mxu0 0.0
        %2246 = vmatpush2.msra.mxu0 0.0
        %2247 = vmatprep.subr.mxu0 0.0
        %2248 = vmatpush2.msra.mxu0 0.0
        %2249 = vmatprep.subr.mxu0 0.0
        %2250 = vmatpush2.msra.mxu0 0.0
        %2251 = vmatprep.subr.mxu0 0.0
        %2252 = vmatpush2.msra.mxu0 0.0
        %2253 = vmatprep.subr.mxu0 0.0
        %2254 = vmatpush2.msra.mxu0 0.0
        %2255 = vmatprep.subr.mxu0 0.0
        %2256 = vmatpush2.msra.mxu0 0.0
        %2257 = vmatprep.subr.mxu0 0.0
        %2258 = vmatpush2.msra.mxu0 0.0
        %2259 = vmatprep.subr.mxu0 0.0
        %2260 = vmatpush2.msra.mxu0 0.0
        %2261 = vmatprep.subr.mxu0 0.0
        %2262 = vmatpush2.msra.mxu0 0.0
        %2263 = vmatprep.subr.mxu0 0.0
        %2264 = vmatpush2.msra.mxu0 0.0
        %2265 = vmatprep.subr.mxu0 0.0
        %2266 = vmatpush2.msra.mxu0 0.0
        %2267 = vmatprep.subr.mxu0 0.0
        %2268 = vmatpush2.msra.mxu0 0.0
        %2269 = vmatprep.subr.mxu0 0.0
        %2270 = vmatpush2.msra.mxu0 0.0
        %2271 = vmatprep.mubr.f32.mxu0 0.0
        %v2272 = vand.u32 %v2115, 4294901760
        %2273 = vmatmul.mubr.f32.gmra.mxu0 %v2272
        %v2274 = vpop.f32.mrf.mxu0
        %v2275 = vadd.f32 %v2194, %v2274
        %v2276 = vpop.f32.mrf.mxu0
        %2277 = vdwg.mxu0
        %2278 = vmatprep.subr.mxu0 0.0
        %2279 = vmatpush1.msra.mxu0 0.0
        %2280 = vmatprep.subr.mxu0 0.0
        %2281 = vmatpush1.msra.mxu0 0.0
        %2282 = vmatprep.subr.mxu0 0.0
        %2283 = vmatpush1.msra.mxu0 0.0
        %2284 = vmatprep.subr.mxu0 0.0
        %2285 = vmatpush1.msra.mxu0 0.0
        %2286 = vmatprep.subr.mxu0 0.0
        %2287 = vmatpush1.msra.mxu0 0.0
        %2288 = vmatprep.subr.mxu0 0.0
        %2289 = vmatpush1.msra.mxu0 0.0
        %2290 = vmatprep.subr.mxu0 0.0
        %2291 = vmatpush1.msra.mxu0 0.0
        %2292 = vmatprep.subr.mxu0 0.0
        %2293 = vmatpush1.msra.mxu0 0.0
        %2294 = vmatprep.subr.mxu0 0.0
        %2295 = vmatpush1.msra.mxu0 0.0
        %2296 = vmatprep.subr.mxu0 0.0
        %2297 = vmatpush1.msra.mxu0 0.0
        %2298 = vmatprep.subr.mxu0 0.0
        %2299 = vmatpush1.msra.mxu0 0.0
        %2300 = vmatprep.subr.mxu0 0.0
        %2301 = vmatpush1.msra.mxu0 0.0
        %2302 = vmatprep.subr.mxu0 0.0
        %2303 = vmatpush1.msra.mxu0 0.0
        %2304 = vmatprep.subr.mxu0 0.0
        %2305 = vmatpush1.msra.mxu0 0.0
        %2306 = vmatprep.subr.mxu0 0.0
        %v2307 = vand.u32 %v2118, 4294901760
        %v2308 = vsub.f32 %v2118, %v2307
        %2309 = vmatpush1.msra.mxu0 %v2308
        %2310 = vmatprep.subr.mxu0 0.0
        %v2311 = vand.u32 %v2112, 4294901760
        %v2312 = vsub.f32 %v2112, %v2311
        %2313 = vmatpush1.msra.mxu0 %v2312
        %2314 = vmatprep.subr.mxu0 0.0
        %2315 = vmatpush2.msra.mxu0 0.0
        %2316 = vmatprep.subr.mxu0 0.0
        %2317 = vmatpush2.msra.mxu0 0.0
        %2318 = vmatprep.subr.mxu0 0.0
        %2319 = vmatpush2.msra.mxu0 0.0
        %2320 = vmatprep.subr.mxu0 0.0
        %2321 = vmatpush2.msra.mxu0 0.0
        %2322 = vmatprep.subr.mxu0 0.0
        %2323 = vmatpush2.msra.mxu0 0.0
        %2324 = vmatprep.subr.mxu0 0.0
        %2325 = vmatpush2.msra.mxu0 0.0
        %2326 = vmatprep.subr.mxu0 0.0
        %2327 = vmatpush2.msra.mxu0 0.0
        %2328 = vmatprep.subr.mxu0 0.0
        %2329 = vmatpush2.msra.mxu0 0.0
        %2330 = vmatprep.subr.mxu0 0.0
        %2331 = vmatpush2.msra.mxu0 0.0
        %2332 = vmatprep.subr.mxu0 0.0
        %2333 = vmatpush2.msra.mxu0 0.0
        %2334 = vmatprep.subr.mxu0 0.0
        %2335 = vmatpush2.msra.mxu0 0.0
        %2336 = vmatprep.subr.mxu0 0.0
        %2337 = vmatpush2.msra.mxu0 0.0
        %2338 = vmatprep.subr.mxu0 0.0
        %2339 = vmatpush2.msra.mxu0 0.0
        %2340 = vmatprep.subr.mxu0 0.0
        %2341 = vmatpush2.msra.mxu0 0.0
        %2342 = vmatprep.subr.mxu0 0.0
        %2343 = vmatpush2.msra.mxu0 0.0
        %2344 = vmatprep.subr.mxu0 0.0
        %2345 = vmatpush2.msra.mxu0 0.0
        %2346 = vmatprep.mubr.f32.mxu0 0.0
        %v2347 = vand.u32 %v2115, 4294901760
        %v2348 = vsub.f32 %v2115, %v2347
        %2349 = vmatmul.mubr.f32.gmra.mxu0 %v2348
        %v2350 = vpop.f32.mrf.mxu0
        %v2351 = vadd.f32 %v2275, %v2350
        %v2352 = vpop.f32.mrf.mxu0
        %2353 = vdwg.mxu0
        %2354 = vmatprep.subr.mxu0 0.0
        %2355 = vmatpush1.msra.mxu0 0.0
        %2356 = vmatprep.subr.mxu0 0.0
        %2357 = vmatpush1.msra.mxu0 0.0
        %2358 = vmatprep.subr.mxu0 0.0
        %2359 = vmatpush1.msra.mxu0 0.0
        %2360 = vmatprep.subr.mxu0 0.0
        %2361 = vmatpush1.msra.mxu0 0.0
        %2362 = vmatprep.subr.mxu0 0.0
        %2363 = vmatpush1.msra.mxu0 0.0
        %2364 = vmatprep.subr.mxu0 0.0
        %2365 = vmatpush1.msra.mxu0 0.0
        %2366 = vmatprep.subr.mxu0 0.0
        %2367 = vmatpush1.msra.mxu0 0.0
        %2368 = vmatprep.subr.mxu0 0.0
        %2369 = vmatpush1.msra.mxu0 0.0
        %2370 = vmatprep.subr.mxu0 0.0
        %2371 = vmatpush1.msra.mxu0 0.0
        %2372 = vmatprep.subr.mxu0 0.0
        %2373 = vmatpush1.msra.mxu0 0.0
        %2374 = vmatprep.subr.mxu0 0.0
        %2375 = vmatpush1.msra.mxu0 0.0
        %2376 = vmatprep.subr.mxu0 0.0
        %2377 = vmatpush1.msra.mxu0 0.0
        %2378 = vmatprep.subr.mxu0 0.0
        %2379 = vmatpush1.msra.mxu0 0.0
        %2380 = vmatprep.subr.mxu0 0.0
        %2381 = vmatpush1.msra.mxu0 0.0
        %2382 = vmatprep.subr.mxu0 0.0
        %v2383 = vand.u32 %v2118, 4294901760
        %2384 = vmatpush1.msra.mxu0 %v2383
        %2385 = vmatprep.subr.mxu0 0.0
        %v2386 = vand.u32 %v2112, 4294901760
        %2387 = vmatpush1.msra.mxu0 %v2386
        %2388 = vmatprep.subr.mxu0 0.0
        %2389 = vmatpush2.msra.mxu0 0.0
        %2390 = vmatprep.subr.mxu0 0.0
        %2391 = vmatpush2.msra.mxu0 0.0
        %2392 = vmatprep.subr.mxu0 0.0
        %2393 = vmatpush2.msra.mxu0 0.0
        %2394 = vmatprep.subr.mxu0 0.0
        %2395 = vmatpush2.msra.mxu0 0.0
        %2396 = vmatprep.subr.mxu0 0.0
        %2397 = vmatpush2.msra.mxu0 0.0
        %2398 = vmatprep.subr.mxu0 0.0
        %2399 = vmatpush2.msra.mxu0 0.0
        %2400 = vmatprep.subr.mxu0 0.0
        %2401 = vmatpush2.msra.mxu0 0.0
        %2402 = vmatprep.subr.mxu0 0.0
        %2403 = vmatpush2.msra.mxu0 0.0
        %2404 = vmatprep.subr.mxu0 0.0
        %2405 = vmatpush2.msra.mxu0 0.0
        %2406 = vmatprep.subr.mxu0 0.0
        %2407 = vmatpush2.msra.mxu0 0.0
        %2408 = vmatprep.subr.mxu0 0.0
        %2409 = vmatpush2.msra.mxu0 0.0
        %2410 = vmatprep.subr.mxu0 0.0
        %2411 = vmatpush2.msra.mxu0 0.0
        %2412 = vmatprep.subr.mxu0 0.0
        %2413 = vmatpush2.msra.mxu0 0.0
        %2414 = vmatprep.subr.mxu0 0.0
        %2415 = vmatpush2.msra.mxu0 0.0
        %2416 = vmatprep.subr.mxu0 0.0
        %2417 = vmatpush2.msra.mxu0 0.0
        %2418 = vmatprep.subr.mxu0 0.0
        %2419 = vmatpush2.msra.mxu0 0.0
        %2420 = vmatprep.mubr.f32.mxu0 0.0
        %v2421 = vand.u32 %v2115, 4294901760
        %v2422 = vsub.f32 %v2115, %v2421
        %v2423 = vand.u32 %v2422, 4294901760
        %2424 = vmatmul.mubr.f32.gmra.mxu0 %v2423
        %v2425 = vpop.f32.mrf.mxu0
        %v2426 = vadd.f32 %v2351, %v2425
        %v2427 = vpop.f32.mrf.mxu0
        %2428 = vdwg.mxu0
        %2429 = vmatprep.subr.mxu0 0.0
        %2430 = vmatpush1.msra.mxu0 0.0
        %2431 = vmatprep.subr.mxu0 0.0
        %2432 = vmatpush1.msra.mxu0 0.0
        %2433 = vmatprep.subr.mxu0 0.0
        %2434 = vmatpush1.msra.mxu0 0.0
        %2435 = vmatprep.subr.mxu0 0.0
        %2436 = vmatpush1.msra.mxu0 0.0
        %2437 = vmatprep.subr.mxu0 0.0
        %2438 = vmatpush1.msra.mxu0 0.0
        %2439 = vmatprep.subr.mxu0 0.0
        %2440 = vmatpush1.msra.mxu0 0.0
        %2441 = vmatprep.subr.mxu0 0.0
        %2442 = vmatpush1.msra.mxu0 0.0
        %2443 = vmatprep.subr.mxu0 0.0
        %2444 = vmatpush1.msra.mxu0 0.0
        %2445 = vmatprep.subr.mxu0 0.0
        %2446 = vmatpush1.msra.mxu0 0.0
        %2447 = vmatprep.subr.mxu0 0.0
        %2448 = vmatpush1.msra.mxu0 0.0
        %2449 = vmatprep.subr.mxu0 0.0
        %2450 = vmatpush1.msra.mxu0 0.0
        %2451 = vmatprep.subr.mxu0 0.0
        %2452 = vmatpush1.msra.mxu0 0.0
        %2453 = vmatprep.subr.mxu0 0.0
        %2454 = vmatpush1.msra.mxu0 0.0
        %2455 = vmatprep.subr.mxu0 0.0
        %2456 = vmatpush1.msra.mxu0 0.0
        %2457 = vmatprep.subr.mxu0 0.0
        %v2458 = vand.u32 %v2118, 4294901760
        %v2459 = vsub.f32 %v2118, %v2458
        %v2460 = vand.u32 %v2459, 4294901760
        %2461 = vmatpush1.msra.mxu0 %v2460
        %2462 = vmatprep.subr.mxu0 0.0
        %v2463 = vand.u32 %v2112, 4294901760
        %v2464 = vsub.f32 %v2112, %v2463
        %v2465 = vand.u32 %v2464, 4294901760
        %2466 = vmatpush1.msra.mxu0 %v2465
        %2467 = vmatprep.subr.mxu0 0.0
        %2468 = vmatpush2.msra.mxu0 0.0
        %2469 = vmatprep.subr.mxu0 0.0
        %2470 = vmatpush2.msra.mxu0 0.0
        %2471 = vmatprep.subr.mxu0 0.0
        %2472 = vmatpush2.msra.mxu0 0.0
        %2473 = vmatprep.subr.mxu0 0.0
        %2474 = vmatpush2.msra.mxu0 0.0
        %2475 = vmatprep.subr.mxu0 0.0
        %2476 = vmatpush2.msra.mxu0 0.0
        %2477 = vmatprep.subr.mxu0 0.0
        %2478 = vmatpush2.msra.mxu0 0.0
        %2479 = vmatprep.subr.mxu0 0.0
        %2480 = vmatpush2.msra.mxu0 0.0
        %2481 = vmatprep.subr.mxu0 0.0
        %2482 = vmatpush2.msra.mxu0 0.0
        %2483 = vmatprep.subr.mxu0 0.0
        %2484 = vmatpush2.msra.mxu0 0.0
        %2485 = vmatprep.subr.mxu0 0.0
        %2486 = vmatpush2.msra.mxu0 0.0
        %2487 = vmatprep.subr.mxu0 0.0
        %2488 = vmatpush2.msra.mxu0 0.0
        %2489 = vmatprep.subr.mxu0 0.0
        %2490 = vmatpush2.msra.mxu0 0.0
        %2491 = vmatprep.subr.mxu0 0.0
        %2492 = vmatpush2.msra.mxu0 0.0
        %2493 = vmatprep.subr.mxu0 0.0
        %2494 = vmatpush2.msra.mxu0 0.0
        %2495 = vmatprep.subr.mxu0 0.0
        %2496 = vmatpush2.msra.mxu0 0.0
        %2497 = vmatprep.subr.mxu0 0.0
        %2498 = vmatpush2.msra.mxu0 0.0
        %2499 = vmatprep.mubr.f32.mxu0 0.0
        %v2500 = vand.u32 %v2115, 4294901760
        %2501 = vmatmul.mubr.f32.gmra.mxu0 %v2500
        %v2502 = vpop.f32.mrf.mxu0
        %v2503 = vadd.f32 %v2426, %v2502
        %v2504 = vpop.f32.mrf.mxu0
        %2505 = vdwg.mxu0
        %2506 = vmatprep.subr.mxu0 0.0
        %2507 = vmatpush1.msra.mxu0 0.0
        %2508 = vmatprep.subr.mxu0 0.0
        %2509 = vmatpush1.msra.mxu0 0.0
        %2510 = vmatprep.subr.mxu0 0.0
        %2511 = vmatpush1.msra.mxu0 0.0
        %2512 = vmatprep.subr.mxu0 0.0
        %2513 = vmatpush1.msra.mxu0 0.0
        %2514 = vmatprep.subr.mxu0 0.0
        %2515 = vmatpush1.msra.mxu0 0.0
        %2516 = vmatprep.subr.mxu0 0.0
        %2517 = vmatpush1.msra.mxu0 0.0
        %2518 = vmatprep.subr.mxu0 0.0
        %2519 = vmatpush1.msra.mxu0 0.0
        %2520 = vmatprep.subr.mxu0 0.0
        %2521 = vmatpush1.msra.mxu0 0.0
        %2522 = vmatprep.subr.mxu0 0.0
        %2523 = vmatpush1.msra.mxu0 0.0
        %2524 = vmatprep.subr.mxu0 0.0
        %2525 = vmatpush1.msra.mxu0 0.0
        %2526 = vmatprep.subr.mxu0 0.0
        %2527 = vmatpush1.msra.mxu0 0.0
        %2528 = vmatprep.subr.mxu0 0.0
        %2529 = vmatpush1.msra.mxu0 0.0
        %2530 = vmatprep.subr.mxu0 0.0
        %2531 = vmatpush1.msra.mxu0 0.0
        %2532 = vmatprep.subr.mxu0 0.0
        %2533 = vmatpush1.msra.mxu0 0.0
        %2534 = vmatprep.subr.mxu0 0.0
        %v2535 = vand.u32 %v2118, 4294901760
        %2536 = vmatpush1.msra.mxu0 %v2535
        %2537 = vmatprep.subr.mxu0 0.0
        %v2538 = vand.u32 %v2112, 4294901760
        %2539 = vmatpush1.msra.mxu0 %v2538
        %2540 = vmatprep.subr.mxu0 0.0
        %2541 = vmatpush2.msra.mxu0 0.0
        %2542 = vmatprep.subr.mxu0 0.0
        %2543 = vmatpush2.msra.mxu0 0.0
        %2544 = vmatprep.subr.mxu0 0.0
        %2545 = vmatpush2.msra.mxu0 0.0
        %2546 = vmatprep.subr.mxu0 0.0
        %2547 = vmatpush2.msra.mxu0 0.0
        %2548 = vmatprep.subr.mxu0 0.0
        %2549 = vmatpush2.msra.mxu0 0.0
        %2550 = vmatprep.subr.mxu0 0.0
        %2551 = vmatpush2.msra.mxu0 0.0
        %2552 = vmatprep.subr.mxu0 0.0
        %2553 = vmatpush2.msra.mxu0 0.0
        %2554 = vmatprep.subr.mxu0 0.0
        %2555 = vmatpush2.msra.mxu0 0.0
        %2556 = vmatprep.subr.mxu0 0.0
        %2557 = vmatpush2.msra.mxu0 0.0
        %2558 = vmatprep.subr.mxu0 0.0
        %2559 = vmatpush2.msra.mxu0 0.0
        %2560 = vmatprep.subr.mxu0 0.0
        %2561 = vmatpush2.msra.mxu0 0.0
        %2562 = vmatprep.subr.mxu0 0.0
        %2563 = vmatpush2.msra.mxu0 0.0
        %2564 = vmatprep.subr.mxu0 0.0
        %2565 = vmatpush2.msra.mxu0 0.0
        %2566 = vmatprep.subr.mxu0 0.0
        %2567 = vmatpush2.msra.mxu0 0.0
        %2568 = vmatprep.subr.mxu0 0.0
        %2569 = vmatpush2.msra.mxu0 0.0
        %2570 = vmatprep.subr.mxu0 0.0
        %2571 = vmatpush2.msra.mxu0 0.0
        %2572 = vmatprep.mubr.f32.mxu0 0.0
        %v2573 = vand.u32 %v2115, 4294901760
        %2574 = vmatmul.mubr.f32.gmra.mxu0 %v2573
        %v2575 = vpop.f32.mrf.mxu0
        %v2576 = vadd.f32 %v2503, %v2575
        %v2577 = vpop.f32.mrf.mxu0
        %2578 = vdwg.mxu0
        %v2580 = vsel %vm217, %v2103, 0
        %2582 = vmatprep.subr.mxu0 0.0
        %2583 = vmatpush1.msra.mxu0 0.0
        %2584 = vmatprep.subr.mxu0 0.0
        %2585 = vmatpush1.msra.mxu0 0.0
        %2586 = vmatprep.subr.mxu0 0.0
        %2587 = vmatpush1.msra.mxu0 0.0
        %2588 = vmatprep.subr.mxu0 0.0
        %2589 = vmatpush1.msra.mxu0 0.0
        %2590 = vmatprep.subr.mxu0 0.0
        %2591 = vmatpush1.msra.mxu0 0.0
        %2592 = vmatprep.subr.mxu0 0.0
        %2593 = vmatpush1.msra.mxu0 0.0
        %2594 = vmatprep.subr.mxu0 0.0
        %2595 = vmatpush1.msra.mxu0 0.0
        %2596 = vmatprep.subr.mxu0 0.0
        %2597 = vmatpush1.msra.mxu0 0.0
        %2598 = vmatprep.subr.mxu0 0.0
        %2599 = vmatpush1.msra.mxu0 0.0
        %2600 = vmatprep.subr.mxu0 0.0
        %2601 = vmatpush1.msra.mxu0 0.0
        %2602 = vmatprep.subr.mxu0 0.0
        %2603 = vmatpush1.msra.mxu0 0.0
        %2604 = vmatprep.subr.mxu0 0.0
        %2605 = vmatpush1.msra.mxu0 0.0
        %2606 = vmatprep.subr.mxu0 0.0
        %2607 = vmatpush1.msra.mxu0 0.0
        %2608 = vmatprep.subr.mxu0 0.0
        %2609 = vmatpush1.msra.mxu0 0.0
        %2610 = vmatprep.subr.mxu0 0.0
        %v2611 = vand.u32 %v2118, 4294901760
        %2612 = vmatpush1.msra.mxu0 %v2611
        %2613 = vmatprep.subr.mxu0 0.0
        %v2614 = vand.u32 %v2112, 4294901760
        %2615 = vmatpush1.msra.mxu0 %v2614
        %2616 = vmatprep.subr.mxu0 0.0
        %2617 = vmatpush2.msra.mxu0 0.0
        %2618 = vmatprep.subr.mxu0 0.0
        %2619 = vmatpush2.msra.mxu0 0.0
        %2620 = vmatprep.subr.mxu0 0.0
        %2621 = vmatpush2.msra.mxu0 0.0
        %2622 = vmatprep.subr.mxu0 0.0
        %2623 = vmatpush2.msra.mxu0 0.0
        %2624 = vmatprep.subr.mxu0 0.0
        %2625 = vmatpush2.msra.mxu0 0.0
        %2626 = vmatprep.subr.mxu0 0.0
        %2627 = vmatpush2.msra.mxu0 0.0
        %2628 = vmatprep.subr.mxu0 0.0
        %2629 = vmatpush2.msra.mxu0 0.0
        %2630 = vmatprep.subr.mxu0 0.0
        %2631 = vmatpush2.msra.mxu0 0.0
        %2632 = vmatprep.subr.mxu0 0.0
        %2633 = vmatpush2.msra.mxu0 0.0
        %2634 = vmatprep.subr.mxu0 0.0
        %2635 = vmatpush2.msra.mxu0 0.0
        %2636 = vmatprep.subr.mxu0 0.0
        %2637 = vmatpush2.msra.mxu0 0.0
        %2638 = vmatprep.subr.mxu0 0.0
        %2639 = vmatpush2.msra.mxu0 0.0
        %2640 = vmatprep.subr.mxu0 0.0
        %2641 = vmatpush2.msra.mxu0 0.0
        %2642 = vmatprep.subr.mxu0 0.0
        %2643 = vmatpush2.msra.mxu0 0.0
        %2644 = vmatprep.subr.mxu0 0.0
        %2645 = vmatpush2.msra.mxu0 0.0
        %2646 = vmatprep.subr.mxu0 0.0
        %2647 = vmatpush2.msra.mxu0 0.0
        %2648 = vmatprep.mubr.f32.mxu0 0.0
        %v2649 = vand.u32 %v2580, 4294901760
        %v2650 = vsub.f32 %v2580, %v2649
        %v2651 = vand.u32 %v2650, 4294901760
        %v2652 = vsub.f32 %v2650, %v2651
        %v2653 = vand.u32 %v2652, 4294901760
        %2654 = vmatmul.mubr.f32.gmra.mxu0 %v2653
        %v2655 = vpop.f32.mrf.mxu0
        %v2656 = vadd.f32 0.0, %v2655
        %v2657 = vpop.f32.mrf.mxu0
        %2658 = vdwg.mxu0
        %2659 = vmatprep.subr.mxu0 0.0
        %2660 = vmatpush1.msra.mxu0 0.0
        %2661 = vmatprep.subr.mxu0 0.0
        %2662 = vmatpush1.msra.mxu0 0.0
        %2663 = vmatprep.subr.mxu0 0.0
        %2664 = vmatpush1.msra.mxu0 0.0
        %2665 = vmatprep.subr.mxu0 0.0
        %2666 = vmatpush1.msra.mxu0 0.0
        %2667 = vmatprep.subr.mxu0 0.0
        %2668 = vmatpush1.msra.mxu0 0.0
        %2669 = vmatprep.subr.mxu0 0.0
        %2670 = vmatpush1.msra.mxu0 0.0
        %2671 = vmatprep.subr.mxu0 0.0
        %2672 = vmatpush1.msra.mxu0 0.0
        %2673 = vmatprep.subr.mxu0 0.0
        %2674 = vmatpush1.msra.mxu0 0.0
        %2675 = vmatprep.subr.mxu0 0.0
        %2676 = vmatpush1.msra.mxu0 0.0
        %2677 = vmatprep.subr.mxu0 0.0
        %2678 = vmatpush1.msra.mxu0 0.0
        %2679 = vmatprep.subr.mxu0 0.0
        %2680 = vmatpush1.msra.mxu0 0.0
        %2681 = vmatprep.subr.mxu0 0.0
        %2682 = vmatpush1.msra.mxu0 0.0
        %2683 = vmatprep.subr.mxu0 0.0
        %2684 = vmatpush1.msra.mxu0 0.0
        %2685 = vmatprep.subr.mxu0 0.0
        %2686 = vmatpush1.msra.mxu0 0.0
        %2687 = vmatprep.subr.mxu0 0.0
        %v2688 = vand.u32 %v2118, 4294901760
        %v2689 = vsub.f32 %v2118, %v2688
        %v2690 = vand.u32 %v2689, 4294901760
        %v2691 = vsub.f32 %v2689, %v2690
        %v2692 = vand.u32 %v2691, 4294901760
        %2693 = vmatpush1.msra.mxu0 %v2692
        %2694 = vmatprep.subr.mxu0 0.0
        %v2695 = vand.u32 %v2112, 4294901760
        %v2696 = vsub.f32 %v2112, %v2695
        %v2697 = vand.u32 %v2696, 4294901760
        %v2698 = vsub.f32 %v2696, %v2697
        %v2699 = vand.u32 %v2698, 4294901760
        %2700 = vmatpush1.msra.mxu0 %v2699
        %2701 = vmatprep.subr.mxu0 0.0
        %2702 = vmatpush2.msra.mxu0 0.0
        %2703 = vmatprep.subr.mxu0 0.0
        %2704 = vmatpush2.msra.mxu0 0.0
        %2705 = vmatprep.subr.mxu0 0.0
        %2706 = vmatpush2.msra.mxu0 0.0
        %2707 = vmatprep.subr.mxu0 0.0
        %2708 = vmatpush2.msra.mxu0 0.0
        %2709 = vmatprep.subr.mxu0 0.0
        %2710 = vmatpush2.msra.mxu0 0.0
        %2711 = vmatprep.subr.mxu0 0.0
        %2712 = vmatpush2.msra.mxu0 0.0
        %2713 = vmatprep.subr.mxu0 0.0
        %2714 = vmatpush2.msra.mxu0 0.0
        %2715 = vmatprep.subr.mxu0 0.0
        %2716 = vmatpush2.msra.mxu0 0.0
        %2717 = vmatprep.subr.mxu0 0.0
        %2718 = vmatpush2.msra.mxu0 0.0
        %2719 = vmatprep.subr.mxu0 0.0
        %2720 = vmatpush2.msra.mxu0 0.0
        %2721 = vmatprep.subr.mxu0 0.0
        %2722 = vmatpush2.msra.mxu0 0.0
        %2723 = vmatprep.subr.mxu0 0.0
        %2724 = vmatpush2.msra.mxu0 0.0
        %2725 = vmatprep.subr.mxu0 0.0
        %2726 = vmatpush2.msra.mxu0 0.0
        %2727 = vmatprep.subr.mxu0 0.0
        %2728 = vmatpush2.msra.mxu0 0.0
        %2729 = vmatprep.subr.mxu0 0.0
        %2730 = vmatpush2.msra.mxu0 0.0
        %2731 = vmatprep.subr.mxu0 0.0
        %2732 = vmatpush2.msra.mxu0 0.0
        %2733 = vmatprep.mubr.f32.mxu0 0.0
        %v2734 = vand.u32 %v2580, 4294901760
        %2735 = vmatmul.mubr.f32.gmra.mxu0 %v2734
        %v2736 = vpop.f32.mrf.mxu0
        %v2737 = vadd.f32 %v2656, %v2736
        %v2738 = vpop.f32.mrf.mxu0
        %2739 = vdwg.mxu0
        %2740 = vmatprep.subr.mxu0 0.0
        %2741 = vmatpush1.msra.mxu0 0.0
        %2742 = vmatprep.subr.mxu0 0.0
        %2743 = vmatpush1.msra.mxu0 0.0
        %2744 = vmatprep.subr.mxu0 0.0
        %2745 = vmatpush1.msra.mxu0 0.0
        %2746 = vmatprep.subr.mxu0 0.0
        %2747 = vmatpush1.msra.mxu0 0.0
        %2748 = vmatprep.subr.mxu0 0.0
        %2749 = vmatpush1.msra.mxu0 0.0
        %2750 = vmatprep.subr.mxu0 0.0
        %2751 = vmatpush1.msra.mxu0 0.0
        %2752 = vmatprep.subr.mxu0 0.0
        %2753 = vmatpush1.msra.mxu0 0.0
        %2754 = vmatprep.subr.mxu0 0.0
        %2755 = vmatpush1.msra.mxu0 0.0
        %2756 = vmatprep.subr.mxu0 0.0
        %2757 = vmatpush1.msra.mxu0 0.0
        %2758 = vmatprep.subr.mxu0 0.0
        %2759 = vmatpush1.msra.mxu0 0.0
        %2760 = vmatprep.subr.mxu0 0.0
        %2761 = vmatpush1.msra.mxu0 0.0
        %2762 = vmatprep.subr.mxu0 0.0
        %2763 = vmatpush1.msra.mxu0 0.0
        %2764 = vmatprep.subr.mxu0 0.0
        %2765 = vmatpush1.msra.mxu0 0.0
        %2766 = vmatprep.subr.mxu0 0.0
        %2767 = vmatpush1.msra.mxu0 0.0
        %2768 = vmatprep.subr.mxu0 0.0
        %v2769 = vand.u32 %v2118, 4294901760
        %v2770 = vsub.f32 %v2118, %v2769
        %2771 = vmatpush1.msra.mxu0 %v2770
        %2772 = vmatprep.subr.mxu0 0.0
        %v2773 = vand.u32 %v2112, 4294901760
        %v2774 = vsub.f32 %v2112, %v2773
        %2775 = vmatpush1.msra.mxu0 %v2774
        %2776 = vmatprep.subr.mxu0 0.0
        %2777 = vmatpush2.msra.mxu0 0.0
        %2778 = vmatprep.subr.mxu0 0.0
        %2779 = vmatpush2.msra.mxu0 0.0
        %2780 = vmatprep.subr.mxu0 0.0
        %2781 = vmatpush2.msra.mxu0 0.0
        %2782 = vmatprep.subr.mxu0 0.0
        %2783 = vmatpush2.msra.mxu0 0.0
        %2784 = vmatprep.subr.mxu0 0.0
        %2785 = vmatpush2.msra.mxu0 0.0
        %2786 = vmatprep.subr.mxu0 0.0
        %2787 = vmatpush2.msra.mxu0 0.0
        %2788 = vmatprep.subr.mxu0 0.0
        %2789 = vmatpush2.msra.mxu0 0.0
        %2790 = vmatprep.subr.mxu0 0.0
        %2791 = vmatpush2.msra.mxu0 0.0
        %2792 = vmatprep.subr.mxu0 0.0
        %2793 = vmatpush2.msra.mxu0 0.0
        %2794 = vmatprep.subr.mxu0 0.0
        %2795 = vmatpush2.msra.mxu0 0.0
        %2796 = vmatprep.subr.mxu0 0.0
        %2797 = vmatpush2.msra.mxu0 0.0
        %2798 = vmatprep.subr.mxu0 0.0
        %2799 = vmatpush2.msra.mxu0 0.0
        %2800 = vmatprep.subr.mxu0 0.0
        %2801 = vmatpush2.msra.mxu0 0.0
        %2802 = vmatprep.subr.mxu0 0.0
        %2803 = vmatpush2.msra.mxu0 0.0
        %2804 = vmatprep.subr.mxu0 0.0
        %2805 = vmatpush2.msra.mxu0 0.0
        %2806 = vmatprep.subr.mxu0 0.0
        %2807 = vmatpush2.msra.mxu0 0.0
        %2808 = vmatprep.mubr.f32.mxu0 0.0
        %v2809 = vand.u32 %v2580, 4294901760
        %v2810 = vsub.f32 %v2580, %v2809
        %2811 = vmatmul.mubr.f32.gmra.mxu0 %v2810
        %v2812 = vpop.f32.mrf.mxu0
        %v2813 = vadd.f32 %v2737, %v2812
        %v2814 = vpop.f32.mrf.mxu0
        %2815 = vdwg.mxu0
        %2816 = vmatprep.subr.mxu0 0.0
        %2817 = vmatpush1.msra.mxu0 0.0
        %2818 = vmatprep.subr.mxu0 0.0
        %2819 = vmatpush1.msra.mxu0 0.0
        %2820 = vmatprep.subr.mxu0 0.0
        %2821 = vmatpush1.msra.mxu0 0.0
        %2822 = vmatprep.subr.mxu0 0.0
        %2823 = vmatpush1.msra.mxu0 0.0
        %2824 = vmatprep.subr.mxu0 0.0
        %2825 = vmatpush1.msra.mxu0 0.0
        %2826 = vmatprep.subr.mxu0 0.0
        %2827 = vmatpush1.msra.mxu0 0.0
        %2828 = vmatprep.subr.mxu0 0.0
        %2829 = vmatpush1.msra.mxu0 0.0
        %2830 = vmatprep.subr.mxu0 0.0
        %2831 = vmatpush1.msra.mxu0 0.0
        %2832 = vmatprep.subr.mxu0 0.0
        %2833 = vmatpush1.msra.mxu0 0.0
        %2834 = vmatprep.subr.mxu0 0.0
        %2835 = vmatpush1.msra.mxu0 0.0
        %2836 = vmatprep.subr.mxu0 0.0
        %2837 = vmatpush1.msra.mxu0 0.0
        %2838 = vmatprep.subr.mxu0 0.0
        %2839 = vmatpush1.msra.mxu0 0.0
        %2840 = vmatprep.subr.mxu0 0.0
        %2841 = vmatpush1.msra.mxu0 0.0
        %2842 = vmatprep.subr.mxu0 0.0
        %2843 = vmatpush1.msra.mxu0 0.0
        %2844 = vmatprep.subr.mxu0 0.0
        %v2845 = vand.u32 %v2118, 4294901760
        %2846 = vmatpush1.msra.mxu0 %v2845
        %2847 = vmatprep.subr.mxu0 0.0
        %v2848 = vand.u32 %v2112, 4294901760
        %2849 = vmatpush1.msra.mxu0 %v2848
        %2850 = vmatprep.subr.mxu0 0.0
        %2851 = vmatpush2.msra.mxu0 0.0
        %2852 = vmatprep.subr.mxu0 0.0
        %2853 = vmatpush2.msra.mxu0 0.0
        %2854 = vmatprep.subr.mxu0 0.0
        %2855 = vmatpush2.msra.mxu0 0.0
        %2856 = vmatprep.subr.mxu0 0.0
        %2857 = vmatpush2.msra.mxu0 0.0
        %2858 = vmatprep.subr.mxu0 0.0
        %2859 = vmatpush2.msra.mxu0 0.0
        %2860 = vmatprep.subr.mxu0 0.0
        %2861 = vmatpush2.msra.mxu0 0.0
        %2862 = vmatprep.subr.mxu0 0.0
        %2863 = vmatpush2.msra.mxu0 0.0
        %2864 = vmatprep.subr.mxu0 0.0
        %2865 = vmatpush2.msra.mxu0 0.0
        %2866 = vmatprep.subr.mxu0 0.0
        %2867 = vmatpush2.msra.mxu0 0.0
        %2868 = vmatprep.subr.mxu0 0.0
        %2869 = vmatpush2.msra.mxu0 0.0
        %2870 = vmatprep.subr.mxu0 0.0
        %2871 = vmatpush2.msra.mxu0 0.0
        %2872 = vmatprep.subr.mxu0 0.0
        %2873 = vmatpush2.msra.mxu0 0.0
        %2874 = vmatprep.subr.mxu0 0.0
        %2875 = vmatpush2.msra.mxu0 0.0
        %2876 = vmatprep.subr.mxu0 0.0
        %2877 = vmatpush2.msra.mxu0 0.0
        %2878 = vmatprep.subr.mxu0 0.0
        %2879 = vmatpush2.msra.mxu0 0.0
        %2880 = vmatprep.subr.mxu0 0.0
        %2881 = vmatpush2.msra.mxu0 0.0
        %2882 = vmatprep.mubr.f32.mxu0 0.0
        %v2883 = vand.u32 %v2580, 4294901760
        %v2884 = vsub.f32 %v2580, %v2883
        %v2885 = vand.u32 %v2884, 4294901760
        %2886 = vmatmul.mubr.f32.gmra.mxu0 %v2885
        %v2887 = vpop.f32.mrf.mxu0
        %v2888 = vadd.f32 %v2813, %v2887
        %v2889 = vpop.f32.mrf.mxu0
        %2890 = vdwg.mxu0
        %2891 = vmatprep.subr.mxu0 0.0
        %2892 = vmatpush1.msra.mxu0 0.0
        %2893 = vmatprep.subr.mxu0 0.0
        %2894 = vmatpush1.msra.mxu0 0.0
        %2895 = vmatprep.subr.mxu0 0.0
        %2896 = vmatpush1.msra.mxu0 0.0
        %2897 = vmatprep.subr.mxu0 0.0
        %2898 = vmatpush1.msra.mxu0 0.0
        %2899 = vmatprep.subr.mxu0 0.0
        %2900 = vmatpush1.msra.mxu0 0.0
        %2901 = vmatprep.subr.mxu0 0.0
        %2902 = vmatpush1.msra.mxu0 0.0
        %2903 = vmatprep.subr.mxu0 0.0
        %2904 = vmatpush1.msra.mxu0 0.0
        %2905 = vmatprep.subr.mxu0 0.0
        %2906 = vmatpush1.msra.mxu0 0.0
        %2907 = vmatprep.subr.mxu0 0.0
        %2908 = vmatpush1.msra.mxu0 0.0
        %2909 = vmatprep.subr.mxu0 0.0
        %2910 = vmatpush1.msra.mxu0 0.0
        %2911 = vmatprep.subr.mxu0 0.0
        %2912 = vmatpush1.msra.mxu0 0.0
        %2913 = vmatprep.subr.mxu0 0.0
        %2914 = vmatpush1.msra.mxu0 0.0
        %2915 = vmatprep.subr.mxu0 0.0
        %2916 = vmatpush1.msra.mxu0 0.0
        %2917 = vmatprep.subr.mxu0 0.0
        %2918 = vmatpush1.msra.mxu0 0.0
        %2919 = vmatprep.subr.mxu0 0.0
        %v2920 = vand.u32 %v2118, 4294901760
        %v2921 = vsub.f32 %v2118, %v2920
        %v2922 = vand.u32 %v2921, 4294901760
        %2923 = vmatpush1.msra.mxu0 %v2922
        %2924 = vmatprep.subr.mxu0 0.0
        %v2925 = vand.u32 %v2112, 4294901760
        %v2926 = vsub.f32 %v2112, %v2925
        %v2927 = vand.u32 %v2926, 4294901760
        %2928 = vmatpush1.msra.mxu0 %v2927
        %2929 = vmatprep.subr.mxu0 0.0
        %2930 = vmatpush2.msra.mxu0 0.0
        %2931 = vmatprep.subr.mxu0 0.0
        %2932 = vmatpush2.msra.mxu0 0.0
        %2933 = vmatprep.subr.mxu0 0.0
        %2934 = vmatpush2.msra.mxu0 0.0
        %2935 = vmatprep.subr.mxu0 0.0
        %2936 = vmatpush2.msra.mxu0 0.0
        %2937 = vmatprep.subr.mxu0 0.0
        %2938 = vmatpush2.msra.mxu0 0.0
        %2939 = vmatprep.subr.mxu0 0.0
        %2940 = vmatpush2.msra.mxu0 0.0
        %2941 = vmatprep.subr.mxu0 0.0
        %2942 = vmatpush2.msra.mxu0 0.0
        %2943 = vmatprep.subr.mxu0 0.0
        %2944 = vmatpush2.msra.mxu0 0.0
        %2945 = vmatprep.subr.mxu0 0.0
        %2946 = vmatpush2.msra.mxu0 0.0
        %2947 = vmatprep.subr.mxu0 0.0
        %2948 = vmatpush2.msra.mxu0 0.0
        %2949 = vmatprep.subr.mxu0 0.0
        %2950 = vmatpush2.msra.mxu0 0.0
        %2951 = vmatprep.subr.mxu0 0.0
        %2952 = vmatpush2.msra.mxu0 0.0
        %2953 = vmatprep.subr.mxu0 0.0
        %2954 = vmatpush2.msra.mxu0 0.0
        %2955 = vmatprep.subr.mxu0 0.0
        %2956 = vmatpush2.msra.mxu0 0.0
        %2957 = vmatprep.subr.mxu0 0.0
        %2958 = vmatpush2.msra.mxu0 0.0
        %2959 = vmatprep.subr.mxu0 0.0
        %2960 = vmatpush2.msra.mxu0 0.0
        %2961 = vmatprep.mubr.f32.mxu0 0.0
        %v2962 = vand.u32 %v2580, 4294901760
        %2963 = vmatmul.mubr.f32.gmra.mxu0 %v2962
        %v2964 = vpop.f32.mrf.mxu0
        %v2965 = vadd.f32 %v2888, %v2964
        %v2966 = vpop.f32.mrf.mxu0
        %2967 = vdwg.mxu0
        %2968 = vmatprep.subr.mxu0 0.0
        %2969 = vmatpush1.msra.mxu0 0.0
        %2970 = vmatprep.subr.mxu0 0.0
        %2971 = vmatpush1.msra.mxu0 0.0
        %2972 = vmatprep.subr.mxu0 0.0
        %2973 = vmatpush1.msra.mxu0 0.0
        %2974 = vmatprep.subr.mxu0 0.0
        %2975 = vmatpush1.msra.mxu0 0.0
        %2976 = vmatprep.subr.mxu0 0.0
        %2977 = vmatpush1.msra.mxu0 0.0
        %2978 = vmatprep.subr.mxu0 0.0
        %2979 = vmatpush1.msra.mxu0 0.0
        %2980 = vmatprep.subr.mxu0 0.0
        %2981 = vmatpush1.msra.mxu0 0.0
        %2982 = vmatprep.subr.mxu0 0.0
        %2983 = vmatpush1.msra.mxu0 0.0
        %2984 = vmatprep.subr.mxu0 0.0
        %2985 = vmatpush1.msra.mxu0 0.0
        %2986 = vmatprep.subr.mxu0 0.0
        %2987 = vmatpush1.msra.mxu0 0.0
        %2988 = vmatprep.subr.mxu0 0.0
        %2989 = vmatpush1.msra.mxu0 0.0
        %2990 = vmatprep.subr.mxu0 0.0
        %2991 = vmatpush1.msra.mxu0 0.0
        %2992 = vmatprep.subr.mxu0 0.0
        %2993 = vmatpush1.msra.mxu0 0.0
        %2994 = vmatprep.subr.mxu0 0.0
        %2995 = vmatpush1.msra.mxu0 0.0
        %2996 = vmatprep.subr.mxu0 0.0
        %v2997 = vand.u32 %v2118, 4294901760
        %2998 = vmatpush1.msra.mxu0 %v2997
        %2999 = vmatprep.subr.mxu0 0.0
        %v3000 = vand.u32 %v2112, 4294901760
        %3001 = vmatpush1.msra.mxu0 %v3000
        %3002 = vmatprep.subr.mxu0 0.0
        %3003 = vmatpush2.msra.mxu0 0.0
        %3004 = vmatprep.subr.mxu0 0.0
        %3005 = vmatpush2.msra.mxu0 0.0
        %3006 = vmatprep.subr.mxu0 0.0
        %3007 = vmatpush2.msra.mxu0 0.0
        %3008 = vmatprep.subr.mxu0 0.0
        %3009 = vmatpush2.msra.mxu0 0.0
        %3010 = vmatprep.subr.mxu0 0.0
        %3011 = vmatpush2.msra.mxu0 0.0
        %3012 = vmatprep.subr.mxu0 0.0
        %3013 = vmatpush2.msra.mxu0 0.0
        %3014 = vmatprep.subr.mxu0 0.0
        %3015 = vmatpush2.msra.mxu0 0.0
        %3016 = vmatprep.subr.mxu0 0.0
        %3017 = vmatpush2.msra.mxu0 0.0
        %3018 = vmatprep.subr.mxu0 0.0
        %3019 = vmatpush2.msra.mxu0 0.0
        %3020 = vmatprep.subr.mxu0 0.0
        %3021 = vmatpush2.msra.mxu0 0.0
        %3022 = vmatprep.subr.mxu0 0.0
        %3023 = vmatpush2.msra.mxu0 0.0
        %3024 = vmatprep.subr.mxu0 0.0
        %3025 = vmatpush2.msra.mxu0 0.0
        %3026 = vmatprep.subr.mxu0 0.0
        %3027 = vmatpush2.msra.mxu0 0.0
        %3028 = vmatprep.subr.mxu0 0.0
        %3029 = vmatpush2.msra.mxu0 0.0
        %3030 = vmatprep.subr.mxu0 0.0
        %3031 = vmatpush2.msra.mxu0 0.0
        %3032 = vmatprep.subr.mxu0 0.0
        %3033 = vmatpush2.msra.mxu0 0.0
        %3034 = vmatprep.mubr.f32.mxu0 0.0
        %v3035 = vand.u32 %v2580, 4294901760
        %3036 = vmatmul.mubr.f32.gmra.mxu0 %v3035
        %v3037 = vpop.f32.mrf.mxu0
        %v3038 = vadd.f32 %v2965, %v3037
        %v3039 = vpop.f32.mrf.mxu0
        %3040 = vdwg.mxu0
        %v3042 = vsel %vm217, %v2104, 0
        %3044 = vmatprep.subr.mxu0 0.0
        %3045 = vmatpush1.msra.mxu0 0.0
        %3046 = vmatprep.subr.mxu0 0.0
        %3047 = vmatpush1.msra.mxu0 0.0
        %3048 = vmatprep.subr.mxu0 0.0
        %3049 = vmatpush1.msra.mxu0 0.0
        %3050 = vmatprep.subr.mxu0 0.0
        %3051 = vmatpush1.msra.mxu0 0.0
        %3052 = vmatprep.subr.mxu0 0.0
        %3053 = vmatpush1.msra.mxu0 0.0
        %3054 = vmatprep.subr.mxu0 0.0
        %3055 = vmatpush1.msra.mxu0 0.0
        %3056 = vmatprep.subr.mxu0 0.0
        %3057 = vmatpush1.msra.mxu0 0.0
        %3058 = vmatprep.subr.mxu0 0.0
        %3059 = vmatpush1.msra.mxu0 0.0
        %3060 = vmatprep.subr.mxu0 0.0
        %3061 = vmatpush1.msra.mxu0 0.0
        %3062 = vmatprep.subr.mxu0 0.0
        %3063 = vmatpush1.msra.mxu0 0.0
        %3064 = vmatprep.subr.mxu0 0.0
        %3065 = vmatpush1.msra.mxu0 0.0
        %3066 = vmatprep.subr.mxu0 0.0
        %3067 = vmatpush1.msra.mxu0 0.0
        %3068 = vmatprep.subr.mxu0 0.0
        %3069 = vmatpush1.msra.mxu0 0.0
        %3070 = vmatprep.subr.mxu0 0.0
        %3071 = vmatpush1.msra.mxu0 0.0
        %3072 = vmatprep.subr.mxu0 0.0
        %v3073 = vand.u32 %v2118, 4294901760
        %3074 = vmatpush1.msra.mxu0 %v3073
        %3075 = vmatprep.subr.mxu0 0.0
        %v3076 = vand.u32 %v2112, 4294901760
        %3077 = vmatpush1.msra.mxu0 %v3076
        %3078 = vmatprep.subr.mxu0 0.0
        %3079 = vmatpush2.msra.mxu0 0.0
        %3080 = vmatprep.subr.mxu0 0.0
        %3081 = vmatpush2.msra.mxu0 0.0
        %3082 = vmatprep.subr.mxu0 0.0
        %3083 = vmatpush2.msra.mxu0 0.0
        %3084 = vmatprep.subr.mxu0 0.0
        %3085 = vmatpush2.msra.mxu0 0.0
        %3086 = vmatprep.subr.mxu0 0.0
        %3087 = vmatpush2.msra.mxu0 0.0
        %3088 = vmatprep.subr.mxu0 0.0
        %3089 = vmatpush2.msra.mxu0 0.0
        %3090 = vmatprep.subr.mxu0 0.0
        %3091 = vmatpush2.msra.mxu0 0.0
        %3092 = vmatprep.subr.mxu0 0.0
        %3093 = vmatpush2.msra.mxu0 0.0
        %3094 = vmatprep.subr.mxu0 0.0
        %3095 = vmatpush2.msra.mxu0 0.0
        %3096 = vmatprep.subr.mxu0 0.0
        %3097 = vmatpush2.msra.mxu0 0.0
        %3098 = vmatprep.subr.mxu0 0.0
        %3099 = vmatpush2.msra.mxu0 0.0
        %3100 = vmatprep.subr.mxu0 0.0
        %3101 = vmatpush2.msra.mxu0 0.0
        %3102 = vmatprep.subr.mxu0 0.0
        %3103 = vmatpush2.msra.mxu0 0.0
        %3104 = vmatprep.subr.mxu0 0.0
        %3105 = vmatpush2.msra.mxu0 0.0
        %3106 = vmatprep.subr.mxu0 0.0
        %3107 = vmatpush2.msra.mxu0 0.0
        %3108 = vmatprep.subr.mxu0 0.0
        %3109 = vmatpush2.msra.mxu0 0.0
        %3110 = vmatprep.mubr.f32.mxu0 0.0
        %v3111 = vand.u32 %v3042, 4294901760
        %v3112 = vsub.f32 %v3042, %v3111
        %v3113 = vand.u32 %v3112, 4294901760
        %v3114 = vsub.f32 %v3112, %v3113
        %v3115 = vand.u32 %v3114, 4294901760
        %3116 = vmatmul.mubr.f32.gmra.mxu0 %v3115
        %v3117 = vpop.f32.mrf.mxu0
        %v3118 = vadd.f32 0.0, %v3117
        %v3119 = vpop.f32.mrf.mxu0
        %3120 = vdwg.mxu0
        %3121 = vmatprep.subr.mxu0 0.0
        %3122 = vmatpush1.msra.mxu0 0.0
        %3123 = vmatprep.subr.mxu0 0.0
        %3124 = vmatpush1.msra.mxu0 0.0
        %3125 = vmatprep.subr.mxu0 0.0
        %3126 = vmatpush1.msra.mxu0 0.0
        %3127 = vmatprep.subr.mxu0 0.0
        %3128 = vmatpush1.msra.mxu0 0.0
        %3129 = vmatprep.subr.mxu0 0.0
        %3130 = vmatpush1.msra.mxu0 0.0
        %3131 = vmatprep.subr.mxu0 0.0
        %3132 = vmatpush1.msra.mxu0 0.0
        %3133 = vmatprep.subr.mxu0 0.0
        %3134 = vmatpush1.msra.mxu0 0.0
        %3135 = vmatprep.subr.mxu0 0.0
        %3136 = vmatpush1.msra.mxu0 0.0
        %3137 = vmatprep.subr.mxu0 0.0
        %3138 = vmatpush1.msra.mxu0 0.0
        %3139 = vmatprep.subr.mxu0 0.0
        %3140 = vmatpush1.msra.mxu0 0.0
        %3141 = vmatprep.subr.mxu0 0.0
        %3142 = vmatpush1.msra.mxu0 0.0
        %3143 = vmatprep.subr.mxu0 0.0
        %3144 = vmatpush1.msra.mxu0 0.0
        %3145 = vmatprep.subr.mxu0 0.0
        %3146 = vmatpush1.msra.mxu0 0.0
        %3147 = vmatprep.subr.mxu0 0.0
        %3148 = vmatpush1.msra.mxu0 0.0
        %3149 = vmatprep.subr.mxu0 0.0
        %v3150 = vand.u32 %v2118, 4294901760
        %v3151 = vsub.f32 %v2118, %v3150
        %v3152 = vand.u32 %v3151, 4294901760
        %v3153 = vsub.f32 %v3151, %v3152
        %v3154 = vand.u32 %v3153, 4294901760
        %3155 = vmatpush1.msra.mxu0 %v3154
        %3156 = vmatprep.subr.mxu0 0.0
        %v3157 = vand.u32 %v2112, 4294901760
        %v3158 = vsub.f32 %v2112, %v3157
        %v3159 = vand.u32 %v3158, 4294901760
        %v3160 = vsub.f32 %v3158, %v3159
        %v3161 = vand.u32 %v3160, 4294901760
        %3162 = vmatpush1.msra.mxu0 %v3161
        %3163 = vmatprep.subr.mxu0 0.0
        %3164 = vmatpush2.msra.mxu0 0.0
        %3165 = vmatprep.subr.mxu0 0.0
        %3166 = vmatpush2.msra.mxu0 0.0
        %3167 = vmatprep.subr.mxu0 0.0
        %3168 = vmatpush2.msra.mxu0 0.0
        %3169 = vmatprep.subr.mxu0 0.0
        %3170 = vmatpush2.msra.mxu0 0.0
        %3171 = vmatprep.subr.mxu0 0.0
        %3172 = vmatpush2.msra.mxu0 0.0
        %3173 = vmatprep.subr.mxu0 0.0
        %3174 = vmatpush2.msra.mxu0 0.0
        %3175 = vmatprep.subr.mxu0 0.0
        %3176 = vmatpush2.msra.mxu0 0.0
        %3177 = vmatprep.subr.mxu0 0.0
        %3178 = vmatpush2.msra.mxu0 0.0
        %3179 = vmatprep.subr.mxu0 0.0
        %3180 = vmatpush2.msra.mxu0 0.0
        %3181 = vmatprep.subr.mxu0 0.0
        %3182 = vmatpush2.msra.mxu0 0.0
        %3183 = vmatprep.subr.mxu0 0.0
        %3184 = vmatpush2.msra.mxu0 0.0
        %3185 = vmatprep.subr.mxu0 0.0
        %3186 = vmatpush2.msra.mxu0 0.0
        %3187 = vmatprep.subr.mxu0 0.0
        %3188 = vmatpush2.msra.mxu0 0.0
        %3189 = vmatprep.subr.mxu0 0.0
        %3190 = vmatpush2.msra.mxu0 0.0
        %3191 = vmatprep.subr.mxu0 0.0
        %3192 = vmatpush2.msra.mxu0 0.0
        %3193 = vmatprep.subr.mxu0 0.0
        %3194 = vmatpush2.msra.mxu0 0.0
        %3195 = vmatprep.mubr.f32.mxu0 0.0
        %v3196 = vand.u32 %v3042, 4294901760
        %3197 = vmatmul.mubr.f32.gmra.mxu0 %v3196
        %v3198 = vpop.f32.mrf.mxu0
        %v3199 = vadd.f32 %v3118, %v3198
        %v3200 = vpop.f32.mrf.mxu0
        %3201 = vdwg.mxu0
        %3202 = vmatprep.subr.mxu0 0.0
        %3203 = vmatpush1.msra.mxu0 0.0
        %3204 = vmatprep.subr.mxu0 0.0
        %3205 = vmatpush1.msra.mxu0 0.0
        %3206 = vmatprep.subr.mxu0 0.0
        %3207 = vmatpush1.msra.mxu0 0.0
        %3208 = vmatprep.subr.mxu0 0.0
        %3209 = vmatpush1.msra.mxu0 0.0
        %3210 = vmatprep.subr.mxu0 0.0
        %3211 = vmatpush1.msra.mxu0 0.0
        %3212 = vmatprep.subr.mxu0 0.0
        %3213 = vmatpush1.msra.mxu0 0.0
        %3214 = vmatprep.subr.mxu0 0.0
        %3215 = vmatpush1.msra.mxu0 0.0
        %3216 = vmatprep.subr.mxu0 0.0
        %3217 = vmatpush1.msra.mxu0 0.0
        %3218 = vmatprep.subr.mxu0 0.0
        %3219 = vmatpush1.msra.mxu0 0.0
        %3220 = vmatprep.subr.mxu0 0.0
        %3221 = vmatpush1.msra.mxu0 0.0
        %3222 = vmatprep.subr.mxu0 0.0
        %3223 = vmatpush1.msra.mxu0 0.0
        %3224 = vmatprep.subr.mxu0 0.0
        %3225 = vmatpush1.msra.mxu0 0.0
        %3226 = vmatprep.subr.mxu0 0.0
        %3227 = vmatpush1.msra.mxu0 0.0
        %3228 = vmatprep.subr.mxu0 0.0
        %3229 = vmatpush1.msra.mxu0 0.0
        %3230 = vmatprep.subr.mxu0 0.0
        %v3231 = vand.u32 %v2118, 4294901760
        %v3232 = vsub.f32 %v2118, %v3231
        %3233 = vmatpush1.msra.mxu0 %v3232
        %3234 = vmatprep.subr.mxu0 0.0
        %v3235 = vand.u32 %v2112, 4294901760
        %v3236 = vsub.f32 %v2112, %v3235
        %3237 = vmatpush1.msra.mxu0 %v3236
        %3238 = vmatprep.subr.mxu0 0.0
        %3239 = vmatpush2.msra.mxu0 0.0
        %3240 = vmatprep.subr.mxu0 0.0
        %3241 = vmatpush2.msra.mxu0 0.0
        %3242 = vmatprep.subr.mxu0 0.0
        %3243 = vmatpush2.msra.mxu0 0.0
        %3244 = vmatprep.subr.mxu0 0.0
        %3245 = vmatpush2.msra.mxu0 0.0
        %3246 = vmatprep.subr.mxu0 0.0
        %3247 = vmatpush2.msra.mxu0 0.0
        %3248 = vmatprep.subr.mxu0 0.0
        %3249 = vmatpush2.msra.mxu0 0.0
        %3250 = vmatprep.subr.mxu0 0.0
        %3251 = vmatpush2.msra.mxu0 0.0
        %3252 = vmatprep.subr.mxu0 0.0
        %3253 = vmatpush2.msra.mxu0 0.0
        %3254 = vmatprep.subr.mxu0 0.0
        %3255 = vmatpush2.msra.mxu0 0.0
        %3256 = vmatprep.subr.mxu0 0.0
        %3257 = vmatpush2.msra.mxu0 0.0
        %3258 = vmatprep.subr.mxu0 0.0
        %3259 = vmatpush2.msra.mxu0 0.0
        %3260 = vmatprep.subr.mxu0 0.0
        %3261 = vmatpush2.msra.mxu0 0.0
        %3262 = vmatprep.subr.mxu0 0.0
        %3263 = vmatpush2.msra.mxu0 0.0
        %3264 = vmatprep.subr.mxu0 0.0
        %3265 = vmatpush2.msra.mxu0 0.0
        %3266 = vmatprep.subr.mxu0 0.0
        %3267 = vmatpush2.msra.mxu0 0.0
        %3268 = vmatprep.subr.mxu0 0.0
        %3269 = vmatpush2.msra.mxu0 0.0
        %3270 = vmatprep.mubr.f32.mxu0 0.0
        %v3271 = vand.u32 %v3042, 4294901760
        %v3272 = vsub.f32 %v3042, %v3271
        %3273 = vmatmul.mubr.f32.gmra.mxu0 %v3272
        %v3274 = vpop.f32.mrf.mxu0
        %v3275 = vadd.f32 %v3199, %v3274
        %v3276 = vpop.f32.mrf.mxu0
        %3277 = vdwg.mxu0
        %3278 = vmatprep.subr.mxu0 0.0
        %3279 = vmatpush1.msra.mxu0 0.0
        %3280 = vmatprep.subr.mxu0 0.0
        %3281 = vmatpush1.msra.mxu0 0.0
        %3282 = vmatprep.subr.mxu0 0.0
        %3283 = vmatpush1.msra.mxu0 0.0
        %3284 = vmatprep.subr.mxu0 0.0
        %3285 = vmatpush1.msra.mxu0 0.0
        %3286 = vmatprep.subr.mxu0 0.0
        %3287 = vmatpush1.msra.mxu0 0.0
        %3288 = vmatprep.subr.mxu0 0.0
        %3289 = vmatpush1.msra.mxu0 0.0
        %3290 = vmatprep.subr.mxu0 0.0
        %3291 = vmatpush1.msra.mxu0 0.0
        %3292 = vmatprep.subr.mxu0 0.0
        %3293 = vmatpush1.msra.mxu0 0.0
        %3294 = vmatprep.subr.mxu0 0.0
        %3295 = vmatpush1.msra.mxu0 0.0
        %3296 = vmatprep.subr.mxu0 0.0
        %3297 = vmatpush1.msra.mxu0 0.0
        %3298 = vmatprep.subr.mxu0 0.0
        %3299 = vmatpush1.msra.mxu0 0.0
        %3300 = vmatprep.subr.mxu0 0.0
        %3301 = vmatpush1.msra.mxu0 0.0
        %3302 = vmatprep.subr.mxu0 0.0
        %3303 = vmatpush1.msra.mxu0 0.0
        %3304 = vmatprep.subr.mxu0 0.0
        %3305 = vmatpush1.msra.mxu0 0.0
        %3306 = vmatprep.subr.mxu0 0.0
        %v3307 = vand.u32 %v2118, 4294901760
        %3308 = vmatpush1.msra.mxu0 %v3307
        %3309 = vmatprep.subr.mxu0 0.0
        %v3310 = vand.u32 %v2112, 4294901760
        %3311 = vmatpush1.msra.mxu0 %v3310
        %3312 = vmatprep.subr.mxu0 0.0
        %3313 = vmatpush2.msra.mxu0 0.0
        %3314 = vmatprep.subr.mxu0 0.0
        %3315 = vmatpush2.msra.mxu0 0.0
        %3316 = vmatprep.subr.mxu0 0.0
        %3317 = vmatpush2.msra.mxu0 0.0
        %3318 = vmatprep.subr.mxu0 0.0
        %3319 = vmatpush2.msra.mxu0 0.0
        %3320 = vmatprep.subr.mxu0 0.0
        %3321 = vmatpush2.msra.mxu0 0.0
        %3322 = vmatprep.subr.mxu0 0.0
        %3323 = vmatpush2.msra.mxu0 0.0
        %3324 = vmatprep.subr.mxu0 0.0
        %3325 = vmatpush2.msra.mxu0 0.0
        %3326 = vmatprep.subr.mxu0 0.0
        %3327 = vmatpush2.msra.mxu0 0.0
        %3328 = vmatprep.subr.mxu0 0.0
        %3329 = vmatpush2.msra.mxu0 0.0
        %3330 = vmatprep.subr.mxu0 0.0
        %3331 = vmatpush2.msra.mxu0 0.0
        %3332 = vmatprep.subr.mxu0 0.0
        %3333 = vmatpush2.msra.mxu0 0.0
        %3334 = vmatprep.subr.mxu0 0.0
        %3335 = vmatpush2.msra.mxu0 0.0
        %3336 = vmatprep.subr.mxu0 0.0
        %3337 = vmatpush2.msra.mxu0 0.0
        %3338 = vmatprep.subr.mxu0 0.0
        %3339 = vmatpush2.msra.mxu0 0.0
        %3340 = vmatprep.subr.mxu0 0.0
        %3341 = vmatpush2.msra.mxu0 0.0
        %3342 = vmatprep.subr.mxu0 0.0
        %3343 = vmatpush2.msra.mxu0 0.0
        %3344 = vmatprep.mubr.f32.mxu0 0.0
        %v3345 = vand.u32 %v3042, 4294901760
        %v3346 = vsub.f32 %v3042, %v3345
        %v3347 = vand.u32 %v3346, 4294901760
        %3348 = vmatmul.mubr.f32.gmra.mxu0 %v3347
        %v3349 = vpop.f32.mrf.mxu0
        %v3350 = vadd.f32 %v3275, %v3349
        %v3351 = vpop.f32.mrf.mxu0
        %3352 = vdwg.mxu0
        %3353 = vmatprep.subr.mxu0 0.0
        %3354 = vmatpush1.msra.mxu0 0.0
        %3355 = vmatprep.subr.mxu0 0.0
        %3356 = vmatpush1.msra.mxu0 0.0
        %3357 = vmatprep.subr.mxu0 0.0
        %3358 = vmatpush1.msra.mxu0 0.0
        %3359 = vmatprep.subr.mxu0 0.0
        %3360 = vmatpush1.msra.mxu0 0.0
        %3361 = vmatprep.subr.mxu0 0.0
        %3362 = vmatpush1.msra.mxu0 0.0
        %3363 = vmatprep.subr.mxu0 0.0
        %3364 = vmatpush1.msra.mxu0 0.0
        %3365 = vmatprep.subr.mxu0 0.0
        %3366 = vmatpush1.msra.mxu0 0.0
        %3367 = vmatprep.subr.mxu0 0.0
        %3368 = vmatpush1.msra.mxu0 0.0
        %3369 = vmatprep.subr.mxu0 0.0
        %3370 = vmatpush1.msra.mxu0 0.0
        %3371 = vmatprep.subr.mxu0 0.0
        %3372 = vmatpush1.msra.mxu0 0.0
        %3373 = vmatprep.subr.mxu0 0.0
        %3374 = vmatpush1.msra.mxu0 0.0
        %3375 = vmatprep.subr.mxu0 0.0
        %3376 = vmatpush1.msra.mxu0 0.0
        %3377 = vmatprep.subr.mxu0 0.0
        %3378 = vmatpush1.msra.mxu0 0.0
        %3379 = vmatprep.subr.mxu0 0.0
        %3380 = vmatpush1.msra.mxu0 0.0
        %3381 = vmatprep.subr.mxu0 0.0
        %v3382 = vand.u32 %v2118, 4294901760
        %v3383 = vsub.f32 %v2118, %v3382
        %v3384 = vand.u32 %v3383, 4294901760
        %3385 = vmatpush1.msra.mxu0 %v3384
        %3386 = vmatprep.subr.mxu0 0.0
        %v3387 = vand.u32 %v2112, 4294901760
        %v3388 = vsub.f32 %v2112, %v3387
        %v3389 = vand.u32 %v3388, 4294901760
        %3390 = vmatpush1.msra.mxu0 %v3389
        %3391 = vmatprep.subr.mxu0 0.0
        %3392 = vmatpush2.msra.mxu0 0.0
        %3393 = vmatprep.subr.mxu0 0.0
        %3394 = vmatpush2.msra.mxu0 0.0
        %3395 = vmatprep.subr.mxu0 0.0
        %3396 = vmatpush2.msra.mxu0 0.0
        %3397 = vmatprep.subr.mxu0 0.0
        %3398 = vmatpush2.msra.mxu0 0.0
        %3399 = vmatprep.subr.mxu0 0.0
        %3400 = vmatpush2.msra.mxu0 0.0
        %3401 = vmatprep.subr.mxu0 0.0
        %3402 = vmatpush2.msra.mxu0 0.0
        %3403 = vmatprep.subr.mxu0 0.0
        %3404 = vmatpush2.msra.mxu0 0.0
        %3405 = vmatprep.subr.mxu0 0.0
        %3406 = vmatpush2.msra.mxu0 0.0
        %3407 = vmatprep.subr.mxu0 0.0
        %3408 = vmatpush2.msra.mxu0 0.0
        %3409 = vmatprep.subr.mxu0 0.0
        %3410 = vmatpush2.msra.mxu0 0.0
        %3411 = vmatprep.subr.mxu0 0.0
        %3412 = vmatpush2.msra.mxu0 0.0
        %3413 = vmatprep.subr.mxu0 0.0
        %3414 = vmatpush2.msra.mxu0 0.0
        %3415 = vmatprep.subr.mxu0 0.0
        %3416 = vmatpush2.msra.mxu0 0.0
        %3417 = vmatprep.subr.mxu0 0.0
        %3418 = vmatpush2.msra.mxu0 0.0
        %3419 = vmatprep.subr.mxu0 0.0
        %3420 = vmatpush2.msra.mxu0 0.0
        %3421 = vmatprep.subr.mxu0 0.0
        %3422 = vmatpush2.msra.mxu0 0.0
        %3423 = vmatprep.mubr.f32.mxu0 0.0
        %v3424 = vand.u32 %v3042, 4294901760
        %3425 = vmatmul.mubr.f32.gmra.mxu0 %v3424
        %v3426 = vpop.f32.mrf.mxu0
        %v3427 = vadd.f32 %v3350, %v3426
        %v3428 = vpop.f32.mrf.mxu0
        %3429 = vdwg.mxu0
        %3430 = vmatprep.subr.mxu0 0.0
        %3431 = vmatpush1.msra.mxu0 0.0
        %3432 = vmatprep.subr.mxu0 0.0
        %3433 = vmatpush1.msra.mxu0 0.0
        %3434 = vmatprep.subr.mxu0 0.0
        %3435 = vmatpush1.msra.mxu0 0.0
        %3436 = vmatprep.subr.mxu0 0.0
        %3437 = vmatpush1.msra.mxu0 0.0
        %3438 = vmatprep.subr.mxu0 0.0
        %3439 = vmatpush1.msra.mxu0 0.0
        %3440 = vmatprep.subr.mxu0 0.0
        %3441 = vmatpush1.msra.mxu0 0.0
        %3442 = vmatprep.subr.mxu0 0.0
        %3443 = vmatpush1.msra.mxu0 0.0
        %3444 = vmatprep.subr.mxu0 0.0
        %3445 = vmatpush1.msra.mxu0 0.0
        %3446 = vmatprep.subr.mxu0 0.0
        %3447 = vmatpush1.msra.mxu0 0.0
        %3448 = vmatprep.subr.mxu0 0.0
        %3449 = vmatpush1.msra.mxu0 0.0
        %3450 = vmatprep.subr.mxu0 0.0
        %3451 = vmatpush1.msra.mxu0 0.0
        %3452 = vmatprep.subr.mxu0 0.0
        %3453 = vmatpush1.msra.mxu0 0.0
        %3454 = vmatprep.subr.mxu0 0.0
        %3455 = vmatpush1.msra.mxu0 0.0
        %3456 = vmatprep.subr.mxu0 0.0
        %3457 = vmatpush1.msra.mxu0 0.0
        %3458 = vmatprep.subr.mxu0 0.0
        %v3459 = vand.u32 %v2118, 4294901760
        %3460 = vmatpush1.msra.mxu0 %v3459
        %3461 = vmatprep.subr.mxu0 0.0
        %v3462 = vand.u32 %v2112, 4294901760
        %3463 = vmatpush1.msra.mxu0 %v3462
        %3464 = vmatprep.subr.mxu0 0.0
        %3465 = vmatpush2.msra.mxu0 0.0
        %3466 = vmatprep.subr.mxu0 0.0
        %3467 = vmatpush2.msra.mxu0 0.0
        %3468 = vmatprep.subr.mxu0 0.0
        %3469 = vmatpush2.msra.mxu0 0.0
        %3470 = vmatprep.subr.mxu0 0.0
        %3471 = vmatpush2.msra.mxu0 0.0
        %3472 = vmatprep.subr.mxu0 0.0
        %3473 = vmatpush2.msra.mxu0 0.0
        %3474 = vmatprep.subr.mxu0 0.0
        %3475 = vmatpush2.msra.mxu0 0.0
        %3476 = vmatprep.subr.mxu0 0.0
        %3477 = vmatpush2.msra.mxu0 0.0
        %3478 = vmatprep.subr.mxu0 0.0
        %3479 = vmatpush2.msra.mxu0 0.0
        %3480 = vmatprep.subr.mxu0 0.0
        %3481 = vmatpush2.msra.mxu0 0.0
        %3482 = vmatprep.subr.mxu0 0.0
        %3483 = vmatpush2.msra.mxu0 0.0
        %3484 = vmatprep.subr.mxu0 0.0
        %3485 = vmatpush2.msra.mxu0 0.0
        %3486 = vmatprep.subr.mxu0 0.0
        %3487 = vmatpush2.msra.mxu0 0.0
        %3488 = vmatprep.subr.mxu0 0.0
        %3489 = vmatpush2.msra.mxu0 0.0
        %3490 = vmatprep.subr.mxu0 0.0
        %3491 = vmatpush2.msra.mxu0 0.0
        %3492 = vmatprep.subr.mxu0 0.0
        %3493 = vmatpush2.msra.mxu0 0.0
        %3494 = vmatprep.subr.mxu0 0.0
        %3495 = vmatpush2.msra.mxu0 0.0
        %3496 = vmatprep.mubr.f32.mxu0 0.0
        %v3497 = vand.u32 %v3042, 4294901760
        %3498 = vmatmul.mubr.f32.gmra.mxu0 %v3497
        %v3499 = vpop.f32.mrf.mxu0
        %v3500 = vadd.f32 %v3427, %v3499
        %v3501 = vpop.f32.mrf.mxu0
        %3502 = vdwg.mxu0
        %v3504 = vsel %vm217, %v2105, 0
        %3506 = vmatprep.subr.mxu0 0.0
        %3507 = vmatpush1.msra.mxu0 0.0
        %3508 = vmatprep.subr.mxu0 0.0
        %3509 = vmatpush1.msra.mxu0 0.0
        %3510 = vmatprep.subr.mxu0 0.0
        %3511 = vmatpush1.msra.mxu0 0.0
        %3512 = vmatprep.subr.mxu0 0.0
        %3513 = vmatpush1.msra.mxu0 0.0
        %3514 = vmatprep.subr.mxu0 0.0
        %3515 = vmatpush1.msra.mxu0 0.0
        %3516 = vmatprep.subr.mxu0 0.0
        %3517 = vmatpush1.msra.mxu0 0.0
        %3518 = vmatprep.subr.mxu0 0.0
        %3519 = vmatpush1.msra.mxu0 0.0
        %3520 = vmatprep.subr.mxu0 0.0
        %3521 = vmatpush1.msra.mxu0 0.0
        %3522 = vmatprep.subr.mxu0 0.0
        %3523 = vmatpush1.msra.mxu0 0.0
        %3524 = vmatprep.subr.mxu0 0.0
        %3525 = vmatpush1.msra.mxu0 0.0
        %3526 = vmatprep.subr.mxu0 0.0
        %3527 = vmatpush1.msra.mxu0 0.0
        %3528 = vmatprep.subr.mxu0 0.0
        %3529 = vmatpush1.msra.mxu0 0.0
        %3530 = vmatprep.subr.mxu0 0.0
        %3531 = vmatpush1.msra.mxu0 0.0
        %3532 = vmatprep.subr.mxu0 0.0
        %3533 = vmatpush1.msra.mxu0 0.0
        %3534 = vmatprep.subr.mxu0 0.0
        %v3535 = vand.u32 %v2118, 4294901760
        %3536 = vmatpush1.msra.mxu0 %v3535
        %3537 = vmatprep.subr.mxu0 0.0
        %v3538 = vand.u32 %v2112, 4294901760
        %3539 = vmatpush1.msra.mxu0 %v3538
        %3540 = vmatprep.subr.mxu0 0.0
        %3541 = vmatpush2.msra.mxu0 0.0
        %3542 = vmatprep.subr.mxu0 0.0
        %3543 = vmatpush2.msra.mxu0 0.0
        %3544 = vmatprep.subr.mxu0 0.0
        %3545 = vmatpush2.msra.mxu0 0.0
        %3546 = vmatprep.subr.mxu0 0.0
        %3547 = vmatpush2.msra.mxu0 0.0
        %3548 = vmatprep.subr.mxu0 0.0
        %3549 = vmatpush2.msra.mxu0 0.0
        %3550 = vmatprep.subr.mxu0 0.0
        %3551 = vmatpush2.msra.mxu0 0.0
        %3552 = vmatprep.subr.mxu0 0.0
        %3553 = vmatpush2.msra.mxu0 0.0
        %3554 = vmatprep.subr.mxu0 0.0
        %3555 = vmatpush2.msra.mxu0 0.0
        %3556 = vmatprep.subr.mxu0 0.0
        %3557 = vmatpush2.msra.mxu0 0.0
        %3558 = vmatprep.subr.mxu0 0.0
        %3559 = vmatpush2.msra.mxu0 0.0
        %3560 = vmatprep.subr.mxu0 0.0
        %3561 = vmatpush2.msra.mxu0 0.0
        %3562 = vmatprep.subr.mxu0 0.0
        %3563 = vmatpush2.msra.mxu0 0.0
        %3564 = vmatprep.subr.mxu0 0.0
        %3565 = vmatpush2.msra.mxu0 0.0
        %3566 = vmatprep.subr.mxu0 0.0
        %3567 = vmatpush2.msra.mxu0 0.0
        %3568 = vmatprep.subr.mxu0 0.0
        %3569 = vmatpush2.msra.mxu0 0.0
        %3570 = vmatprep.subr.mxu0 0.0
        %3571 = vmatpush2.msra.mxu0 0.0
        %3572 = vmatprep.mubr.f32.mxu0 0.0
        %v3573 = vand.u32 %v3504, 4294901760
        %v3574 = vsub.f32 %v3504, %v3573
        %v3575 = vand.u32 %v3574, 4294901760
        %v3576 = vsub.f32 %v3574, %v3575
        %v3577 = vand.u32 %v3576, 4294901760
        %3578 = vmatmul.mubr.f32.gmra.mxu0 %v3577
        %v3579 = vpop.f32.mrf.mxu0
        %v3580 = vadd.f32 0.0, %v3579
        %v3581 = vpop.f32.mrf.mxu0
        %3582 = vdwg.mxu0
        %3583 = vmatprep.subr.mxu0 0.0
        %3584 = vmatpush1.msra.mxu0 0.0
        %3585 = vmatprep.subr.mxu0 0.0
        %3586 = vmatpush1.msra.mxu0 0.0
        %3587 = vmatprep.subr.mxu0 0.0
        %3588 = vmatpush1.msra.mxu0 0.0
        %3589 = vmatprep.subr.mxu0 0.0
        %3590 = vmatpush1.msra.mxu0 0.0
        %3591 = vmatprep.subr.mxu0 0.0
        %3592 = vmatpush1.msra.mxu0 0.0
        %3593 = vmatprep.subr.mxu0 0.0
        %3594 = vmatpush1.msra.mxu0 0.0
        %3595 = vmatprep.subr.mxu0 0.0
        %3596 = vmatpush1.msra.mxu0 0.0
        %3597 = vmatprep.subr.mxu0 0.0
        %3598 = vmatpush1.msra.mxu0 0.0
        %3599 = vmatprep.subr.mxu0 0.0
        %3600 = vmatpush1.msra.mxu0 0.0
        %3601 = vmatprep.subr.mxu0 0.0
        %3602 = vmatpush1.msra.mxu0 0.0
        %3603 = vmatprep.subr.mxu0 0.0
        %3604 = vmatpush1.msra.mxu0 0.0
        %3605 = vmatprep.subr.mxu0 0.0
        %3606 = vmatpush1.msra.mxu0 0.0
        %3607 = vmatprep.subr.mxu0 0.0
        %3608 = vmatpush1.msra.mxu0 0.0
        %3609 = vmatprep.subr.mxu0 0.0
        %3610 = vmatpush1.msra.mxu0 0.0
        %3611 = vmatprep.subr.mxu0 0.0
        %v3612 = vand.u32 %v2118, 4294901760
        %v3613 = vsub.f32 %v2118, %v3612
        %v3614 = vand.u32 %v3613, 4294901760
        %v3615 = vsub.f32 %v3613, %v3614
        %v3616 = vand.u32 %v3615, 4294901760
        %3617 = vmatpush1.msra.mxu0 %v3616
        %3618 = vmatprep.subr.mxu0 0.0
        %v3619 = vand.u32 %v2112, 4294901760
        %v3620 = vsub.f32 %v2112, %v3619
        %v3621 = vand.u32 %v3620, 4294901760
        %v3622 = vsub.f32 %v3620, %v3621
        %v3623 = vand.u32 %v3622, 4294901760
        %3624 = vmatpush1.msra.mxu0 %v3623
        %3625 = vmatprep.subr.mxu0 0.0
        %3626 = vmatpush2.msra.mxu0 0.0
        %3627 = vmatprep.subr.mxu0 0.0
        %3628 = vmatpush2.msra.mxu0 0.0
        %3629 = vmatprep.subr.mxu0 0.0
        %3630 = vmatpush2.msra.mxu0 0.0
        %3631 = vmatprep.subr.mxu0 0.0
        %3632 = vmatpush2.msra.mxu0 0.0
        %3633 = vmatprep.subr.mxu0 0.0
        %3634 = vmatpush2.msra.mxu0 0.0
        %3635 = vmatprep.subr.mxu0 0.0
        %3636 = vmatpush2.msra.mxu0 0.0
        %3637 = vmatprep.subr.mxu0 0.0
        %3638 = vmatpush2.msra.mxu0 0.0
        %3639 = vmatprep.subr.mxu0 0.0
        %3640 = vmatpush2.msra.mxu0 0.0
        %3641 = vmatprep.subr.mxu0 0.0
        %3642 = vmatpush2.msra.mxu0 0.0
        %3643 = vmatprep.subr.mxu0 0.0
        %3644 = vmatpush2.msra.mxu0 0.0
        %3645 = vmatprep.subr.mxu0 0.0
        %3646 = vmatpush2.msra.mxu0 0.0
        %3647 = vmatprep.subr.mxu0 0.0
        %3648 = vmatpush2.msra.mxu0 0.0
        %3649 = vmatprep.subr.mxu0 0.0
        %3650 = vmatpush2.msra.mxu0 0.0
        %3651 = vmatprep.subr.mxu0 0.0
        %3652 = vmatpush2.msra.mxu0 0.0
        %3653 = vmatprep.subr.mxu0 0.0
        %3654 = vmatpush2.msra.mxu0 0.0
        %3655 = vmatprep.subr.mxu0 0.0
        %3656 = vmatpush2.msra.mxu0 0.0
        %3657 = vmatprep.mubr.f32.mxu0 0.0
        %v3658 = vand.u32 %v3504, 4294901760
        %3659 = vmatmul.mubr.f32.gmra.mxu0 %v3658
        %v3660 = vpop.f32.mrf.mxu0
        %v3661 = vadd.f32 %v3580, %v3660
        %v3662 = vpop.f32.mrf.mxu0
        %3663 = vdwg.mxu0
        %3664 = vmatprep.subr.mxu0 0.0
        %3665 = vmatpush1.msra.mxu0 0.0
        %3666 = vmatprep.subr.mxu0 0.0
        %3667 = vmatpush1.msra.mxu0 0.0
        %3668 = vmatprep.subr.mxu0 0.0
        %3669 = vmatpush1.msra.mxu0 0.0
        %3670 = vmatprep.subr.mxu0 0.0
        %3671 = vmatpush1.msra.mxu0 0.0
        %3672 = vmatprep.subr.mxu0 0.0
        %3673 = vmatpush1.msra.mxu0 0.0
        %3674 = vmatprep.subr.mxu0 0.0
        %3675 = vmatpush1.msra.mxu0 0.0
        %3676 = vmatprep.subr.mxu0 0.0
        %3677 = vmatpush1.msra.mxu0 0.0
        %3678 = vmatprep.subr.mxu0 0.0
        %3679 = vmatpush1.msra.mxu0 0.0
        %3680 = vmatprep.subr.mxu0 0.0
        %3681 = vmatpush1.msra.mxu0 0.0
        %3682 = vmatprep.subr.mxu0 0.0
        %3683 = vmatpush1.msra.mxu0 0.0
        %3684 = vmatprep.subr.mxu0 0.0
        %3685 = vmatpush1.msra.mxu0 0.0
        %3686 = vmatprep.subr.mxu0 0.0
        %3687 = vmatpush1.msra.mxu0 0.0
        %3688 = vmatprep.subr.mxu0 0.0
        %3689 = vmatpush1.msra.mxu0 0.0
        %3690 = vmatprep.subr.mxu0 0.0
        %3691 = vmatpush1.msra.mxu0 0.0
        %3692 = vmatprep.subr.mxu0 0.0
        %v3693 = vand.u32 %v2118, 4294901760
        %v3694 = vsub.f32 %v2118, %v3693
        %3695 = vmatpush1.msra.mxu0 %v3694
        %3696 = vmatprep.subr.mxu0 0.0
        %v3697 = vand.u32 %v2112, 4294901760
        %v3698 = vsub.f32 %v2112, %v3697
        %3699 = vmatpush1.msra.mxu0 %v3698
        %3700 = vmatprep.subr.mxu0 0.0
        %3701 = vmatpush2.msra.mxu0 0.0
        %3702 = vmatprep.subr.mxu0 0.0
        %3703 = vmatpush2.msra.mxu0 0.0
        %3704 = vmatprep.subr.mxu0 0.0
        %3705 = vmatpush2.msra.mxu0 0.0
        %3706 = vmatprep.subr.mxu0 0.0
        %3707 = vmatpush2.msra.mxu0 0.0
        %3708 = vmatprep.subr.mxu0 0.0
        %3709 = vmatpush2.msra.mxu0 0.0
        %3710 = vmatprep.subr.mxu0 0.0
        %3711 = vmatpush2.msra.mxu0 0.0
        %3712 = vmatprep.subr.mxu0 0.0
        %3713 = vmatpush2.msra.mxu0 0.0
        %3714 = vmatprep.subr.mxu0 0.0
        %3715 = vmatpush2.msra.mxu0 0.0
        %3716 = vmatprep.subr.mxu0 0.0
        %3717 = vmatpush2.msra.mxu0 0.0
        %3718 = vmatprep.subr.mxu0 0.0
        %3719 = vmatpush2.msra.mxu0 0.0
        %3720 = vmatprep.subr.mxu0 0.0
        %3721 = vmatpush2.msra.mxu0 0.0
        %3722 = vmatprep.subr.mxu0 0.0
        %3723 = vmatpush2.msra.mxu0 0.0
        %3724 = vmatprep.subr.mxu0 0.0
        %3725 = vmatpush2.msra.mxu0 0.0
        %3726 = vmatprep.subr.mxu0 0.0
        %3727 = vmatpush2.msra.mxu0 0.0
        %3728 = vmatprep.subr.mxu0 0.0
        %3729 = vmatpush2.msra.mxu0 0.0
        %3730 = vmatprep.subr.mxu0 0.0
        %3731 = vmatpush2.msra.mxu0 0.0
        %3732 = vmatprep.mubr.f32.mxu0 0.0
        %v3733 = vand.u32 %v3504, 4294901760
        %v3734 = vsub.f32 %v3504, %v3733
        %3735 = vmatmul.mubr.f32.gmra.mxu0 %v3734
        %v3736 = vpop.f32.mrf.mxu0
        %v3737 = vadd.f32 %v3661, %v3736
        %v3738 = vpop.f32.mrf.mxu0
        %3739 = vdwg.mxu0
        %3740 = vmatprep.subr.mxu0 0.0
        %3741 = vmatpush1.msra.mxu0 0.0
        %3742 = vmatprep.subr.mxu0 0.0
        %3743 = vmatpush1.msra.mxu0 0.0
        %3744 = vmatprep.subr.mxu0 0.0
        %3745 = vmatpush1.msra.mxu0 0.0
        %3746 = vmatprep.subr.mxu0 0.0
        %3747 = vmatpush1.msra.mxu0 0.0
        %3748 = vmatprep.subr.mxu0 0.0
        %3749 = vmatpush1.msra.mxu0 0.0
        %3750 = vmatprep.subr.mxu0 0.0
        %3751 = vmatpush1.msra.mxu0 0.0
        %3752 = vmatprep.subr.mxu0 0.0
        %3753 = vmatpush1.msra.mxu0 0.0
        %3754 = vmatprep.subr.mxu0 0.0
        %3755 = vmatpush1.msra.mxu0 0.0
        %3756 = vmatprep.subr.mxu0 0.0
        %3757 = vmatpush1.msra.mxu0 0.0
        %3758 = vmatprep.subr.mxu0 0.0
        %3759 = vmatpush1.msra.mxu0 0.0
        %3760 = vmatprep.subr.mxu0 0.0
        %3761 = vmatpush1.msra.mxu0 0.0
        %3762 = vmatprep.subr.mxu0 0.0
        %3763 = vmatpush1.msra.mxu0 0.0
        %3764 = vmatprep.subr.mxu0 0.0
        %3765 = vmatpush1.msra.mxu0 0.0
        %3766 = vmatprep.subr.mxu0 0.0
        %3767 = vmatpush1.msra.mxu0 0.0
        %3768 = vmatprep.subr.mxu0 0.0
        %v3769 = vand.u32 %v2118, 4294901760
        %3770 = vmatpush1.msra.mxu0 %v3769
        %3771 = vmatprep.subr.mxu0 0.0
        %v3772 = vand.u32 %v2112, 4294901760
        %3773 = vmatpush1.msra.mxu0 %v3772
        %3774 = vmatprep.subr.mxu0 0.0
        %3775 = vmatpush2.msra.mxu0 0.0
        %3776 = vmatprep.subr.mxu0 0.0
        %3777 = vmatpush2.msra.mxu0 0.0
        %3778 = vmatprep.subr.mxu0 0.0
        %3779 = vmatpush2.msra.mxu0 0.0
        %3780 = vmatprep.subr.mxu0 0.0
        %3781 = vmatpush2.msra.mxu0 0.0
        %3782 = vmatprep.subr.mxu0 0.0
        %3783 = vmatpush2.msra.mxu0 0.0
        %3784 = vmatprep.subr.mxu0 0.0
        %3785 = vmatpush2.msra.mxu0 0.0
        %3786 = vmatprep.subr.mxu0 0.0
        %3787 = vmatpush2.msra.mxu0 0.0
        %3788 = vmatprep.subr.mxu0 0.0
        %3789 = vmatpush2.msra.mxu0 0.0
        %3790 = vmatprep.subr.mxu0 0.0
        %3791 = vmatpush2.msra.mxu0 0.0
        %3792 = vmatprep.subr.mxu0 0.0
        %3793 = vmatpush2.msra.mxu0 0.0
        %3794 = vmatprep.subr.mxu0 0.0
        %3795 = vmatpush2.msra.mxu0 0.0
        %3796 = vmatprep.subr.mxu0 0.0
        %3797 = vmatpush2.msra.mxu0 0.0
        %3798 = vmatprep.subr.mxu0 0.0
        %3799 = vmatpush2.msra.mxu0 0.0
        %3800 = vmatprep.subr.mxu0 0.0
        %3801 = vmatpush2.msra.mxu0 0.0
        %3802 = vmatprep.subr.mxu0 0.0
        %3803 = vmatpush2.msra.mxu0 0.0
        %3804 = vmatprep.subr.mxu0 0.0
        %3805 = vmatpush2.msra.mxu0 0.0
        %3806 = vmatprep.mubr.f32.mxu0 0.0
        %v3807 = vand.u32 %v3504, 4294901760
        %v3808 = vsub.f32 %v3504, %v3807
        %v3809 = vand.u32 %v3808, 4294901760
        %3810 = vmatmul.mubr.f32.gmra.mxu0 %v3809
        %v3811 = vpop.f32.mrf.mxu0
        %v3812 = vadd.f32 %v3737, %v3811
        %v3813 = vpop.f32.mrf.mxu0
        %3814 = vdwg.mxu0
        %3815 = vmatprep.subr.mxu0 0.0
        %3816 = vmatpush1.msra.mxu0 0.0
        %3817 = vmatprep.subr.mxu0 0.0
        %3818 = vmatpush1.msra.mxu0 0.0
        %3819 = vmatprep.subr.mxu0 0.0
        %3820 = vmatpush1.msra.mxu0 0.0
        %3821 = vmatprep.subr.mxu0 0.0
        %3822 = vmatpush1.msra.mxu0 0.0
        %3823 = vmatprep.subr.mxu0 0.0
        %3824 = vmatpush1.msra.mxu0 0.0
        %3825 = vmatprep.subr.mxu0 0.0
        %3826 = vmatpush1.msra.mxu0 0.0
        %3827 = vmatprep.subr.mxu0 0.0
        %3828 = vmatpush1.msra.mxu0 0.0
        %3829 = vmatprep.subr.mxu0 0.0
        %3830 = vmatpush1.msra.mxu0 0.0
        %3831 = vmatprep.subr.mxu0 0.0
        %3832 = vmatpush1.msra.mxu0 0.0
        %3833 = vmatprep.subr.mxu0 0.0
        %3834 = vmatpush1.msra.mxu0 0.0
        %3835 = vmatprep.subr.mxu0 0.0
        %3836 = vmatpush1.msra.mxu0 0.0
        %3837 = vmatprep.subr.mxu0 0.0
        %3838 = vmatpush1.msra.mxu0 0.0
        %3839 = vmatprep.subr.mxu0 0.0
        %3840 = vmatpush1.msra.mxu0 0.0
        %3841 = vmatprep.subr.mxu0 0.0
        %3842 = vmatpush1.msra.mxu0 0.0
        %3843 = vmatprep.subr.mxu0 0.0
        %v3844 = vand.u32 %v2118, 4294901760
        %v3845 = vsub.f32 %v2118, %v3844
        %v3846 = vand.u32 %v3845, 4294901760
        %3847 = vmatpush1.msra.mxu0 %v3846
        %3848 = vmatprep.subr.mxu0 0.0
        %v3849 = vand.u32 %v2112, 4294901760
        %v3850 = vsub.f32 %v2112, %v3849
        %v3851 = vand.u32 %v3850, 4294901760
        %3852 = vmatpush1.msra.mxu0 %v3851
        %3853 = vmatprep.subr.mxu0 0.0
        %3854 = vmatpush2.msra.mxu0 0.0
        %3855 = vmatprep.subr.mxu0 0.0
        %3856 = vmatpush2.msra.mxu0 0.0
        %3857 = vmatprep.subr.mxu0 0.0
        %3858 = vmatpush2.msra.mxu0 0.0
        %3859 = vmatprep.subr.mxu0 0.0
        %3860 = vmatpush2.msra.mxu0 0.0
        %3861 = vmatprep.subr.mxu0 0.0
        %3862 = vmatpush2.msra.mxu0 0.0
        %3863 = vmatprep.subr.mxu0 0.0
        %3864 = vmatpush2.msra.mxu0 0.0
        %3865 = vmatprep.subr.mxu0 0.0
        %3866 = vmatpush2.msra.mxu0 0.0
        %3867 = vmatprep.subr.mxu0 0.0
        %3868 = vmatpush2.msra.mxu0 0.0
        %3869 = vmatprep.subr.mxu0 0.0
        %3870 = vmatpush2.msra.mxu0 0.0
        %3871 = vmatprep.subr.mxu0 0.0
        %3872 = vmatpush2.msra.mxu0 0.0
        %3873 = vmatprep.subr.mxu0 0.0
        %3874 = vmatpush2.msra.mxu0 0.0
        %3875 = vmatprep.subr.mxu0 0.0
        %3876 = vmatpush2.msra.mxu0 0.0
        %3877 = vmatprep.subr.mxu0 0.0
        %3878 = vmatpush2.msra.mxu0 0.0
        %3879 = vmatprep.subr.mxu0 0.0
        %3880 = vmatpush2.msra.mxu0 0.0
        %3881 = vmatprep.subr.mxu0 0.0
        %3882 = vmatpush2.msra.mxu0 0.0
        %3883 = vmatprep.subr.mxu0 0.0
        %3884 = vmatpush2.msra.mxu0 0.0
        %3885 = vmatprep.mubr.f32.mxu0 0.0
        %v3886 = vand.u32 %v3504, 4294901760
        %3887 = vmatmul.mubr.f32.gmra.mxu0 %v3886
        %v3888 = vpop.f32.mrf.mxu0
        %v3889 = vadd.f32 %v3812, %v3888
        %v3890 = vpop.f32.mrf.mxu0
        %3891 = vdwg.mxu0
        %3892 = vmatprep.subr.mxu0 0.0
        %3893 = vmatpush1.msra.mxu0 0.0
        %3894 = vmatprep.subr.mxu0 0.0
        %3895 = vmatpush1.msra.mxu0 0.0
        %3896 = vmatprep.subr.mxu0 0.0
        %3897 = vmatpush1.msra.mxu0 0.0
        %3898 = vmatprep.subr.mxu0 0.0
        %3899 = vmatpush1.msra.mxu0 0.0
        %3900 = vmatprep.subr.mxu0 0.0
        %3901 = vmatpush1.msra.mxu0 0.0
        %3902 = vmatprep.subr.mxu0 0.0
        %3903 = vmatpush1.msra.mxu0 0.0
        %3904 = vmatprep.subr.mxu0 0.0
        %3905 = vmatpush1.msra.mxu0 0.0
        %3906 = vmatprep.subr.mxu0 0.0
        %3907 = vmatpush1.msra.mxu0 0.0
        %3908 = vmatprep.subr.mxu0 0.0
        %3909 = vmatpush1.msra.mxu0 0.0
        %3910 = vmatprep.subr.mxu0 0.0
        %3911 = vmatpush1.msra.mxu0 0.0
        %3912 = vmatprep.subr.mxu0 0.0
        %3913 = vmatpush1.msra.mxu0 0.0
        %3914 = vmatprep.subr.mxu0 0.0
        %3915 = vmatpush1.msra.mxu0 0.0
        %3916 = vmatprep.subr.mxu0 0.0
        %3917 = vmatpush1.msra.mxu0 0.0
        %3918 = vmatprep.subr.mxu0 0.0
        %3919 = vmatpush1.msra.mxu0 0.0
        %3920 = vmatprep.subr.mxu0 0.0
        %v3921 = vand.u32 %v2118, 4294901760
        %3922 = vmatpush1.msra.mxu0 %v3921
        %3923 = vmatprep.subr.mxu0 0.0
        %v3924 = vand.u32 %v2112, 4294901760
        %3925 = vmatpush1.msra.mxu0 %v3924
        %3926 = vmatprep.subr.mxu0 0.0
        %3927 = vmatpush2.msra.mxu0 0.0
        %3928 = vmatprep.subr.mxu0 0.0
        %3929 = vmatpush2.msra.mxu0 0.0
        %3930 = vmatprep.subr.mxu0 0.0
        %3931 = vmatpush2.msra.mxu0 0.0
        %3932 = vmatprep.subr.mxu0 0.0
        %3933 = vmatpush2.msra.mxu0 0.0
        %3934 = vmatprep.subr.mxu0 0.0
        %3935 = vmatpush2.msra.mxu0 0.0
        %3936 = vmatprep.subr.mxu0 0.0
        %3937 = vmatpush2.msra.mxu0 0.0
        %3938 = vmatprep.subr.mxu0 0.0
        %3939 = vmatpush2.msra.mxu0 0.0
        %3940 = vmatprep.subr.mxu0 0.0
        %3941 = vmatpush2.msra.mxu0 0.0
        %3942 = vmatprep.subr.mxu0 0.0
        %3943 = vmatpush2.msra.mxu0 0.0
        %3944 = vmatprep.subr.mxu0 0.0
        %3945 = vmatpush2.msra.mxu0 0.0
        %3946 = vmatprep.subr.mxu0 0.0
        %3947 = vmatpush2.msra.mxu0 0.0
        %3948 = vmatprep.subr.mxu0 0.0
        %3949 = vmatpush2.msra.mxu0 0.0
        %3950 = vmatprep.subr.mxu0 0.0
        %3951 = vmatpush2.msra.mxu0 0.0
        %3952 = vmatprep.subr.mxu0 0.0
        %3953 = vmatpush2.msra.mxu0 0.0
        %3954 = vmatprep.subr.mxu0 0.0
        %3955 = vmatpush2.msra.mxu0 0.0
        %3956 = vmatprep.subr.mxu0 0.0
        %3957 = vmatpush2.msra.mxu0 0.0
        %3958 = vmatprep.mubr.f32.mxu0 0.0
        %v3959 = vand.u32 %v3504, 4294901760
        %3960 = vmatmul.mubr.f32.gmra.mxu0 %v3959
        %v3961 = vpop.f32.mrf.mxu0
        %v3962 = vadd.f32 %v3889, %v3961
        %v3963 = vpop.f32.mrf.mxu0
        %3964 = vdwg.mxu0
        %vm3965 = vcmask 64512
        %3966 = vst.msk [vmem:[%s135] sm:$0xff] %vm3965, %v2576
        %3967 = vst.msk [vmem:[%s135 + $0x8] sm:$0xff] %vm3965, %v3038
        %3968 = vst.msk [vmem:[%s135 + $0x10] sm:$0xff] %vm3965, %v3500
        %3969 = vst.msk [vmem:[%s135 + $0x18] sm:$0xff] %vm3965, %v3962
        %s3970 = sand.u32 %s52, 1
        %s3971 = scalar_lea.sflag [#allocation5], %s3970
        %s3972 = sand.u32 %s52, 1
        %s3973 = smul.addr %s3972, 32
        %s3974 = scalar_lea.vmem [#allocation6], %s3973
        // Predicated region
        $region29: #{tpu_custom_call.1} parent=23 // pred_check
          %p3975 = pneg %p62
        $region30: #{tpu_custom_call.1} parent=23 // pred_check_branch
          %3977 = sbr.rel (%p3975) target = $region32
        $region31: #{tpu_custom_call.1} parent=23 // pred_region
          %s3978 = smul.u32 4, %s18
          %s3980 = ssub.s32 512, 512
          %3981 = vsyncadd %s3971, %s3980
          %s3982 = smul.addr %s3978, 128
          %s3983 = scalar_lea.hbm %s1, %s3982
          %s3984 = sshll.u32 %s3974, 4
          %s3985 = int_to_ptr.vmem [resolvable:$true] %s3984
          %3990 = dma.vmem_to_hbm [thread:$0]  %s3985, 512, %s3983, %s3971, 128, 128, 8
        $region32: #{tpu_custom_call.1} parent=23 // pred_fallthru
          _
      $region24: #{tpu_custom_call.1} parent=5 // pred_fallthru
        _
      %p3991 = scmp.le.s32.totalorder 2, %s13
      // Predicated region
      $region33: #{tpu_custom_call.1} parent=5 // pred_check
        %p3992 = pneg %p3991
      $region34: #{tpu_custom_call.1} parent=5 // pred_check_branch
        %3994 = sbr.rel (%p3992) target = $region36
      $region35: #{tpu_custom_call.1} parent=5 // pred_region
        %s3995 = ssub.s32 %s13, 2
        // Predicated region
        $region37: #{tpu_custom_call.1} parent=35 // pred_check
          %p3996 = pneg %p68
        $region38: #{tpu_custom_call.1} parent=35 // pred_check_branch
          %3998 = sbr.rel (%p3996) target = $region40
        $region39: #{tpu_custom_call.1} parent=35 // pred_region
          %s3999 = sand.u32 %s53, 1
          %s4000 = scalar_lea.sflag [#allocation5], %s3999
          %s4001 = sand.u32 %s53, 1
          %s4002 = smul.addr %s4001, 32
          %s4003 = scalar_lea.vmem [#allocation6], %s4002
          %4004 = dma.done %s4000, 512
        $region40: #{tpu_custom_call.1} parent=35 // pred_fallthru
          _
      $region36: #{tpu_custom_call.1} parent=5 // pred_fallthru
        _
    $region6: #{tpu_custom_call.1} parent=1 // loop_footer
      %s17 = sadd.s32 1, %s13
    $region7: #{tpu_custom_call.1} parent=1 // loop_footer_branch
      %12 = sbr.rel target = $region3
    $region8: #{tpu_custom_call.1} parent=1 // loop_exit
      _
    %4005 = vsyncpa [#allocation4], 1
    %s4006 = scalar_lea.sflag [#allocation4], 1
    %4007 = vsyncpa %s4006, 1
    %4008 = vsyncpa [#allocation5], 1
    %s4009 = scalar_lea.sflag [#allocation5], 1
    %4010 = vsyncpa %s4009, 1

</llo_original>
